<compile_context>
chip_gen: v7x
topology: tpu7x:2x2x1
jax: 0.10.0
libtpu: 0.0.40
codegen_flags: <defaults>
</compile_context>

<pallas_src>
import functools

import jax
import jax.numpy as jnp
from jax.experimental import pallas as pl
from jax.experimental.pallas import tpu as pltpu

_SQRT_2_INV = 0.7071067811865476
_SQRT_2_OVER_PI = 0.7978845608028654
_VMEM_LIMIT_BYTES = 32 * 1024 * 1024   # raises v5e's 16 MiB scoped default;
                                       # well under v7x's 64 MiB physical.


def _round_up(v, m):
    return ((v + m - 1) // m) * m


# ----------------------------------------------------------------------------
# GELU variants
# ----------------------------------------------------------------------------
def _gelu_exact(x_f32, out_dtype):
    """PyTorch nn.GELU() default: 0.5*x*(1+erf(x/sqrt(2))).

    The erf polynomial is kept in f32 (portable Mosaic lowering; v5e has no
    bf16 VALU).  The result is cast straight to the MXU operand dtype, so the
    separate full-array cast pass before each matmul is gone.
    """
    # TODO(synk): evaluate the erf polynomial in bf16 once Mosaic's bf16 erf
    # lowering is confirmed on all target chips (would ~2x VALU throughput on
    # v6e/v7x); kept f32 here so the kernel compiles everywhere.
    y = 0.5 * x_f32 * (1.0 + jax.lax.erf(x_f32 * _SQRT_2_INV))
    return y.astype(out_dtype)


def _gelu_tanh(x_f32, out_dtype):
    """Opt-in tanh-approximate GELU, evaluated in the compute dtype.

    ~5 VALU ops + one EUP tanh per element instead of the all-VALU erf
    polynomial; on v6e/v7x the whole thing runs on the bf16 VALU/EUP.
    Deviates from nn.GELU()'s exact-erf definition by ~1e-3 -- explicit
    opt-in via approximate_gelu=True.  On v5e pass compute_dtype=float32.
    """
    x = x_f32.astype(out_dtype)
    inner = _SQRT_2_OVER_PI * (x + 0.044715 * (x * x * x))
    return (0.5 * x * (1.0 + jnp.tanh(inner))).astype(out_dtype)


# ----------------------------------------------------------------------------
# Shared per-tile MLP body
# ----------------------------------------------------------------------------
def _mlp_tile(x, param_refs, gelu_fn):
    """Per-point MLP on one (C, TN) tile; returns (out_dim, TN) f32.

    Layer 1 (K = C_in = 3): tiny contraction -> VPU broadcast FMAs.
    Layers 2..6: MXU matmuls (transposed form), GELU after layers 1..5 only,
    GELU output is produced directly in the MXU operand dtype.
    """
    (w1_ref, b1_ref, w2_ref, b2_ref, w3_ref, b3_ref,
     w4_ref, b4_ref, w5_ref, b5_ref, w6_ref, b6_ref) = param_refs

    w1 = w1_ref[...]                                   # (64, C) f32
    c_in = x.shape[0]
    h = w1[:, 0:1] * x[0:1, :]
    for c in range(1, c_in):
        h = h + w1[:, c:c + 1] * x[c:c + 1, :]
    h = h + b1_ref[...]                                # (64, TN) f32

    for w_ref, b_ref in ((w2_ref, b2_ref), (w3_ref, b3_ref),
                         (w4_ref, b4_ref), (w5_ref, b5_ref),
                         (w6_ref, b6_ref)):
        a = gelu_fn(h, w_ref.dtype)                    # GELU -> MXU operand
        h = jnp.dot(w_ref[...], a,
                    preferred_element_type=jnp.float32) + b_ref[...]
    return h                                           # (out_dim, TN) f32


# ----------------------------------------------------------------------------
# Kernels
# ----------------------------------------------------------------------------
def _tiled_kernel(gelu_fn, x_ref, *refs):
    """Large-N path.  grid = (n_splits, B, tiles_per_split).

    x_ref : (C, TN) f32 tile of one batch's points.
    o_ref : (out_dim, 1) running max, output-resident across the last
            ("arbitrary") grid axis; one partial max per (split, batch).
    """
    *param_refs, o_ref = refs
    h = _mlp_tile(x_ref[...], param_refs, gelu_fn)
    blk_max = jnp.max(h, axis=1, keepdims=True)        # (out_dim, 1)
    n_idx = pl.program_id(2)

    @pl.when(n_idx == 0)
    def _init():
        o_ref[...] = blk_max

    @pl.when(n_idx > 0)
    def _update():
        o_ref[...] = jnp.maximum(o_ref[...], blk_max)
    # TODO(synk): a fully lane-dense (1, out_dim) output would need a small
    # in-kernel transpose of the (out_dim, 1) max; skipped (one strided 1 KiB
    # writeback per batch).


def _packed_kernel(gelu_fn, seg_len, n_seg, x_ref, *refs):
    """Small-N path.  n_seg whole (padded) batches share one point tile.

    x_ref : (C, n_seg * seg_len) f32 -- batches concatenated on the lane axis.
    o_ref : (out_dim, n_seg) -- one max column per packed batch.
    """
    *param_refs, o_ref = refs
    h = _mlp_tile(x_ref[...], param_refs, gelu_fn)      # (out, n_seg*seg_len)
    segs = [jnp.max(h[:, i * seg_len:(i + 1) * seg_len], axis=1, keepdims=True)
            for i in range(n_seg)]                      # static segmented max
    o_ref[...] = segs[0] if n_seg == 1 else jnp.concatenate(segs, axis=1)


# ----------------------------------------------------------------------------
# Wrapper
# ----------------------------------------------------------------------------
def _resident_spec(shape, index_map):
    """Full-array block + constant index_map: DMA'd once, VMEM resident.

    Single pipeline buffer (the second buffer is pure waste for a constant
    index_map).  Falls back to the default spec if this JAX build does not
    plumb pipeline_mode through BlockSpec.
    """
    try:
        return pl.BlockSpec(shape, index_map, pipeline_mode=pl.Buffered(1))
    except (TypeError, AttributeError):
        return pl.BlockSpec(shape, index_map)


def init_pointnet_large_params(key, point_channel=3, output_dim=256, std=0.02):
    """PyTorch-layout params: w_i (out, in) trunc_normal(std), b_i (out,) zeros."""
    dims = [point_channel, 64, 64, 128, 128, 256, output_dim]
    keys = jax.random.split(key, 6)
    params = {}
    for i in range(6):
        fan_out, fan_in = dims[i + 1], dims[i]
        params[f"w{i + 1}"] = (jax.random.truncated_normal(
            keys[i], -2.0, 2.0, (fan_out, fan_in), jnp.float32) * std)
        params[f"b{i + 1}"] = jnp.zeros((fan_out,), jnp.float32)
    return params


@functools.partial(jax.jit, static_argnames=("compute_dtype", "tn_max",
                                             "approximate_gelu", "n_splits"))
def pointnet_large_forward(x, params, *, compute_dtype=jnp.bfloat16,
                           tn_max=4096, approximate_gelu=False, n_splits=None):
    """x: [B, N, C] float32 -> [B, output_dim] float32.

    compute_dtype    : MXU-operand / approx-GELU dtype for layers 2..6
                       (bf16 default; pass jnp.float32 on v5e).
    tn_max           : max lanes (points) streamed per grid step.
    approximate_gelu : opt-in tanh-approximate GELU (EUP path).
    n_splits         : split the per-batch point reduction across this many
                       parallel grid slots (auto: 2 when B is odd so v7x's
                       second TensorCore is not idle).
    """
    B, N, C = x.shape
    out_dim = params["w6"].shape[0]
    gelu_fn = _gelu_tanh if approximate_gelu else _gelu_exact

    # Weights stay in PyTorch (out, in) layout; layers 2..6 are pre-cast to
    # the MXU compute dtype (f32 accumulation happens in the kernel).
    # Layer 1 runs on the VPU; all biases stay f32.
    w_list = [params["w1"].astype(jnp.float32)]
    w_list += [params[f"w{i}"].astype(compute_dtype) for i in range(2, 7)]
    b_list = [params[f"b{i}"].reshape(-1, 1).astype(jnp.float32)
              for i in range(1, 7)]
    param_args = []
    for w, bias in zip(w_list, b_list):
        param_args += [w, bias]

    dims = [C] + [w.shape[0] for w in w_list]          # [C,64,64,128,128,256,out]

    def cost(total_points):
        flops = 2 * total_points * sum(dims[i] * dims[i + 1] for i in range(6))
        trans = total_points * sum(dims[1:6])
        bytes_acc = (total_points * C * 4
                     + sum(int(w.size) * w.dtype.itemsize for w in w_list)
                     + sum(int(bv.size) * 4 for bv in b_list)
                     + B * out_dim * 4)
        return pl.CostEstimate(flops=int(flops), transcendentals=int(trans),
                               bytes_accessed=int(bytes_acc))

    tn_cap = max(128, (tn_max // 128) * 128)            # lane multiple of 128
    n_pad_b = _round_up(N, 128)                         # per-batch padded N
    # Channels-major: points on the dense 128-lane axis, the C_in=3 channels
    # on sublanes (3->8 pad instead of 3->128).
    x_t = jnp.transpose(x, (0, 2, 1)).astype(jnp.float32)        # [B, C, N]

    if n_pad_b <= tn_cap:
        # ---------------- Small-N packed mode ------------------------------
        # Pack G whole batches onto one tile's lane axis so the MXU streaming
        # dimension stays long and grid-step overhead is paid once per G
        # batches.  Padding (repeat point 0 / batch 0) never changes a max.
        g = max(1, min(B, tn_cap // n_pad_b))
        b_pad = _round_up(B, g)
        n_steps = b_pad // g
        if n_pad_b != N:
            pad = jnp.broadcast_to(x_t[:, :, :1], (B, C, n_pad_b - N))
            x_t = jnp.concatenate([x_t, pad], axis=2)
        if b_pad != B:
            padb = jnp.broadcast_to(x_t[:1], (b_pad - B, C, n_pad_b))
            x_t = jnp.concatenate([x_t, padb], axis=0)
        x_flat = jnp.transpose(x_t, (1, 0, 2)).reshape(C, b_pad * n_pad_b)

        in_specs = [pl.BlockSpec((C, g * n_pad_b), lambda s: (0, s))]
        for w, bias in zip(w_list, b_list):
            in_specs += [_resident_spec(w.shape, lambda s: (0, 0)),
                         _resident_spec(bias.shape, lambda s: (0, 0))]

        out = pl.pallas_call(
            functools.partial(_packed_kernel, gelu_fn, n_pad_b, g),
            out_shape=jax.ShapeDtypeStruct((n_steps, out_dim, g), jnp.float32),
            grid_spec=pltpu.PrefetchScalarGridSpec(
                num_scalar_prefetch=0,
                grid=(n_steps,),
                in_specs=in_specs,
                out_specs=pl.BlockSpec((None, out_dim, g),
                                       lambda s: (s, 0, 0)),
            ),
            compiler_params=pltpu.CompilerParams(
                dimension_semantics=("parallel",),
                vmem_limit_bytes=_VMEM_LIMIT_BYTES),
            cost_estimate=cost(b_pad * n_pad_b),
        )(x_flat, *param_args)
        # (n_steps, out_dim, G) -> (B, out_dim)
        return jnp.transpose(out, (0, 2, 1)).reshape(b_pad, out_dim)[:B]

    # -------------------- Large-N tiled mode -------------------------------
    tn = tn_cap
    n_tiles = (N + tn - 1) // tn
    if n_splits is None:
        # Keep both v7x TensorCores busy when the parallel batch axis alone
        # cannot (odd B, in particular B == 1).  No-op on v5e/v6e (1 TC).
        ns = 2 if (B % 2 == 1 and n_tiles >= 2) else 1
    else:
        ns = max(1, int(n_splits))
    ns = min(ns, n_tiles)
    n_tiles = _round_up(n_tiles, ns)
    tiles_per_split = n_tiles // ns
    n_pad = n_tiles * tn
    if n_pad != N:
        pad = jnp.broadcast_to(x_t[:, :, :1], (B, C, n_pad - N))
        x_t = jnp.concatenate([x_t, pad], axis=2)

    in_specs = [pl.BlockSpec((None, C, tn),
                             lambda s, b, n: (b, 0, s * tiles_per_split + n))]
    for w, bias in zip(w_list, b_list):
        in_specs += [_resident_spec(w.shape, lambda s, b, n: (0, 0)),
                     _resident_spec(bias.shape, lambda s, b, n: (0, 0))]

    out = pl.pallas_call(
        functools.partial(_tiled_kernel, gelu_fn),
        out_shape=jax.ShapeDtypeStruct((ns, B, out_dim, 1), jnp.float32),
        grid_spec=pltpu.PrefetchScalarGridSpec(
            num_scalar_prefetch=0,
            grid=(ns, B, tiles_per_split),              # reduction axis last
            in_specs=in_specs,
            out_specs=pl.BlockSpec((None, None, out_dim, 1),
                                   lambda s, b, n: (s, b, 0, 0)),
        ),
        compiler_params=pltpu.CompilerParams(
            dimension_semantics=("parallel", "parallel", "arbitrary"),
            vmem_limit_bytes=_VMEM_LIMIT_BYTES),
        cost_estimate=cost(B * n_pad),
    )(x_t, *param_args)
    # Combine the per-split partial maxima (cheap wrapper-side op).
    return jnp.max(out, axis=0)[:, :, 0]


# ----------------------------------------------------------------------------
# Pure-JAX reference and self-test
# ----------------------------------------------------------------------------
def _reference_forward(x, params):
    """Pure-JAX port of the PyTorch forward (exact-erf GELU, f32)."""
    h = x
    for i in range(1, 7):
        h = h @ params[f"w{i}"].T + params[f"b{i}"]
        if i < 6:
            h = 0.5 * h * (1.0 + jax.lax.erf(h * _SQRT_2_INV))
    return jnp.max(h, axis=1)


if __name__ == "__main__":
    key = jax.random.PRNGKey(0)
    k_param, k_x = jax.random.split(key)

    B, N, C_IN, OUT_DIM = 2, 200, 3, 256
    # std=0.2 (instead of the module's 0.02) so outputs are O(0.1-1) and the
    # tolerance check is meaningful; the kernel itself is init-agnostic.
    params = init_pointnet_large_params(k_param, point_channel=C_IN,
                                        output_dim=OUT_DIM, std=0.2)
    x = jax.random.normal(k_x, (B, N, C_IN), jnp.float32)
    ref = _reference_forward(x, params)

    # (a) Default perf path: small-N batch-packed mode, bf16 MXU operands,
    #     exact-erf GELU (matches nn.GELU(); ~1e-2 rel deviation from bf16).
    out_bf16 = jax.block_until_ready(pointnet_large_forward(x, params))
    assert out_bf16.shape == (B, OUT_DIM), out_bf16.shape
    assert jnp.allclose(out_bf16, ref, atol=5e-3, rtol=5e-2), "bf16 packed path"

    # (b) f32 operands with a tiny point tile: forces the tiled mode and the
    #     running-max accumulation across the N ("arbitrary") grid axis.
    out_f32 = jax.block_until_ready(
        pointnet_large_forward(x, params, compute_dtype=jnp.float32, tn_max=128))
    assert out_f32.shape == (B, OUT_DIM), out_f32.shape
    assert jnp.allclose(out_f32, ref, atol=5e-3, rtol=5e-2), "f32 tiled path"

    # (c) B=1 with a tiny tile: exercises the 2-way reduction split that keeps
    #     v7x's second TensorCore busy (combined by jnp.max in the wrapper).
    ref1 = _reference_forward(x[:1], params)
    out_split = jax.block_until_ready(
        pointnet_large_forward(x[:1], params, compute_dtype=jnp.float32,
                               tn_max=128))
    assert out_split.shape == (1, OUT_DIM), out_split.shape
    assert jnp.allclose(out_split, ref1, atol=5e-3, rtol=5e-2), "split path"

    # (d) Opt-in tanh-approximate GELU (EUP path) in bf16.
    out_tanh = jax.block_until_ready(
        pointnet_large_forward(x, params, approximate_gelu=True))
    assert out_tanh.shape == (B, OUT_DIM), out_tanh.shape
    assert jnp.allclose(out_tanh, ref, atol=2e-2, rtol=5e-2), "tanh-GELU path"

    print("KERNEL_OK")
</pallas_src>

<mosaic_0001>
module attributes {stable_mosaic.version = 11 : i64} {
  func.func @_packed_kernel(%arg0: i32, %arg1: memref<3x512xf32, #tpu.memory_space<vmem>>, %arg2: memref<64x3xf32, #tpu.memory_space<vmem>>, %arg3: memref<64x1xf32, #tpu.memory_space<vmem>>, %arg4: memref<64x64xbf16, #tpu.memory_space<vmem>>, %arg5: memref<64x1xf32, #tpu.memory_space<vmem>>, %arg6: memref<128x64xbf16, #tpu.memory_space<vmem>>, %arg7: memref<128x1xf32, #tpu.memory_space<vmem>>, %arg8: memref<128x128xbf16, #tpu.memory_space<vmem>>, %arg9: memref<128x1xf32, #tpu.memory_space<vmem>>, %arg10: memref<256x128xbf16, #tpu.memory_space<vmem>>, %arg11: memref<256x1xf32, #tpu.memory_space<vmem>>, %arg12: memref<256x256xbf16, #tpu.memory_space<vmem>>, %arg13: memref<256x1xf32, #tpu.memory_space<vmem>>, %arg14: memref<1x256x2xf32, #tpu.memory_space<vmem>>) attributes {dimension_semantics = [#tpu.dimension_semantics<parallel>], iteration_bounds = array<i64: 1>, scalar_prefetch = 0 : i64, scratch_operands = 0 : i64, tpu.core_type = #tpu.core_type<tc>, window_params = [{transform_indices = @transform_0, window_bounds = array<i64: 3, 512>}, {pipeline_mode = #tpu.pipeline_mode<synchronous>, transform_indices = @transform_1, window_bounds = array<i64: 64, 3>}, {pipeline_mode = #tpu.pipeline_mode<synchronous>, transform_indices = @transform_2, window_bounds = array<i64: 64, 1>}, {pipeline_mode = #tpu.pipeline_mode<synchronous>, transform_indices = @transform_3, window_bounds = array<i64: 64, 64>}, {pipeline_mode = #tpu.pipeline_mode<synchronous>, transform_indices = @transform_4, window_bounds = array<i64: 64, 1>}, {pipeline_mode = #tpu.pipeline_mode<synchronous>, transform_indices = @transform_5, window_bounds = array<i64: 128, 64>}, {pipeline_mode = #tpu.pipeline_mode<synchronous>, transform_indices = @transform_6, window_bounds = array<i64: 128, 1>}, {pipeline_mode = #tpu.pipeline_mode<synchronous>, transform_indices = @transform_7, window_bounds = array<i64: 128, 128>}, {pipeline_mode = #tpu.pipeline_mode<synchronous>, transform_indices = @transform_8, window_bounds = array<i64: 128, 1>}, {pipeline_mode = #tpu.pipeline_mode<synchronous>, transform_indices = @transform_9, window_bounds = array<i64: 256, 128>}, {pipeline_mode = #tpu.pipeline_mode<synchronous>, transform_indices = @transform_10, window_bounds = array<i64: 256, 1>}, {pipeline_mode = #tpu.pipeline_mode<synchronous>, transform_indices = @transform_11, window_bounds = array<i64: 256, 256>}, {pipeline_mode = #tpu.pipeline_mode<synchronous>, transform_indices = @transform_12, window_bounds = array<i64: 256, 1>}, {transform_indices = @transform_13, window_bounds = array<i64: 1, 256, 2>}]} {
    %c0 = arith.constant 0 : index
    %c0_0 = arith.constant 0 : index
    %0 = vector.load %arg1[%c0, %c0_0] : memref<3x512xf32, #tpu.memory_space<vmem>>, vector<3x512xf32>
    %c0_1 = arith.constant 0 : index
    %c0_2 = arith.constant 0 : index
    %1 = vector.load %arg2[%c0_1, %c0_2] : memref<64x3xf32, #tpu.memory_space<vmem>>, vector<64x3xf32>
    %2 = vector.extract_strided_slice %1 {offsets = [0, 0], sizes = [64, 1], strides = [1, 1]} : vector<64x3xf32> to vector<64x1xf32>
    %3 = vector.extract_strided_slice %0 {offsets = [0, 0], sizes = [1, 512], strides = [1, 1]} : vector<3x512xf32> to vector<1x512xf32>
    %4 = vector.broadcast %2 : vector<64x1xf32> to vector<64x512xf32>
    %5 = vector.broadcast %3 : vector<1x512xf32> to vector<64x512xf32>
    %6 = arith.mulf %4, %5 : vector<64x512xf32>
    %7 = vector.extract_strided_slice %1 {offsets = [0, 1], sizes = [64, 1], strides = [1, 1]} : vector<64x3xf32> to vector<64x1xf32>
    %8 = vector.extract_strided_slice %0 {offsets = [1, 0], sizes = [1, 512], strides = [1, 1]} : vector<3x512xf32> to vector<1x512xf32>
    %9 = vector.broadcast %7 : vector<64x1xf32> to vector<64x512xf32>
    %10 = vector.broadcast %8 : vector<1x512xf32> to vector<64x512xf32>
    %11 = arith.mulf %9, %10 : vector<64x512xf32>
    %12 = arith.addf %6, %11 : vector<64x512xf32>
    %13 = vector.extract_strided_slice %1 {offsets = [0, 2], sizes = [64, 1], strides = [1, 1]} : vector<64x3xf32> to vector<64x1xf32>
    %14 = vector.extract_strided_slice %0 {offsets = [2, 0], sizes = [1, 512], strides = [1, 1]} : vector<3x512xf32> to vector<1x512xf32>
    %15 = vector.broadcast %13 : vector<64x1xf32> to vector<64x512xf32>
    %16 = vector.broadcast %14 : vector<1x512xf32> to vector<64x512xf32>
    %17 = arith.mulf %15, %16 : vector<64x512xf32>
    %18 = arith.addf %12, %17 : vector<64x512xf32>
    %c0_3 = arith.constant 0 : index
    %c0_4 = arith.constant 0 : index
    %19 = vector.load %arg3[%c0_3, %c0_4] : memref<64x1xf32, #tpu.memory_space<vmem>>, vector<64x1xf32>
    %20 = vector.broadcast %19 : vector<64x1xf32> to vector<64x512xf32>
    %21 = arith.addf %18, %20 : vector<64x512xf32>
    %cst = arith.constant 5.000000e-01 : f32
    %22 = vector.broadcast %cst : f32 to vector<64x512xf32>
    %23 = arith.mulf %22, %21 : vector<64x512xf32>
    %cst_5 = arith.constant 0.707106769 : f32
    %24 = vector.broadcast %cst_5 : f32 to vector<64x512xf32>
    %25 = arith.mulf %21, %24 : vector<64x512xf32>
    %26 = math.erf %25 : vector<64x512xf32>
    %cst_6 = arith.constant 1.000000e+00 : f32
    %27 = vector.broadcast %cst_6 : f32 to vector<64x512xf32>
    %28 = arith.addf %27, %26 : vector<64x512xf32>
    %29 = arith.mulf %23, %28 : vector<64x512xf32>
    %30 = arith.truncf %29 : vector<64x512xf32> to vector<64x512xbf16>
    %c0_7 = arith.constant 0 : index
    %c0_8 = arith.constant 0 : index
    %31 = vector.load %arg4[%c0_7, %c0_8] : memref<64x64xbf16, #tpu.memory_space<vmem>>, vector<64x64xbf16>
    %cst_9 = arith.constant dense<0.000000e+00> : vector<64x512xf32>
    %32 = tpu.matmul %31, %30, %cst_9 {dimension_numbers = #tpu.dot_dimension_numbers<[1], [0], [0], [1], [0, 0, 1, 1], [], []>} : vector<64x64xbf16>, vector<64x512xbf16>, vector<64x512xf32> -> vector<64x512xf32>
    %c0_10 = arith.constant 0 : index
    %c0_11 = arith.constant 0 : index
    %33 = vector.load %arg5[%c0_10, %c0_11] : memref<64x1xf32, #tpu.memory_space<vmem>>, vector<64x1xf32>
    %34 = vector.broadcast %33 : vector<64x1xf32> to vector<64x512xf32>
    %35 = arith.addf %32, %34 : vector<64x512xf32>
    %cst_12 = arith.constant 5.000000e-01 : f32
    %36 = vector.broadcast %cst_12 : f32 to vector<64x512xf32>
    %37 = arith.mulf %36, %35 : vector<64x512xf32>
    %cst_13 = arith.constant 0.707106769 : f32
    %38 = vector.broadcast %cst_13 : f32 to vector<64x512xf32>
    %39 = arith.mulf %35, %38 : vector<64x512xf32>
    %40 = math.erf %39 : vector<64x512xf32>
    %cst_14 = arith.constant 1.000000e+00 : f32
    %41 = vector.broadcast %cst_14 : f32 to vector<64x512xf32>
    %42 = arith.addf %41, %40 : vector<64x512xf32>
    %43 = arith.mulf %37, %42 : vector<64x512xf32>
    %44 = arith.truncf %43 : vector<64x512xf32> to vector<64x512xbf16>
    %c0_15 = arith.constant 0 : index
    %c0_16 = arith.constant 0 : index
    %45 = vector.load %arg6[%c0_15, %c0_16] : memref<128x64xbf16, #tpu.memory_space<vmem>>, vector<128x64xbf16>
    %cst_17 = arith.constant dense<0.000000e+00> : vector<128x512xf32>
    %46 = tpu.matmul %45, %44, %cst_17 {dimension_numbers = #tpu.dot_dimension_numbers<[1], [0], [0], [1], [0, 0, 1, 1], [], []>} : vector<128x64xbf16>, vector<64x512xbf16>, vector<128x512xf32> -> vector<128x512xf32>
    %c0_18 = arith.constant 0 : index
    %c0_19 = arith.constant 0 : index
    %47 = vector.load %arg7[%c0_18, %c0_19] : memref<128x1xf32, #tpu.memory_space<vmem>>, vector<128x1xf32>
    %48 = vector.broadcast %47 : vector<128x1xf32> to vector<128x512xf32>
    %49 = arith.addf %46, %48 : vector<128x512xf32>
    %cst_20 = arith.constant 5.000000e-01 : f32
    %50 = vector.broadcast %cst_20 : f32 to vector<128x512xf32>
    %51 = arith.mulf %50, %49 : vector<128x512xf32>
    %cst_21 = arith.constant 0.707106769 : f32
    %52 = vector.broadcast %cst_21 : f32 to vector<128x512xf32>
    %53 = arith.mulf %49, %52 : vector<128x512xf32>
    %54 = math.erf %53 : vector<128x512xf32>
    %cst_22 = arith.constant 1.000000e+00 : f32
    %55 = vector.broadcast %cst_22 : f32 to vector<128x512xf32>
    %56 = arith.addf %55, %54 : vector<128x512xf32>
    %57 = arith.mulf %51, %56 : vector<128x512xf32>
    %58 = arith.truncf %57 : vector<128x512xf32> to vector<128x512xbf16>
    %c0_23 = arith.constant 0 : index
    %c0_24 = arith.constant 0 : index
    %59 = vector.load %arg8[%c0_23, %c0_24] : memref<128x128xbf16, #tpu.memory_space<vmem>>, vector<128x128xbf16>
    %cst_25 = arith.constant dense<0.000000e+00> : vector<128x512xf32>
    %60 = tpu.matmul %59, %58, %cst_25 {dimension_numbers = #tpu.dot_dimension_numbers<[1], [0], [0], [1], [0, 0, 1, 1], [], []>} : vector<128x128xbf16>, vector<128x512xbf16>, vector<128x512xf32> -> vector<128x512xf32>
    %c0_26 = arith.constant 0 : index
    %c0_27 = arith.constant 0 : index
    %61 = vector.load %arg9[%c0_26, %c0_27] : memref<128x1xf32, #tpu.memory_space<vmem>>, vector<128x1xf32>
    %62 = vector.broadcast %61 : vector<128x1xf32> to vector<128x512xf32>
    %63 = arith.addf %60, %62 : vector<128x512xf32>
    %cst_28 = arith.constant 5.000000e-01 : f32
    %64 = vector.broadcast %cst_28 : f32 to vector<128x512xf32>
    %65 = arith.mulf %64, %63 : vector<128x512xf32>
    %cst_29 = arith.constant 0.707106769 : f32
    %66 = vector.broadcast %cst_29 : f32 to vector<128x512xf32>
    %67 = arith.mulf %63, %66 : vector<128x512xf32>
    %68 = math.erf %67 : vector<128x512xf32>
    %cst_30 = arith.constant 1.000000e+00 : f32
    %69 = vector.broadcast %cst_30 : f32 to vector<128x512xf32>
    %70 = arith.addf %69, %68 : vector<128x512xf32>
    %71 = arith.mulf %65, %70 : vector<128x512xf32>
    %72 = arith.truncf %71 : vector<128x512xf32> to vector<128x512xbf16>
    %c0_31 = arith.constant 0 : index
    %c0_32 = arith.constant 0 : index
    %73 = vector.load %arg10[%c0_31, %c0_32] : memref<256x128xbf16, #tpu.memory_space<vmem>>, vector<256x128xbf16>
    %cst_33 = arith.constant dense<0.000000e+00> : vector<256x512xf32>
    %74 = tpu.matmul %73, %72, %cst_33 {dimension_numbers = #tpu.dot_dimension_numbers<[1], [0], [0], [1], [0, 0, 1, 1], [], []>} : vector<256x128xbf16>, vector<128x512xbf16>, vector<256x512xf32> -> vector<256x512xf32>
    %c0_34 = arith.constant 0 : index
    %c0_35 = arith.constant 0 : index
    %75 = vector.load %arg11[%c0_34, %c0_35] : memref<256x1xf32, #tpu.memory_space<vmem>>, vector<256x1xf32>
    %76 = vector.broadcast %75 : vector<256x1xf32> to vector<256x512xf32>
    %77 = arith.addf %74, %76 : vector<256x512xf32>
    %cst_36 = arith.constant 5.000000e-01 : f32
    %78 = vector.broadcast %cst_36 : f32 to vector<256x512xf32>
    %79 = arith.mulf %78, %77 : vector<256x512xf32>
    %cst_37 = arith.constant 0.707106769 : f32
    %80 = vector.broadcast %cst_37 : f32 to vector<256x512xf32>
    %81 = arith.mulf %77, %80 : vector<256x512xf32>
    %82 = math.erf %81 : vector<256x512xf32>
    %cst_38 = arith.constant 1.000000e+00 : f32
    %83 = vector.broadcast %cst_38 : f32 to vector<256x512xf32>
    %84 = arith.addf %83, %82 : vector<256x512xf32>
    %85 = arith.mulf %79, %84 : vector<256x512xf32>
    %86 = arith.truncf %85 : vector<256x512xf32> to vector<256x512xbf16>
    %c0_39 = arith.constant 0 : index
    %c0_40 = arith.constant 0 : index
    %87 = vector.load %arg12[%c0_39, %c0_40] : memref<256x256xbf16, #tpu.memory_space<vmem>>, vector<256x256xbf16>
    %cst_41 = arith.constant dense<0.000000e+00> : vector<256x512xf32>
    %88 = tpu.matmul %87, %86, %cst_41 {dimension_numbers = #tpu.dot_dimension_numbers<[1], [0], [0], [1], [0, 0, 1, 1], [], []>} : vector<256x256xbf16>, vector<256x512xbf16>, vector<256x512xf32> -> vector<256x512xf32>
    %c0_42 = arith.constant 0 : index
    %c0_43 = arith.constant 0 : index
    %89 = vector.load %arg13[%c0_42, %c0_43] : memref<256x1xf32, #tpu.memory_space<vmem>>, vector<256x1xf32>
    %90 = vector.broadcast %89 : vector<256x1xf32> to vector<256x512xf32>
    %91 = arith.addf %88, %90 : vector<256x512xf32>
    %92 = vector.extract_strided_slice %91 {offsets = [0, 0], sizes = [256, 256], strides = [1, 1]} : vector<256x512xf32> to vector<256x256xf32>
    %cst_44 = arith.constant dense<0xFF800000> : vector<256xf32>
    %93 = vector.multi_reduction <maximumf>, %92, %cst_44 [1] : vector<256x256xf32> to vector<256xf32>
    %94 = vector.shape_cast %93 : vector<256xf32> to vector<256x1xf32>
    %95 = vector.extract_strided_slice %91 {offsets = [0, 256], sizes = [256, 256], strides = [1, 1]} : vector<256x512xf32> to vector<256x256xf32>
    %cst_45 = arith.constant dense<0xFF800000> : vector<256xf32>
    %96 = vector.multi_reduction <maximumf>, %95, %cst_45 [1] : vector<256x256xf32> to vector<256xf32>
    %97 = vector.shape_cast %96 : vector<256xf32> to vector<256x1xf32>
    %98 = tpu.concatenate %94, %97 in 1 : vector<256x1xf32>, vector<256x1xf32> -> vector<256x2xf32>
    %c0_46 = arith.constant 0 : index
    %c0_47 = arith.constant 0 : index
    %c0_48 = arith.constant 0 : index
    %99 = vector.load %arg14[%c0_46, %c0_47, %c0_48] : memref<1x256x2xf32, #tpu.memory_space<vmem>>, vector<1x256x2xf32>
    %100 = vector.shape_cast %99 : vector<1x256x2xf32> to vector<256x2xf32>
    %101 = vector.shape_cast %98 : vector<256x2xf32> to vector<1x256x2xf32>
    tpu.vector_store %arg14[%c0_46, %c0_47, %c0_48], %101 {strides = array<i32>} : memref<1x256x2xf32, #tpu.memory_space<vmem>>, vector<1x256x2xf32>,
    return
  }
  func.func @transform_0(%arg0: i32) -> (i32, i32) {
    %c0_i32 = arith.constant 0 : i32
    %c0_i32_0 = arith.constant 0 : i32
    return %c0_i32, %arg0 : i32, i32
  }
  func.func @transform_1(%arg0: i32) -> (i32, i32) {
    %c0_i32 = arith.constant 0 : i32
    %c0_i32_0 = arith.constant 0 : i32
    %c0_i32_1 = arith.constant 0 : i32
    return %c0_i32, %c0_i32_0 : i32, i32
  }
  func.func @transform_2(%arg0: i32) -> (i32, i32) {
    %c0_i32 = arith.constant 0 : i32
    %c0_i32_0 = arith.constant 0 : i32
    %c0_i32_1 = arith.constant 0 : i32
    return %c0_i32, %c0_i32_0 : i32, i32
  }
  func.func @transform_3(%arg0: i32) -> (i32, i32) {
    %c0_i32 = arith.constant 0 : i32
    %c0_i32_0 = arith.constant 0 : i32
    %c0_i32_1 = arith.constant 0 : i32
    return %c0_i32, %c0_i32_0 : i32, i32
  }
  func.func @transform_4(%arg0: i32) -> (i32, i32) {
    %c0_i32 = arith.constant 0 : i32
    %c0_i32_0 = arith.constant 0 : i32
    %c0_i32_1 = arith.constant 0 : i32
    return %c0_i32, %c0_i32_0 : i32, i32
  }
  func.func @transform_5(%arg0: i32) -> (i32, i32) {
    %c0_i32 = arith.constant 0 : i32
    %c0_i32_0 = arith.constant 0 : i32
    %c0_i32_1 = arith.constant 0 : i32
    return %c0_i32, %c0_i32_0 : i32, i32
  }
  func.func @transform_6(%arg0: i32) -> (i32, i32) {
    %c0_i32 = arith.constant 0 : i32
    %c0_i32_0 = arith.constant 0 : i32
    %c0_i32_1 = arith.constant 0 : i32
    return %c0_i32, %c0_i32_0 : i32, i32
  }
  func.func @transform_7(%arg0: i32) -> (i32, i32) {
    %c0_i32 = arith.constant 0 : i32
    %c0_i32_0 = arith.constant 0 : i32
    %c0_i32_1 = arith.constant 0 : i32
    return %c0_i32, %c0_i32_0 : i32, i32
  }
  func.func @transform_8(%arg0: i32) -> (i32, i32) {
    %c0_i32 = arith.constant 0 : i32
    %c0_i32_0 = arith.constant 0 : i32
    %c0_i32_1 = arith.constant 0 : i32
    return %c0_i32, %c0_i32_0 : i32, i32
  }
  func.func @transform_9(%arg0: i32) -> (i32, i32) {
    %c0_i32 = arith.constant 0 : i32
    %c0_i32_0 = arith.constant 0 : i32
    %c0_i32_1 = arith.constant 0 : i32
    return %c0_i32, %c0_i32_0 : i32, i32
  }
  func.func @transform_10(%arg0: i32) -> (i32, i32) {
    %c0_i32 = arith.constant 0 : i32
    %c0_i32_0 = arith.constant 0 : i32
    %c0_i32_1 = arith.constant 0 : i32
    return %c0_i32, %c0_i32_0 : i32, i32
  }
  func.func @transform_11(%arg0: i32) -> (i32, i32) {
    %c0_i32 = arith.constant 0 : i32
    %c0_i32_0 = arith.constant 0 : i32
    %c0_i32_1 = arith.constant 0 : i32
    return %c0_i32, %c0_i32_0 : i32, i32
  }
  func.func @transform_12(%arg0: i32) -> (i32, i32) {
    %c0_i32 = arith.constant 0 : i32
    %c0_i32_0 = arith.constant 0 : i32
    %c0_i32_1 = arith.constant 0 : i32
    return %c0_i32, %c0_i32_0 : i32, i32
  }
  func.func @transform_13(%arg0: i32) -> (i32, i32, i32) {
    %c0_i32 = arith.constant 0 : i32
    %c0_i32_0 = arith.constant 0 : i32
    %c0_i32_1 = arith.constant 0 : i32
    return %arg0, %c0_i32, %c0_i32_0 : i32, i32, i32
  }
}

</mosaic_0001>

<llo_original>
// kernel: pointnet_large_forward.1
$region0: #{pointnet_large_forward.1}
  #allocation0 [shape = 'u32[]', space=smem, size = 0x4, offset = 0x4, fixed_abs, tag = 'smem constant byte address 0x4 - core index']
  #allocation1 [shape = 'u32[144,128]{1,0:T(1,128)}', space=vmem, size = 0x12000, scoped, tag = 'internal scratch']
  %s0 = inlined_call_operand.vmem [shape: f32[3,512], index: 0, kind: input, shape index: {}]
  %s1 = inlined_call_operand.vmem [shape: f32[64,3], index: 1, kind: input, shape index: {}]
  %s2 = inlined_call_operand.vmem [shape: f32[64,1], index: 2, kind: input, shape index: {}]
  %s3 = inlined_call_operand.vmem [shape: bf16[64,64], index: 3, kind: input, shape index: {}]
  %s4 = inlined_call_operand.vmem [shape: f32[64,1], index: 4, kind: input, shape index: {}]
  %s5 = inlined_call_operand.vmem [shape: bf16[128,64], index: 5, kind: input, shape index: {}]
  %s6 = inlined_call_operand.vmem [shape: f32[128,1], index: 6, kind: input, shape index: {}]
  %s7 = inlined_call_operand.vmem [shape: bf16[128,128], index: 7, kind: input, shape index: {}]
  %s8 = inlined_call_operand.vmem [shape: f32[128,1], index: 8, kind: input, shape index: {}]
  %s9 = inlined_call_operand.vmem [shape: bf16[256,128], index: 9, kind: input, shape index: {}]
  %s10 = inlined_call_operand.vmem [shape: f32[256,1], index: 10, kind: input, shape index: {}]
  %s11 = inlined_call_operand.vmem [shape: bf16[256,256], index: 11, kind: input, shape index: {}]
  %s12 = inlined_call_operand.vmem [shape: f32[256,1], index: 12, kind: input, shape index: {}]
  %s13 = inlined_call_operand.vmem [shape: f32[1,256,2], index: 13, kind: output, shape index: {}]
  %s14 = sld [smem:[#allocation0]]
  $region62: #{pointnet_large_forward.1} parent=0
    _
  %s16 = ssub.s32 1, %s14
  %s17 = scalar_select 0, %s16, %s14
  // Predicated region
  $region2: #{pointnet_large_forward.1} parent=0 // pred_check
    _
  $region3: #{pointnet_large_forward.1} parent=0 // pred_check_branch
    %19 = sbr.rel (0) target = $region5
  $region4: #{pointnet_large_forward.1} parent=0 // pred_region
    _
  $region5: #{pointnet_large_forward.1} parent=0 // pred_fallthru
    _
  // Predicated region
  $region6: #{pointnet_large_forward.1} parent=0 // pred_check
    _
  $region7: #{pointnet_large_forward.1} parent=0 // pred_check_branch
    %21 = sbr.rel (0) target = $region9
  $region8: #{pointnet_large_forward.1} parent=0 // pred_region
    _
  $region9: #{pointnet_large_forward.1} parent=0 // pred_fallthru
    _
  // Predicated region
  $region10: #{pointnet_large_forward.1} parent=0 // pred_check
    _
  $region11: #{pointnet_large_forward.1} parent=0 // pred_check_branch
    %23 = sbr.rel (0) target = $region13
  $region12: #{pointnet_large_forward.1} parent=0 // pred_region
    _
  $region13: #{pointnet_large_forward.1} parent=0 // pred_fallthru
    _
  // Predicated region
  $region14: #{pointnet_large_forward.1} parent=0 // pred_check
    _
  $region15: #{pointnet_large_forward.1} parent=0 // pred_check_branch
    %25 = sbr.rel (0) target = $region17
  $region16: #{pointnet_large_forward.1} parent=0 // pred_region
    _
  $region17: #{pointnet_large_forward.1} parent=0 // pred_fallthru
    _
  // Predicated region
  $region18: #{pointnet_large_forward.1} parent=0 // pred_check
    _
  $region19: #{pointnet_large_forward.1} parent=0 // pred_check_branch
    %27 = sbr.rel (0) target = $region21
  $region20: #{pointnet_large_forward.1} parent=0 // pred_region
    _
  $region21: #{pointnet_large_forward.1} parent=0 // pred_fallthru
    _
  // Predicated region
  $region22: #{pointnet_large_forward.1} parent=0 // pred_check
    _
  $region23: #{pointnet_large_forward.1} parent=0 // pred_check_branch
    %29 = sbr.rel (0) target = $region25
  $region24: #{pointnet_large_forward.1} parent=0 // pred_region
    _
  $region25: #{pointnet_large_forward.1} parent=0 // pred_fallthru
    _
  // Predicated region
  $region26: #{pointnet_large_forward.1} parent=0 // pred_check
    _
  $region27: #{pointnet_large_forward.1} parent=0 // pred_check_branch
    %31 = sbr.rel (0) target = $region29
  $region28: #{pointnet_large_forward.1} parent=0 // pred_region
    _
  $region29: #{pointnet_large_forward.1} parent=0 // pred_fallthru
    _
  // Predicated region
  $region30: #{pointnet_large_forward.1} parent=0 // pred_check
    _
  $region31: #{pointnet_large_forward.1} parent=0 // pred_check_branch
    %33 = sbr.rel (0) target = $region33
  $region32: #{pointnet_large_forward.1} parent=0 // pred_region
    _
  $region33: #{pointnet_large_forward.1} parent=0 // pred_fallthru
    _
  // Predicated region
  $region34: #{pointnet_large_forward.1} parent=0 // pred_check
    _
  $region35: #{pointnet_large_forward.1} parent=0 // pred_check_branch
    %35 = sbr.rel (0) target = $region37
  $region36: #{pointnet_large_forward.1} parent=0 // pred_region
    _
  $region37: #{pointnet_large_forward.1} parent=0 // pred_fallthru
    _
  // Predicated region
  $region38: #{pointnet_large_forward.1} parent=0 // pred_check
    _
  $region39: #{pointnet_large_forward.1} parent=0 // pred_check_branch
    %37 = sbr.rel (0) target = $region41
  $region40: #{pointnet_large_forward.1} parent=0 // pred_region
    _
  $region41: #{pointnet_large_forward.1} parent=0 // pred_fallthru
    _
  // Predicated region
  $region42: #{pointnet_large_forward.1} parent=0 // pred_check
    _
  $region43: #{pointnet_large_forward.1} parent=0 // pred_check_branch
    %39 = sbr.rel (0) target = $region45
  $region44: #{pointnet_large_forward.1} parent=0 // pred_region
    _
  $region45: #{pointnet_large_forward.1} parent=0 // pred_fallthru
    _
  // Predicated region
  $region46: #{pointnet_large_forward.1} parent=0 // pred_check
    _
  $region47: #{pointnet_large_forward.1} parent=0 // pred_check_branch
    %41 = sbr.rel (0) target = $region49
  $region48: #{pointnet_large_forward.1} parent=0 // pred_region
    _
  $region49: #{pointnet_large_forward.1} parent=0 // pred_fallthru
    _
  // Predicated region
  $region50: #{pointnet_large_forward.1} parent=0 // pred_check
    _
  $region51: #{pointnet_large_forward.1} parent=0 // pred_check_branch
    %43 = sbr.rel (0) target = $region53
  $region52: #{pointnet_large_forward.1} parent=0 // pred_region
    _
  $region53: #{pointnet_large_forward.1} parent=0 // pred_fallthru
    _
  %v45 = vld [vmem:[%s0] sm:$0x77]
  %v46 = vld [vmem:[%s0 + $0x8] sm:$0x77]
  %v47 = vld [vmem:[%s1] sm:$0xff]
  %v48 = vld [vmem:[%s1 + $0x8] sm:$0xff]
  %v49 = vld [vmem:[%s1 + $0x10] sm:$0xff]
  %v50 = vld [vmem:[%s1 + $0x18] sm:$0xff]
  %v51 = vld [vmem:[%s1 + $0x20] sm:$0xff]
  %v52 = vld [vmem:[%s1 + $0x28] sm:$0xff]
  %v53 = vld [vmem:[%s1 + $0x30] sm:$0xff]
  %v54 = vld [vmem:[%s1 + $0x38] sm:$0xff]
  %56 = vset.pattern.permute.xlu0 0
  %57 = vperm.xlu0 %56, %v47
  %v58 = vpop.permute.xlu0 %57
  %61 = vset.pattern.permute.xlu0 0
  %62 = vperm.xlu0 %61, %v48
  %v63 = vpop.permute.xlu0 %62
  %66 = vset.pattern.permute.xlu0 0
  %67 = vperm.xlu0 %66, %v49
  %v68 = vpop.permute.xlu0 %67
  %71 = vset.pattern.permute.xlu0 0
  %72 = vperm.xlu0 %71, %v50
  %v73 = vpop.permute.xlu0 %72
  %76 = vset.pattern.permute.xlu0 0
  %77 = vperm.xlu0 %76, %v51
  %v78 = vpop.permute.xlu0 %77
  %81 = vset.pattern.permute.xlu0 0
  %82 = vperm.xlu0 %81, %v52
  %v83 = vpop.permute.xlu0 %82
  %86 = vset.pattern.permute.xlu0 0
  %87 = vperm.xlu0 %86, %v53
  %v88 = vpop.permute.xlu0 %87
  %91 = vset.pattern.permute.xlu0 0
  %92 = vperm.xlu0 %91, %v54
  %v93 = vpop.permute.xlu0 %92
  %v97 = vlaneseq
  %v98 = vshrl.u32 %v97, 7
  %v99 = vsub.s32 0, %v98
  %v100 = vrot.slane %v45, %v99
  %v101 = vlaneseq
  %v102 = vshrl.u32 %v101, 7
  %v103 = vsub.s32 4, %v102
  %v104 = vrot.slane %v45, %v103
  %v105 = vlaneseq
  %v106 = vshrl.u32 %v105, 7
  %v107 = vsub.s32 0, %v106
  %v108 = vrot.slane %v46, %v107
  %v109 = vlaneseq
  %v110 = vshrl.u32 %v109, 7
  %v111 = vsub.s32 4, %v110
  %v112 = vrot.slane %v46, %v111
  %v117 = vlaneseq
  %v118 = vshrl.u32 %v117, 7
  %v119 = vsub.s32 0, %v118
  %v120 = vrot.slane %v100, %v119
  %v121 = vlaneseq
  %v122 = vshrl.u32 %v121, 7
  %v123 = vsub.s32 0, %v122
  %v124 = vrot.slane %v104, %v123
  %v125 = vlaneseq
  %v126 = vshrl.u32 %v125, 7
  %v127 = vsub.s32 0, %v126
  %v128 = vrot.slane %v108, %v127
  %v129 = vlaneseq
  %v130 = vshrl.u32 %v129, 7
  %v131 = vsub.s32 0, %v130
  %v132 = vrot.slane %v112, %v131
  %v133 = vmul.f32 %v58, %v120
  %v134 = vmul.f32 %v58, %v124
  %v135 = vmul.f32 %v58, %v128
  %v136 = vmul.f32 %v58, %v132
  %v137 = vmul.f32 %v63, %v120
  %v138 = vmul.f32 %v63, %v124
  %v139 = vmul.f32 %v63, %v128
  %v140 = vmul.f32 %v63, %v132
  %v141 = vmul.f32 %v68, %v120
  %v142 = vmul.f32 %v68, %v124
  %v143 = vmul.f32 %v68, %v128
  %v144 = vmul.f32 %v68, %v132
  %v145 = vmul.f32 %v73, %v120
  %v146 = vmul.f32 %v73, %v124
  %v147 = vmul.f32 %v73, %v128
  %v148 = vmul.f32 %v73, %v132
  %v149 = vmul.f32 %v78, %v120
  %v150 = vmul.f32 %v78, %v124
  %v151 = vmul.f32 %v78, %v128
  %v152 = vmul.f32 %v78, %v132
  %v153 = vmul.f32 %v83, %v120
  %v154 = vmul.f32 %v83, %v124
  %v155 = vmul.f32 %v83, %v128
  %v156 = vmul.f32 %v83, %v132
  %v157 = vmul.f32 %v88, %v120
  %v158 = vmul.f32 %v88, %v124
  %v159 = vmul.f32 %v88, %v128
  %v160 = vmul.f32 %v88, %v132
  %v161 = vmul.f32 %v93, %v120
  %v162 = vmul.f32 %v93, %v124
  %v163 = vmul.f32 %v93, %v128
  %v164 = vmul.f32 %v93, %v132
  %165 = vset.pattern.permute.xlu0 1
  %166 = vperm.xlu0 %165, %v47
  %v167 = vpop.permute.xlu0 %166
  %169 = vset.pattern.permute.xlu0 1
  %170 = vperm.xlu0 %169, %v48
  %v171 = vpop.permute.xlu0 %170
  %173 = vset.pattern.permute.xlu0 1
  %174 = vperm.xlu0 %173, %v49
  %v175 = vpop.permute.xlu0 %174
  %177 = vset.pattern.permute.xlu0 1
  %178 = vperm.xlu0 %177, %v50
  %v179 = vpop.permute.xlu0 %178
  %181 = vset.pattern.permute.xlu0 1
  %182 = vperm.xlu0 %181, %v51
  %v183 = vpop.permute.xlu0 %182
  %185 = vset.pattern.permute.xlu0 1
  %186 = vperm.xlu0 %185, %v52
  %v187 = vpop.permute.xlu0 %186
  %189 = vset.pattern.permute.xlu0 1
  %190 = vperm.xlu0 %189, %v53
  %v191 = vpop.permute.xlu0 %190
  %193 = vset.pattern.permute.xlu0 1
  %194 = vperm.xlu0 %193, %v54
  %v195 = vpop.permute.xlu0 %194
  %v197 = vlaneseq
  %v198 = vshrl.u32 %v197, 7
  %v199 = vsub.s32 1, %v198
  %v200 = vrot.slane %v45, %v199
  %v201 = vlaneseq
  %v202 = vshrl.u32 %v201, 7
  %v203 = vsub.s32 5, %v202
  %v204 = vrot.slane %v45, %v203
  %v205 = vlaneseq
  %v206 = vshrl.u32 %v205, 7
  %v207 = vsub.s32 1, %v206
  %v208 = vrot.slane %v46, %v207
  %v209 = vlaneseq
  %v210 = vshrl.u32 %v209, 7
  %v211 = vsub.s32 5, %v210
  %v212 = vrot.slane %v46, %v211
  %v217 = vlaneseq
  %v218 = vshrl.u32 %v217, 7
  %v219 = vsub.s32 1, %v218
  %v220 = vrot.slane %v200, %v219
  %v221 = vlaneseq
  %v222 = vshrl.u32 %v221, 7
  %v223 = vsub.s32 1, %v222
  %v224 = vrot.slane %v204, %v223
  %v225 = vlaneseq
  %v226 = vshrl.u32 %v225, 7
  %v227 = vsub.s32 1, %v226
  %v228 = vrot.slane %v208, %v227
  %v229 = vlaneseq
  %v230 = vshrl.u32 %v229, 7
  %v231 = vsub.s32 1, %v230
  %v232 = vrot.slane %v212, %v231
  %v233 = vmul.f32 %v167, %v220
  %v234 = vmul.f32 %v167, %v224
  %v235 = vmul.f32 %v167, %v228
  %v236 = vmul.f32 %v167, %v232
  %v237 = vmul.f32 %v171, %v220
  %v238 = vmul.f32 %v171, %v224
  %v239 = vmul.f32 %v171, %v228
  %v240 = vmul.f32 %v171, %v232
  %v241 = vmul.f32 %v175, %v220
  %v242 = vmul.f32 %v175, %v224
  %v243 = vmul.f32 %v175, %v228
  %v244 = vmul.f32 %v175, %v232
  %v245 = vmul.f32 %v179, %v220
  %v246 = vmul.f32 %v179, %v224
  %v247 = vmul.f32 %v179, %v228
  %v248 = vmul.f32 %v179, %v232
  %v249 = vmul.f32 %v183, %v220
  %v250 = vmul.f32 %v183, %v224
  %v251 = vmul.f32 %v183, %v228
  %v252 = vmul.f32 %v183, %v232
  %v253 = vmul.f32 %v187, %v220
  %v254 = vmul.f32 %v187, %v224
  %v255 = vmul.f32 %v187, %v228
  %v256 = vmul.f32 %v187, %v232
  %v257 = vmul.f32 %v191, %v220
  %v258 = vmul.f32 %v191, %v224
  %v259 = vmul.f32 %v191, %v228
  %v260 = vmul.f32 %v191, %v232
  %v261 = vmul.f32 %v195, %v220
  %v262 = vmul.f32 %v195, %v224
  %v263 = vmul.f32 %v195, %v228
  %v264 = vmul.f32 %v195, %v232
  %v265 = vadd.f32 %v133, %v233
  %v266 = vadd.f32 %v134, %v234
  %v267 = vadd.f32 %v135, %v235
  %v268 = vadd.f32 %v136, %v236
  %v269 = vadd.f32 %v137, %v237
  %v270 = vadd.f32 %v138, %v238
  %v271 = vadd.f32 %v139, %v239
  %v272 = vadd.f32 %v140, %v240
  %v273 = vadd.f32 %v141, %v241
  %v274 = vadd.f32 %v142, %v242
  %v275 = vadd.f32 %v143, %v243
  %v276 = vadd.f32 %v144, %v244
  %v277 = vadd.f32 %v145, %v245
  %v278 = vadd.f32 %v146, %v246
  %v279 = vadd.f32 %v147, %v247
  %v280 = vadd.f32 %v148, %v248
  %v281 = vadd.f32 %v149, %v249
  %v282 = vadd.f32 %v150, %v250
  %v283 = vadd.f32 %v151, %v251
  %v284 = vadd.f32 %v152, %v252
  %v285 = vadd.f32 %v153, %v253
  %v286 = vadd.f32 %v154, %v254
  %v287 = vadd.f32 %v155, %v255
  %v288 = vadd.f32 %v156, %v256
  %v289 = vadd.f32 %v157, %v257
  %v290 = vadd.f32 %v158, %v258
  %v291 = vadd.f32 %v159, %v259
  %v292 = vadd.f32 %v160, %v260
  %v293 = vadd.f32 %v161, %v261
  %v294 = vadd.f32 %v162, %v262
  %v295 = vadd.f32 %v163, %v263
  %v296 = vadd.f32 %v164, %v264
  %297 = vset.pattern.permute.xlu0 2
  %298 = vperm.xlu0 %297, %v47
  %v299 = vpop.permute.xlu0 %298
  %301 = vset.pattern.permute.xlu0 2
  %302 = vperm.xlu0 %301, %v48
  %v303 = vpop.permute.xlu0 %302
  %305 = vset.pattern.permute.xlu0 2
  %306 = vperm.xlu0 %305, %v49
  %v307 = vpop.permute.xlu0 %306
  %309 = vset.pattern.permute.xlu0 2
  %310 = vperm.xlu0 %309, %v50
  %v311 = vpop.permute.xlu0 %310
  %313 = vset.pattern.permute.xlu0 2
  %314 = vperm.xlu0 %313, %v51
  %v315 = vpop.permute.xlu0 %314
  %317 = vset.pattern.permute.xlu0 2
  %318 = vperm.xlu0 %317, %v52
  %v319 = vpop.permute.xlu0 %318
  %321 = vset.pattern.permute.xlu0 2
  %322 = vperm.xlu0 %321, %v53
  %v323 = vpop.permute.xlu0 %322
  %325 = vset.pattern.permute.xlu0 2
  %326 = vperm.xlu0 %325, %v54
  %v327 = vpop.permute.xlu0 %326
  %v329 = vlaneseq
  %v330 = vshrl.u32 %v329, 7
  %v331 = vsub.s32 2, %v330
  %v332 = vrot.slane %v45, %v331
  %v333 = vlaneseq
  %v334 = vshrl.u32 %v333, 7
  %v335 = vsub.s32 6, %v334
  %v336 = vrot.slane %v45, %v335
  %v337 = vlaneseq
  %v338 = vshrl.u32 %v337, 7
  %v339 = vsub.s32 2, %v338
  %v340 = vrot.slane %v46, %v339
  %v341 = vlaneseq
  %v342 = vshrl.u32 %v341, 7
  %v343 = vsub.s32 6, %v342
  %v344 = vrot.slane %v46, %v343
  %v349 = vlaneseq
  %v350 = vshrl.u32 %v349, 7
  %v351 = vsub.s32 2, %v350
  %v352 = vrot.slane %v332, %v351
  %v353 = vlaneseq
  %v354 = vshrl.u32 %v353, 7
  %v355 = vsub.s32 2, %v354
  %v356 = vrot.slane %v336, %v355
  %v357 = vlaneseq
  %v358 = vshrl.u32 %v357, 7
  %v359 = vsub.s32 2, %v358
  %v360 = vrot.slane %v340, %v359
  %v361 = vlaneseq
  %v362 = vshrl.u32 %v361, 7
  %v363 = vsub.s32 2, %v362
  %v364 = vrot.slane %v344, %v363
  %v365 = vmul.f32 %v299, %v352
  %v366 = vmul.f32 %v299, %v356
  %v367 = vmul.f32 %v299, %v360
  %v368 = vmul.f32 %v299, %v364
  %v369 = vmul.f32 %v303, %v352
  %v370 = vmul.f32 %v303, %v356
  %v371 = vmul.f32 %v303, %v360
  %v372 = vmul.f32 %v303, %v364
  %v373 = vmul.f32 %v307, %v352
  %v374 = vmul.f32 %v307, %v356
  %v375 = vmul.f32 %v307, %v360
  %v376 = vmul.f32 %v307, %v364
  %v377 = vmul.f32 %v311, %v352
  %v378 = vmul.f32 %v311, %v356
  %v379 = vmul.f32 %v311, %v360
  %v380 = vmul.f32 %v311, %v364
  %v381 = vmul.f32 %v315, %v352
  %v382 = vmul.f32 %v315, %v356
  %v383 = vmul.f32 %v315, %v360
  %v384 = vmul.f32 %v315, %v364
  %v385 = vmul.f32 %v319, %v352
  %v386 = vmul.f32 %v319, %v356
  %v387 = vmul.f32 %v319, %v360
  %v388 = vmul.f32 %v319, %v364
  %v389 = vmul.f32 %v323, %v352
  %v390 = vmul.f32 %v323, %v356
  %v391 = vmul.f32 %v323, %v360
  %v392 = vmul.f32 %v323, %v364
  %v393 = vmul.f32 %v327, %v352
  %v394 = vmul.f32 %v327, %v356
  %v395 = vmul.f32 %v327, %v360
  %v396 = vmul.f32 %v327, %v364
  %v397 = vadd.f32 %v265, %v365
  %v398 = vadd.f32 %v266, %v366
  %v399 = vadd.f32 %v267, %v367
  %v400 = vadd.f32 %v268, %v368
  %v401 = vadd.f32 %v269, %v369
  %v402 = vadd.f32 %v270, %v370
  %v403 = vadd.f32 %v271, %v371
  %v404 = vadd.f32 %v272, %v372
  %v405 = vadd.f32 %v273, %v373
  %v406 = vadd.f32 %v274, %v374
  %v407 = vadd.f32 %v275, %v375
  %v408 = vadd.f32 %v276, %v376
  %v409 = vadd.f32 %v277, %v377
  %v410 = vadd.f32 %v278, %v378
  %v411 = vadd.f32 %v279, %v379
  %v412 = vadd.f32 %v280, %v380
  %v413 = vadd.f32 %v281, %v381
  %v414 = vadd.f32 %v282, %v382
  %v415 = vadd.f32 %v283, %v383
  %v416 = vadd.f32 %v284, %v384
  %v417 = vadd.f32 %v285, %v385
  %v418 = vadd.f32 %v286, %v386
  %v419 = vadd.f32 %v287, %v387
  %v420 = vadd.f32 %v288, %v388
  %v421 = vadd.f32 %v289, %v389
  %v422 = vadd.f32 %v290, %v390
  %v423 = vadd.f32 %v291, %v391
  %v424 = vadd.f32 %v292, %v392
  %v425 = vadd.f32 %v293, %v393
  %v426 = vadd.f32 %v294, %v394
  %v427 = vadd.f32 %v295, %v395
  %v428 = vadd.f32 %v296, %v396
  %v429 = vld [vmem:[%s2] sm:$0xff]
  %v430 = vld [vmem:[%s2 + $0x8] sm:$0xff]
  %v431 = vld [vmem:[%s2 + $0x10] sm:$0xff]
  %v432 = vld [vmem:[%s2 + $0x18] sm:$0xff]
  %v433 = vld [vmem:[%s2 + $0x20] sm:$0xff]
  %v434 = vld [vmem:[%s2 + $0x28] sm:$0xff]
  %v435 = vld [vmem:[%s2 + $0x30] sm:$0xff]
  %v436 = vld [vmem:[%s2 + $0x38] sm:$0xff]
  %438 = vset.pattern.permute.xlu0 0
  %439 = vperm.xlu0 %438, %v429
  %v440 = vpop.permute.xlu0 %439
  %443 = vset.pattern.permute.xlu0 0
  %444 = vperm.xlu0 %443, %v430
  %v445 = vpop.permute.xlu0 %444
  %448 = vset.pattern.permute.xlu0 0
  %449 = vperm.xlu0 %448, %v431
  %v450 = vpop.permute.xlu0 %449
  %453 = vset.pattern.permute.xlu0 0
  %454 = vperm.xlu0 %453, %v432
  %v455 = vpop.permute.xlu0 %454
  %458 = vset.pattern.permute.xlu0 0
  %459 = vperm.xlu0 %458, %v433
  %v460 = vpop.permute.xlu0 %459
  %463 = vset.pattern.permute.xlu0 0
  %464 = vperm.xlu0 %463, %v434
  %v465 = vpop.permute.xlu0 %464
  %468 = vset.pattern.permute.xlu0 0
  %469 = vperm.xlu0 %468, %v435
  %v470 = vpop.permute.xlu0 %469
  %473 = vset.pattern.permute.xlu0 0
  %474 = vperm.xlu0 %473, %v436
  %v475 = vpop.permute.xlu0 %474
  %v477 = vadd.f32 %v397, %v440
  %v478 = vadd.f32 %v398, %v440
  %v479 = vadd.f32 %v399, %v440
  %v480 = vadd.f32 %v400, %v440
  %v481 = vadd.f32 %v401, %v445
  %v482 = vadd.f32 %v402, %v445
  %v483 = vadd.f32 %v403, %v445
  %v484 = vadd.f32 %v404, %v445
  %v485 = vadd.f32 %v405, %v450
  %v486 = vadd.f32 %v406, %v450
  %v487 = vadd.f32 %v407, %v450
  %v488 = vadd.f32 %v408, %v450
  %v489 = vadd.f32 %v409, %v455
  %v490 = vadd.f32 %v410, %v455
  %v491 = vadd.f32 %v411, %v455
  %v492 = vadd.f32 %v412, %v455
  %v493 = vadd.f32 %v413, %v460
  %v494 = vadd.f32 %v414, %v460
  %v495 = vadd.f32 %v415, %v460
  %v496 = vadd.f32 %v416, %v460
  %v497 = vadd.f32 %v417, %v465
  %v498 = vadd.f32 %v418, %v465
  %v499 = vadd.f32 %v419, %v465
  %v500 = vadd.f32 %v420, %v465
  %v501 = vadd.f32 %v421, %v470
  %v502 = vadd.f32 %v422, %v470
  %v503 = vadd.f32 %v423, %v470
  %v504 = vadd.f32 %v424, %v470
  %v505 = vadd.f32 %v425, %v475
  %v506 = vadd.f32 %v426, %v475
  %v507 = vadd.f32 %v427, %v475
  %v508 = vadd.f32 %v428, %v475
  %v509 = vmul.f32 %v477, 0.5
  %v510 = vmul.f32 %v478, 0.5
  %v511 = vmul.f32 %v479, 0.5
  %v512 = vmul.f32 %v480, 0.5
  %v513 = vmul.f32 %v481, 0.5
  %v514 = vmul.f32 %v482, 0.5
  %v515 = vmul.f32 %v483, 0.5
  %v516 = vmul.f32 %v484, 0.5
  %v517 = vmul.f32 %v485, 0.5
  %v518 = vmul.f32 %v486, 0.5
  %v519 = vmul.f32 %v487, 0.5
  %v520 = vmul.f32 %v488, 0.5
  %v521 = vmul.f32 %v489, 0.5
  %v522 = vmul.f32 %v490, 0.5
  %v523 = vmul.f32 %v491, 0.5
  %v524 = vmul.f32 %v492, 0.5
  %v525 = vmul.f32 %v493, 0.5
  %v526 = vmul.f32 %v494, 0.5
  %v527 = vmul.f32 %v495, 0.5
  %v528 = vmul.f32 %v496, 0.5
  %v529 = vmul.f32 %v497, 0.5
  %v530 = vmul.f32 %v498, 0.5
  %v531 = vmul.f32 %v499, 0.5
  %v532 = vmul.f32 %v500, 0.5
  %v533 = vmul.f32 %v501, 0.5
  %v534 = vmul.f32 %v502, 0.5
  %v535 = vmul.f32 %v503, 0.5
  %v536 = vmul.f32 %v504, 0.5
  %v537 = vmul.f32 %v505, 0.5
  %v538 = vmul.f32 %v506, 0.5
  %v539 = vmul.f32 %v507, 0.5
  %v540 = vmul.f32 %v508, 0.5
  %v541 = vmul.f32 %v477, 0.70710677
  %v542 = vmul.f32 %v478, 0.70710677
  %v543 = vmul.f32 %v479, 0.70710677
  %v544 = vmul.f32 %v480, 0.70710677
  %v545 = vmul.f32 %v481, 0.70710677
  %v546 = vmul.f32 %v482, 0.70710677
  %v547 = vmul.f32 %v483, 0.70710677
  %v548 = vmul.f32 %v484, 0.70710677
  %v549 = vmul.f32 %v485, 0.70710677
  %v550 = vmul.f32 %v486, 0.70710677
  %v551 = vmul.f32 %v487, 0.70710677
  %v552 = vmul.f32 %v488, 0.70710677
  %v553 = vmul.f32 %v489, 0.70710677
  %v554 = vmul.f32 %v490, 0.70710677
  %v555 = vmul.f32 %v491, 0.70710677
  %v556 = vmul.f32 %v492, 0.70710677
  %v557 = vmul.f32 %v493, 0.70710677
  %v558 = vmul.f32 %v494, 0.70710677
  %v559 = vmul.f32 %v495, 0.70710677
  %v560 = vmul.f32 %v496, 0.70710677
  %v561 = vmul.f32 %v497, 0.70710677
  %v562 = vmul.f32 %v498, 0.70710677
  %v563 = vmul.f32 %v499, 0.70710677
  %v564 = vmul.f32 %v500, 0.70710677
  %v565 = vmul.f32 %v501, 0.70710677
  %v566 = vmul.f32 %v502, 0.70710677
  %v567 = vmul.f32 %v503, 0.70710677
  %v568 = vmul.f32 %v504, 0.70710677
  %v569 = vmul.f32 %v505, 0.70710677
  %v570 = vmul.f32 %v506, 0.70710677
  %v571 = vmul.f32 %v507, 0.70710677
  %v572 = vmul.f32 %v508, 0.70710677
  %v573 = verf.f32.pop %v541
  %v574 = verf.f32.pop %v542
  %v575 = verf.f32.pop %v543
  %v576 = verf.f32.pop %v544
  %v577 = verf.f32.pop %v545
  %v578 = verf.f32.pop %v546
  %v579 = verf.f32.pop %v547
  %v580 = verf.f32.pop %v548
  %v581 = verf.f32.pop %v549
  %v582 = verf.f32.pop %v550
  %v583 = verf.f32.pop %v551
  %v584 = verf.f32.pop %v552
  %v585 = verf.f32.pop %v553
  %v586 = verf.f32.pop %v554
  %v587 = verf.f32.pop %v555
  %v588 = verf.f32.pop %v556
  %v589 = verf.f32.pop %v557
  %v590 = verf.f32.pop %v558
  %v591 = verf.f32.pop %v559
  %v592 = verf.f32.pop %v560
  %v593 = verf.f32.pop %v561
  %v594 = verf.f32.pop %v562
  %v595 = verf.f32.pop %v563
  %v596 = verf.f32.pop %v564
  %v597 = verf.f32.pop %v565
  %v598 = verf.f32.pop %v566
  %v599 = verf.f32.pop %v567
  %v600 = verf.f32.pop %v568
  %v601 = verf.f32.pop %v569
  %v602 = verf.f32.pop %v570
  %v603 = verf.f32.pop %v571
  %v604 = verf.f32.pop %v572
  %v605 = vadd.f32 %v573, 1.0
  %v606 = vadd.f32 %v574, 1.0
  %v607 = vadd.f32 %v575, 1.0
  %v608 = vadd.f32 %v576, 1.0
  %v609 = vadd.f32 %v577, 1.0
  %v610 = vadd.f32 %v578, 1.0
  %v611 = vadd.f32 %v579, 1.0
  %v612 = vadd.f32 %v580, 1.0
  %v613 = vadd.f32 %v581, 1.0
  %v614 = vadd.f32 %v582, 1.0
  %v615 = vadd.f32 %v583, 1.0
  %v616 = vadd.f32 %v584, 1.0
  %v617 = vadd.f32 %v585, 1.0
  %v618 = vadd.f32 %v586, 1.0
  %v619 = vadd.f32 %v587, 1.0
  %v620 = vadd.f32 %v588, 1.0
  %v621 = vadd.f32 %v589, 1.0
  %v622 = vadd.f32 %v590, 1.0
  %v623 = vadd.f32 %v591, 1.0
  %v624 = vadd.f32 %v592, 1.0
  %v625 = vadd.f32 %v593, 1.0
  %v626 = vadd.f32 %v594, 1.0
  %v627 = vadd.f32 %v595, 1.0
  %v628 = vadd.f32 %v596, 1.0
  %v629 = vadd.f32 %v597, 1.0
  %v630 = vadd.f32 %v598, 1.0
  %v631 = vadd.f32 %v599, 1.0
  %v632 = vadd.f32 %v600, 1.0
  %v633 = vadd.f32 %v601, 1.0
  %v634 = vadd.f32 %v602, 1.0
  %v635 = vadd.f32 %v603, 1.0
  %v636 = vadd.f32 %v604, 1.0
  %v637 = vmul.f32 %v509, %v605
  %v638 = vmul.f32 %v510, %v606
  %v639 = vmul.f32 %v511, %v607
  %v640 = vmul.f32 %v512, %v608
  %v641 = vmul.f32 %v513, %v609
  %v642 = vmul.f32 %v514, %v610
  %v643 = vmul.f32 %v515, %v611
  %v644 = vmul.f32 %v516, %v612
  %v645 = vmul.f32 %v517, %v613
  %v646 = vmul.f32 %v518, %v614
  %v647 = vmul.f32 %v519, %v615
  %v648 = vmul.f32 %v520, %v616
  %v649 = vmul.f32 %v521, %v617
  %v650 = vmul.f32 %v522, %v618
  %v651 = vmul.f32 %v523, %v619
  %v652 = vmul.f32 %v524, %v620
  %v653 = vmul.f32 %v525, %v621
  %v654 = vmul.f32 %v526, %v622
  %v655 = vmul.f32 %v527, %v623
  %v656 = vmul.f32 %v528, %v624
  %v657 = vmul.f32 %v529, %v625
  %v658 = vmul.f32 %v530, %v626
  %v659 = vmul.f32 %v531, %v627
  %v660 = vmul.f32 %v532, %v628
  %v661 = vmul.f32 %v533, %v629
  %v662 = vmul.f32 %v534, %v630
  %v663 = vmul.f32 %v535, %v631
  %v664 = vmul.f32 %v536, %v632
  %v665 = vmul.f32 %v537, %v633
  %v666 = vmul.f32 %v538, %v634
  %v667 = vmul.f32 %v539, %v635
  %v668 = vmul.f32 %v540, %v636
  %v669 = vpack.c.bf16 %v641, %v637
  %v670 = vpack.c.bf16 %v642, %v638
  %v671 = vpack.c.bf16 %v643, %v639
  %v672 = vpack.c.bf16 %v644, %v640
  %v673 = vpack.c.bf16 %v649, %v645
  %v674 = vpack.c.bf16 %v650, %v646
  %v675 = vpack.c.bf16 %v651, %v647
  %v676 = vpack.c.bf16 %v652, %v648
  %v677 = vpack.c.bf16 %v657, %v653
  %v678 = vpack.c.bf16 %v658, %v654
  %v679 = vpack.c.bf16 %v659, %v655
  %v680 = vpack.c.bf16 %v660, %v656
  %v681 = vpack.c.bf16 %v665, %v661
  %v682 = vpack.c.bf16 %v666, %v662
  %v683 = vpack.c.bf16 %v667, %v663
  %v684 = vpack.c.bf16 %v668, %v664
  %v685 = vld [vmem:[%s3] sm:$0xf]
  %v686 = vld [vmem:[%s3 + $0x4] sm:$0xf]
  %v687 = vld [vmem:[%s3 + $0x8] sm:$0xf]
  %v688 = vld [vmem:[%s3 + $0xc] sm:$0xf]
  %v689 = vld [vmem:[%s3 + $0x10] sm:$0xf]
  %v690 = vld [vmem:[%s3 + $0x14] sm:$0xf]
  %v691 = vld [vmem:[%s3 + $0x18] sm:$0xf]
  %v692 = vld [vmem:[%s3 + $0x1c] sm:$0xf]
  %v693 = vld [vmem:[%s4] sm:$0xff]
  %v694 = vld [vmem:[%s4 + $0x8] sm:$0xff]
  %v695 = vld [vmem:[%s4 + $0x10] sm:$0xff]
  %v696 = vld [vmem:[%s4 + $0x18] sm:$0xff]
  %v697 = vld [vmem:[%s4 + $0x20] sm:$0xff]
  %v698 = vld [vmem:[%s4 + $0x28] sm:$0xff]
  %v699 = vld [vmem:[%s4 + $0x30] sm:$0xff]
  %v700 = vld [vmem:[%s4 + $0x38] sm:$0xff]
  %702 = vset.pattern.permute.xlu0 0
  %703 = vperm.xlu0 %702, %v693
  %v704 = vpop.permute.xlu0 %703
  %707 = vset.pattern.permute.xlu0 0
  %708 = vperm.xlu0 %707, %v694
  %v709 = vpop.permute.xlu0 %708
  %712 = vset.pattern.permute.xlu0 0
  %713 = vperm.xlu0 %712, %v695
  %v714 = vpop.permute.xlu0 %713
  %717 = vset.pattern.permute.xlu0 0
  %718 = vperm.xlu0 %717, %v696
  %v719 = vpop.permute.xlu0 %718
  %722 = vset.pattern.permute.xlu0 0
  %723 = vperm.xlu0 %722, %v697
  %v724 = vpop.permute.xlu0 %723
  %727 = vset.pattern.permute.xlu0 0
  %728 = vperm.xlu0 %727, %v698
  %v729 = vpop.permute.xlu0 %728
  %732 = vset.pattern.permute.xlu0 0
  %733 = vperm.xlu0 %732, %v699
  %v734 = vpop.permute.xlu0 %733
  %737 = vset.pattern.permute.xlu0 0
  %738 = vperm.xlu0 %737, %v700
  %v739 = vpop.permute.xlu0 %738
  %v749 = vunpack.c.l.b16 %v685
  %v750 = vunpack.c.l.b16 %v686
  %v751 = vunpack.c.l.b16 %v687
  %v752 = vunpack.c.l.b16 %v688
  %v753 = vunpack.c.l.b16 %v689
  %v754 = vunpack.c.l.b16 %v690
  %v755 = vunpack.c.l.b16 %v691
  %v756 = vunpack.c.l.b16 %v692
  %v757 = vpack.c.b16 %v750, %v749
  %v758 = vpack.c.b16 %v752, %v751
  %v759 = vpack.c.b16 %v754, %v753
  %v760 = vpack.c.b16 %v756, %v755
  %vm761 = vcmask 523264
  %v763 = vsel %vm761, %v757, 0
  %v766 = vsel %vm761, %v758, 0
  %v769 = vsel %vm761, %v759, 0
  %v772 = vsel %vm761, %v760, 0
  %774 = vmatprep.subr.bf16.mxu0 %v670
  %775 = vmatpush1.bf16.msra.mxu0 %v669
  %776 = vmatprep.subr.bf16.mxu0 %v674
  %777 = vmatpush1.bf16.msra.mxu0 %v673
  %778 = vmatprep.subr.bf16.mxu0 %v678
  %779 = vmatpush1.bf16.msra.mxu0 %v677
  %780 = vmatprep.subr.bf16.mxu0 %v682
  %781 = vmatpush1.bf16.msra.mxu0 %v681
  %782 = vmatprep.subr.bf16.mxu0 0
  %783 = vmatpush1.bf16.msra.mxu0 0
  %784 = vmatprep.subr.bf16.mxu0 0
  %785 = vmatpush1.bf16.msra.mxu0 0
  %786 = vmatprep.subr.bf16.mxu0 0
  %787 = vmatpush1.bf16.msra.mxu0 0
  %788 = vmatprep.subr.bf16.mxu0 0
  %789 = vmatpush1.bf16.msra.mxu0 0
  %790 = vmatprep.subr.bf16.mxu0 0
  %791 = vmatpush1.bf16.msra.mxu0 0
  %792 = vmatprep.subr.bf16.mxu0 0
  %793 = vmatpush1.bf16.msra.mxu0 0
  %794 = vmatprep.subr.bf16.mxu0 0
  %795 = vmatpush1.bf16.msra.mxu0 0
  %796 = vmatprep.subr.bf16.mxu0 0
  %797 = vmatpush1.bf16.msra.mxu0 0
  %798 = vmatprep.subr.bf16.mxu0 0
  %799 = vmatpush1.bf16.msra.mxu0 0
  %800 = vmatprep.subr.bf16.mxu0 0
  %801 = vmatpush1.bf16.msra.mxu0 0
  %802 = vmatprep.subr.bf16.mxu0 0
  %803 = vmatpush1.bf16.msra.mxu0 0
  %804 = vmatprep.subr.bf16.mxu0 0
  %805 = vmatpush1.bf16.msra.mxu0 0
  %806 = vmatprep.mubr.bf16.mxu0 0
  %807 = vmatmul.mubr.bf16.gmra.mrb[0].mxu0 %v763
  %v808 = vpop.f32.mrb[0].mxu0
  %v809 = vadd.f32 %v704, %v808
  %v810 = vpop.f32.mrb[0].mxu0
  %v811 = vadd.f32 %v704, %v810
  %v812 = vpop.f32.mrb[0].mxu0
  %v813 = vadd.f32 %v709, %v812
  %v814 = vpop.f32.mrb[0].mxu0
  %v815 = vadd.f32 %v709, %v814
  %816 = vmatprep.mubr.bf16.mxu0 0
  %817 = vmatmul.mubr.bf16.gmra.mrb[0].mxu0 %v766
  %v818 = vpop.f32.mrb[0].mxu0
  %v819 = vadd.f32 %v714, %v818
  %v820 = vpop.f32.mrb[0].mxu0
  %v821 = vadd.f32 %v714, %v820
  %v822 = vpop.f32.mrb[0].mxu0
  %v823 = vadd.f32 %v719, %v822
  %v824 = vpop.f32.mrb[0].mxu0
  %v825 = vadd.f32 %v719, %v824
  %826 = vmatprep.mubr.bf16.mxu0 0
  %827 = vmatmul.mubr.bf16.gmra.mrb[0].mxu0 %v769
  %v828 = vpop.f32.mrb[0].mxu0
  %v829 = vadd.f32 %v724, %v828
  %v830 = vpop.f32.mrb[0].mxu0
  %v831 = vadd.f32 %v724, %v830
  %v832 = vpop.f32.mrb[0].mxu0
  %v833 = vadd.f32 %v729, %v832
  %v834 = vpop.f32.mrb[0].mxu0
  %v835 = vadd.f32 %v729, %v834
  %836 = vmatprep.mubr.bf16.mxu0 0
  %837 = vmatmul.mubr.bf16.gmra.mrb[0].mxu0 %v772
  %v838 = vpop.f32.mrb[0].mxu0
  %v839 = vadd.f32 %v734, %v838
  %v840 = vpop.f32.mrb[0].mxu0
  %v841 = vadd.f32 %v734, %v840
  %v842 = vpop.f32.mrb[0].mxu0
  %v843 = vadd.f32 %v739, %v842
  %v844 = vpop.f32.mrb[0].mxu0
  %v845 = vadd.f32 %v739, %v844
  %846 = vdwg.mxu0
  %847 = vmatprep.subr.bf16.mxu0 %v672
  %848 = vmatpush1.bf16.msra.mxu0 %v671
  %849 = vmatprep.subr.bf16.mxu0 %v676
  %850 = vmatpush1.bf16.msra.mxu0 %v675
  %851 = vmatprep.subr.bf16.mxu0 %v680
  %852 = vmatpush1.bf16.msra.mxu0 %v679
  %853 = vmatprep.subr.bf16.mxu0 %v684
  %854 = vmatpush1.bf16.msra.mxu0 %v683
  %855 = vmatprep.subr.bf16.mxu0 0
  %856 = vmatpush1.bf16.msra.mxu0 0
  %857 = vmatprep.subr.bf16.mxu0 0
  %858 = vmatpush1.bf16.msra.mxu0 0
  %859 = vmatprep.subr.bf16.mxu0 0
  %860 = vmatpush1.bf16.msra.mxu0 0
  %861 = vmatprep.subr.bf16.mxu0 0
  %862 = vmatpush1.bf16.msra.mxu0 0
  %863 = vmatprep.subr.bf16.mxu0 0
  %864 = vmatpush1.bf16.msra.mxu0 0
  %865 = vmatprep.subr.bf16.mxu0 0
  %866 = vmatpush1.bf16.msra.mxu0 0
  %867 = vmatprep.subr.bf16.mxu0 0
  %868 = vmatpush1.bf16.msra.mxu0 0
  %869 = vmatprep.subr.bf16.mxu0 0
  %870 = vmatpush1.bf16.msra.mxu0 0
  %871 = vmatprep.subr.bf16.mxu0 0
  %872 = vmatpush1.bf16.msra.mxu0 0
  %873 = vmatprep.subr.bf16.mxu0 0
  %874 = vmatpush1.bf16.msra.mxu0 0
  %875 = vmatprep.subr.bf16.mxu0 0
  %876 = vmatpush1.bf16.msra.mxu0 0
  %877 = vmatprep.subr.bf16.mxu0 0
  %878 = vmatpush1.bf16.msra.mxu0 0
  %879 = vmatprep.mubr.bf16.mxu0 0
  %880 = vmatmul.mubr.bf16.gmra.mrb[0].mxu0 %v763
  %v881 = vpop.f32.mrb[0].mxu0
  %v882 = vadd.f32 %v704, %v881
  %v883 = vpop.f32.mrb[0].mxu0
  %v884 = vadd.f32 %v704, %v883
  %v885 = vpop.f32.mrb[0].mxu0
  %v886 = vadd.f32 %v709, %v885
  %v887 = vpop.f32.mrb[0].mxu0
  %v888 = vadd.f32 %v709, %v887
  %889 = vmatprep.mubr.bf16.mxu0 0
  %890 = vmatmul.mubr.bf16.gmra.mrb[0].mxu0 %v766
  %v891 = vpop.f32.mrb[0].mxu0
  %v892 = vadd.f32 %v714, %v891
  %v893 = vpop.f32.mrb[0].mxu0
  %v894 = vadd.f32 %v714, %v893
  %v895 = vpop.f32.mrb[0].mxu0
  %v896 = vadd.f32 %v719, %v895
  %v897 = vpop.f32.mrb[0].mxu0
  %v898 = vadd.f32 %v719, %v897
  %899 = vmatprep.mubr.bf16.mxu0 0
  %900 = vmatmul.mubr.bf16.gmra.mrb[0].mxu0 %v769
  %v901 = vpop.f32.mrb[0].mxu0
  %v902 = vadd.f32 %v724, %v901
  %v903 = vpop.f32.mrb[0].mxu0
  %v904 = vadd.f32 %v724, %v903
  %v905 = vpop.f32.mrb[0].mxu0
  %v906 = vadd.f32 %v729, %v905
  %v907 = vpop.f32.mrb[0].mxu0
  %v908 = vadd.f32 %v729, %v907
  %909 = vmatprep.mubr.bf16.mxu0 0
  %910 = vmatmul.mubr.bf16.gmra.mrb[0].mxu0 %v772
  %v911 = vpop.f32.mrb[0].mxu0
  %v912 = vadd.f32 %v734, %v911
  %v913 = vpop.f32.mrb[0].mxu0
  %v914 = vadd.f32 %v734, %v913
  %v915 = vpop.f32.mrb[0].mxu0
  %v916 = vadd.f32 %v739, %v915
  %v917 = vpop.f32.mrb[0].mxu0
  %v918 = vadd.f32 %v739, %v917
  %919 = vdwg.mxu0
  %v920 = vmul.f32 %v809, 0.5
  %v921 = vmul.f32 %v811, 0.5
  %v922 = vmul.f32 %v882, 0.5
  %v923 = vmul.f32 %v884, 0.5
  %v924 = vmul.f32 %v813, 0.5
  %v925 = vmul.f32 %v815, 0.5
  %v926 = vmul.f32 %v886, 0.5
  %v927 = vmul.f32 %v888, 0.5
  %v928 = vmul.f32 %v819, 0.5
  %v929 = vmul.f32 %v821, 0.5
  %v930 = vmul.f32 %v892, 0.5
  %v931 = vmul.f32 %v894, 0.5
  %v932 = vmul.f32 %v823, 0.5
  %v933 = vmul.f32 %v825, 0.5
  %v934 = vmul.f32 %v896, 0.5
  %v935 = vmul.f32 %v898, 0.5
  %v936 = vmul.f32 %v829, 0.5
  %v937 = vmul.f32 %v831, 0.5
  %v938 = vmul.f32 %v902, 0.5
  %v939 = vmul.f32 %v904, 0.5
  %v940 = vmul.f32 %v833, 0.5
  %v941 = vmul.f32 %v835, 0.5
  %v942 = vmul.f32 %v906, 0.5
  %v943 = vmul.f32 %v908, 0.5
  %v944 = vmul.f32 %v839, 0.5
  %v945 = vmul.f32 %v841, 0.5
  %v946 = vmul.f32 %v912, 0.5
  %v947 = vmul.f32 %v914, 0.5
  %v948 = vmul.f32 %v843, 0.5
  %v949 = vmul.f32 %v845, 0.5
  %v950 = vmul.f32 %v916, 0.5
  %v951 = vmul.f32 %v918, 0.5
  %v952 = vmul.f32 %v809, 0.70710677
  %v953 = vmul.f32 %v811, 0.70710677
  %v954 = vmul.f32 %v882, 0.70710677
  %v955 = vmul.f32 %v884, 0.70710677
  %v956 = vmul.f32 %v813, 0.70710677
  %v957 = vmul.f32 %v815, 0.70710677
  %v958 = vmul.f32 %v886, 0.70710677
  %v959 = vmul.f32 %v888, 0.70710677
  %v960 = vmul.f32 %v819, 0.70710677
  %v961 = vmul.f32 %v821, 0.70710677
  %v962 = vmul.f32 %v892, 0.70710677
  %v963 = vmul.f32 %v894, 0.70710677
  %v964 = vmul.f32 %v823, 0.70710677
  %v965 = vmul.f32 %v825, 0.70710677
  %v966 = vmul.f32 %v896, 0.70710677
  %v967 = vmul.f32 %v898, 0.70710677
  %v968 = vmul.f32 %v829, 0.70710677
  %v969 = vmul.f32 %v831, 0.70710677
  %v970 = vmul.f32 %v902, 0.70710677
  %v971 = vmul.f32 %v904, 0.70710677
  %v972 = vmul.f32 %v833, 0.70710677
  %v973 = vmul.f32 %v835, 0.70710677
  %v974 = vmul.f32 %v906, 0.70710677
  %v975 = vmul.f32 %v908, 0.70710677
  %v976 = vmul.f32 %v839, 0.70710677
  %v977 = vmul.f32 %v841, 0.70710677
  %v978 = vmul.f32 %v912, 0.70710677
  %v979 = vmul.f32 %v914, 0.70710677
  %v980 = vmul.f32 %v843, 0.70710677
  %v981 = vmul.f32 %v845, 0.70710677
  %v982 = vmul.f32 %v916, 0.70710677
  %v983 = vmul.f32 %v918, 0.70710677
  %v984 = verf.f32.pop %v952
  %v985 = verf.f32.pop %v953
  %v986 = verf.f32.pop %v954
  %v987 = verf.f32.pop %v955
  %v988 = verf.f32.pop %v956
  %v989 = verf.f32.pop %v957
  %v990 = verf.f32.pop %v958
  %v991 = verf.f32.pop %v959
  %v992 = verf.f32.pop %v960
  %v993 = verf.f32.pop %v961
  %v994 = verf.f32.pop %v962
  %v995 = verf.f32.pop %v963
  %v996 = verf.f32.pop %v964
  %v997 = verf.f32.pop %v965
  %v998 = verf.f32.pop %v966
  %v999 = verf.f32.pop %v967
  %v1000 = verf.f32.pop %v968
  %v1001 = verf.f32.pop %v969
  %v1002 = verf.f32.pop %v970
  %v1003 = verf.f32.pop %v971
  %v1004 = verf.f32.pop %v972
  %v1005 = verf.f32.pop %v973
  %v1006 = verf.f32.pop %v974
  %v1007 = verf.f32.pop %v975
  %v1008 = verf.f32.pop %v976
  %v1009 = verf.f32.pop %v977
  %v1010 = verf.f32.pop %v978
  %v1011 = verf.f32.pop %v979
  %v1012 = verf.f32.pop %v980
  %v1013 = verf.f32.pop %v981
  %v1014 = verf.f32.pop %v982
  %v1015 = verf.f32.pop %v983
  %v1016 = vadd.f32 %v984, 1.0
  %v1017 = vadd.f32 %v985, 1.0
  %v1018 = vadd.f32 %v986, 1.0
  %v1019 = vadd.f32 %v987, 1.0
  %v1020 = vadd.f32 %v988, 1.0
  %v1021 = vadd.f32 %v989, 1.0
  %v1022 = vadd.f32 %v990, 1.0
  %v1023 = vadd.f32 %v991, 1.0
  %v1024 = vadd.f32 %v992, 1.0
  %v1025 = vadd.f32 %v993, 1.0
  %v1026 = vadd.f32 %v994, 1.0
  %v1027 = vadd.f32 %v995, 1.0
  %v1028 = vadd.f32 %v996, 1.0
  %v1029 = vadd.f32 %v997, 1.0
  %v1030 = vadd.f32 %v998, 1.0
  %v1031 = vadd.f32 %v999, 1.0
  %v1032 = vadd.f32 %v1000, 1.0
  %v1033 = vadd.f32 %v1001, 1.0
  %v1034 = vadd.f32 %v1002, 1.0
  %v1035 = vadd.f32 %v1003, 1.0
  %v1036 = vadd.f32 %v1004, 1.0
  %v1037 = vadd.f32 %v1005, 1.0
  %v1038 = vadd.f32 %v1006, 1.0
  %v1039 = vadd.f32 %v1007, 1.0
  %v1040 = vadd.f32 %v1008, 1.0
  %v1041 = vadd.f32 %v1009, 1.0
  %v1042 = vadd.f32 %v1010, 1.0
  %v1043 = vadd.f32 %v1011, 1.0
  %v1044 = vadd.f32 %v1012, 1.0
  %v1045 = vadd.f32 %v1013, 1.0
  %v1046 = vadd.f32 %v1014, 1.0
  %v1047 = vadd.f32 %v1015, 1.0
  %v1048 = vmul.f32 %v920, %v1016
  %v1049 = vmul.f32 %v921, %v1017
  %v1050 = vmul.f32 %v922, %v1018
  %v1051 = vmul.f32 %v923, %v1019
  %v1052 = vmul.f32 %v924, %v1020
  %v1053 = vmul.f32 %v925, %v1021
  %v1054 = vmul.f32 %v926, %v1022
  %v1055 = vmul.f32 %v927, %v1023
  %v1056 = vmul.f32 %v928, %v1024
  %v1057 = vmul.f32 %v929, %v1025
  %v1058 = vmul.f32 %v930, %v1026
  %v1059 = vmul.f32 %v931, %v1027
  %v1060 = vmul.f32 %v932, %v1028
  %v1061 = vmul.f32 %v933, %v1029
  %v1062 = vmul.f32 %v934, %v1030
  %v1063 = vmul.f32 %v935, %v1031
  %v1064 = vmul.f32 %v936, %v1032
  %v1065 = vmul.f32 %v937, %v1033
  %v1066 = vmul.f32 %v938, %v1034
  %v1067 = vmul.f32 %v939, %v1035
  %v1068 = vmul.f32 %v940, %v1036
  %v1069 = vmul.f32 %v941, %v1037
  %v1070 = vmul.f32 %v942, %v1038
  %v1071 = vmul.f32 %v943, %v1039
  %v1072 = vmul.f32 %v944, %v1040
  %v1073 = vmul.f32 %v945, %v1041
  %v1074 = vmul.f32 %v946, %v1042
  %v1075 = vmul.f32 %v947, %v1043
  %v1076 = vmul.f32 %v948, %v1044
  %v1077 = vmul.f32 %v949, %v1045
  %v1078 = vmul.f32 %v950, %v1046
  %v1079 = vmul.f32 %v951, %v1047
  %v1080 = vpack.c.bf16 %v1052, %v1048
  %v1081 = vpack.c.bf16 %v1053, %v1049
  %v1082 = vpack.c.bf16 %v1054, %v1050
  %v1083 = vpack.c.bf16 %v1055, %v1051
  %v1084 = vpack.c.bf16 %v1060, %v1056
  %v1085 = vpack.c.bf16 %v1061, %v1057
  %v1086 = vpack.c.bf16 %v1062, %v1058
  %v1087 = vpack.c.bf16 %v1063, %v1059
  %v1088 = vpack.c.bf16 %v1068, %v1064
  %v1089 = vpack.c.bf16 %v1069, %v1065
  %v1090 = vpack.c.bf16 %v1070, %v1066
  %v1091 = vpack.c.bf16 %v1071, %v1067
  %v1092 = vpack.c.bf16 %v1076, %v1072
  %v1093 = vpack.c.bf16 %v1077, %v1073
  %v1094 = vpack.c.bf16 %v1078, %v1074
  %v1095 = vpack.c.bf16 %v1079, %v1075
  %v1096 = vld [vmem:[%s5] sm:$0xf]
  %v1097 = vld [vmem:[%s5 + $0x4] sm:$0xf]
  %v1098 = vld [vmem:[%s5 + $0x8] sm:$0xf]
  %v1099 = vld [vmem:[%s5 + $0xc] sm:$0xf]
  %v1100 = vld [vmem:[%s5 + $0x10] sm:$0xf]
  %v1101 = vld [vmem:[%s5 + $0x14] sm:$0xf]
  %v1102 = vld [vmem:[%s5 + $0x18] sm:$0xf]
  %v1103 = vld [vmem:[%s5 + $0x1c] sm:$0xf]
  %v1104 = vld [vmem:[%s5 + $0x20] sm:$0xf]
  %v1105 = vld [vmem:[%s5 + $0x24] sm:$0xf]
  %v1106 = vld [vmem:[%s5 + $0x28] sm:$0xf]
  %v1107 = vld [vmem:[%s5 + $0x2c] sm:$0xf]
  %v1108 = vld [vmem:[%s5 + $0x30] sm:$0xf]
  %v1109 = vld [vmem:[%s5 + $0x34] sm:$0xf]
  %v1110 = vld [vmem:[%s5 + $0x38] sm:$0xf]
  %v1111 = vld [vmem:[%s5 + $0x3c] sm:$0xf]
  %v1112 = vld [vmem:[%s6] sm:$0xff]
  %v1113 = vld [vmem:[%s6 + $0x8] sm:$0xff]
  %v1114 = vld [vmem:[%s6 + $0x10] sm:$0xff]
  %v1115 = vld [vmem:[%s6 + $0x18] sm:$0xff]
  %v1116 = vld [vmem:[%s6 + $0x20] sm:$0xff]
  %v1117 = vld [vmem:[%s6 + $0x28] sm:$0xff]
  %v1118 = vld [vmem:[%s6 + $0x30] sm:$0xff]
  %v1119 = vld [vmem:[%s6 + $0x38] sm:$0xff]
  %v1120 = vld [vmem:[%s6 + $0x40] sm:$0xff]
  %v1121 = vld [vmem:[%s6 + $0x48] sm:$0xff]
  %v1122 = vld [vmem:[%s6 + $0x50] sm:$0xff]
  %v1123 = vld [vmem:[%s6 + $0x58] sm:$0xff]
  %v1124 = vld [vmem:[%s6 + $0x60] sm:$0xff]
  %v1125 = vld [vmem:[%s6 + $0x68] sm:$0xff]
  %v1126 = vld [vmem:[%s6 + $0x70] sm:$0xff]
  %v1127 = vld [vmem:[%s6 + $0x78] sm:$0xff]
  %1129 = vset.pattern.permute.xlu0 0
  %1130 = vperm.xlu0 %1129, %v1112
  %v1131 = vpop.permute.xlu0 %1130
  %1134 = vset.pattern.permute.xlu0 0
  %1135 = vperm.xlu0 %1134, %v1113
  %v1136 = vpop.permute.xlu0 %1135
  %1139 = vset.pattern.permute.xlu0 0
  %1140 = vperm.xlu0 %1139, %v1114
  %v1141 = vpop.permute.xlu0 %1140
  %1144 = vset.pattern.permute.xlu0 0
  %1145 = vperm.xlu0 %1144, %v1115
  %v1146 = vpop.permute.xlu0 %1145
  %1149 = vset.pattern.permute.xlu0 0
  %1150 = vperm.xlu0 %1149, %v1116
  %v1151 = vpop.permute.xlu0 %1150
  %1154 = vset.pattern.permute.xlu0 0
  %1155 = vperm.xlu0 %1154, %v1117
  %v1156 = vpop.permute.xlu0 %1155
  %1159 = vset.pattern.permute.xlu0 0
  %1160 = vperm.xlu0 %1159, %v1118
  %v1161 = vpop.permute.xlu0 %1160
  %1164 = vset.pattern.permute.xlu0 0
  %1165 = vperm.xlu0 %1164, %v1119
  %v1166 = vpop.permute.xlu0 %1165
  %1169 = vset.pattern.permute.xlu0 0
  %1170 = vperm.xlu0 %1169, %v1120
  %v1171 = vpop.permute.xlu0 %1170
  %1174 = vset.pattern.permute.xlu0 0
  %1175 = vperm.xlu0 %1174, %v1121
  %v1176 = vpop.permute.xlu0 %1175
  %1179 = vset.pattern.permute.xlu0 0
  %1180 = vperm.xlu0 %1179, %v1122
  %v1181 = vpop.permute.xlu0 %1180
  %1184 = vset.pattern.permute.xlu0 0
  %1185 = vperm.xlu0 %1184, %v1123
  %v1186 = vpop.permute.xlu0 %1185
  %1189 = vset.pattern.permute.xlu0 0
  %1190 = vperm.xlu0 %1189, %v1124
  %v1191 = vpop.permute.xlu0 %1190
  %1194 = vset.pattern.permute.xlu0 0
  %1195 = vperm.xlu0 %1194, %v1125
  %v1196 = vpop.permute.xlu0 %1195
  %1199 = vset.pattern.permute.xlu0 0
  %1200 = vperm.xlu0 %1199, %v1126
  %v1201 = vpop.permute.xlu0 %1200
  %1204 = vset.pattern.permute.xlu0 0
  %1205 = vperm.xlu0 %1204, %v1127
  %v1206 = vpop.permute.xlu0 %1205
  %v1224 = vunpack.c.l.b16 %v1096
  %v1225 = vunpack.c.l.b16 %v1097
  %v1226 = vunpack.c.l.b16 %v1098
  %v1227 = vunpack.c.l.b16 %v1099
  %v1228 = vunpack.c.l.b16 %v1100
  %v1229 = vunpack.c.l.b16 %v1101
  %v1230 = vunpack.c.l.b16 %v1102
  %v1231 = vunpack.c.l.b16 %v1103
  %v1232 = vunpack.c.l.b16 %v1104
  %v1233 = vunpack.c.l.b16 %v1105
  %v1234 = vunpack.c.l.b16 %v1106
  %v1235 = vunpack.c.l.b16 %v1107
  %v1236 = vunpack.c.l.b16 %v1108
  %v1237 = vunpack.c.l.b16 %v1109
  %v1238 = vunpack.c.l.b16 %v1110
  %v1239 = vunpack.c.l.b16 %v1111
  %v1240 = vpack.c.b16 %v1225, %v1224
  %v1241 = vpack.c.b16 %v1227, %v1226
  %v1242 = vpack.c.b16 %v1229, %v1228
  %v1243 = vpack.c.b16 %v1231, %v1230
  %v1244 = vpack.c.b16 %v1233, %v1232
  %v1245 = vpack.c.b16 %v1235, %v1234
  %v1246 = vpack.c.b16 %v1237, %v1236
  %v1247 = vpack.c.b16 %v1239, %v1238
  %v1249 = vsel %vm761, %v1240, 0
  %v1252 = vsel %vm761, %v1241, 0
  %v1255 = vsel %vm761, %v1242, 0
  %v1258 = vsel %vm761, %v1243, 0
  %v1261 = vsel %vm761, %v1244, 0
  %v1264 = vsel %vm761, %v1245, 0
  %v1267 = vsel %vm761, %v1246, 0
  %v1270 = vsel %vm761, %v1247, 0
  %1272 = vmatprep.subr.bf16.mxu0 %v1081
  %1273 = vmatpush1.bf16.msra.mxu0 %v1080
  %1274 = vmatprep.subr.bf16.mxu0 %v1085
  %1275 = vmatpush1.bf16.msra.mxu0 %v1084
  %1276 = vmatprep.subr.bf16.mxu0 %v1089
  %1277 = vmatpush1.bf16.msra.mxu0 %v1088
  %1278 = vmatprep.subr.bf16.mxu0 %v1093
  %1279 = vmatpush1.bf16.msra.mxu0 %v1092
  %1280 = vmatprep.subr.bf16.mxu0 0
  %1281 = vmatpush1.bf16.msra.mxu0 0
  %1282 = vmatprep.subr.bf16.mxu0 0
  %1283 = vmatpush1.bf16.msra.mxu0 0
  %1284 = vmatprep.subr.bf16.mxu0 0
  %1285 = vmatpush1.bf16.msra.mxu0 0
  %1286 = vmatprep.subr.bf16.mxu0 0
  %1287 = vmatpush1.bf16.msra.mxu0 0
  %1288 = vmatprep.subr.bf16.mxu0 0
  %1289 = vmatpush1.bf16.msra.mxu0 0
  %1290 = vmatprep.subr.bf16.mxu0 0
  %1291 = vmatpush1.bf16.msra.mxu0 0
  %1292 = vmatprep.subr.bf16.mxu0 0
  %1293 = vmatpush1.bf16.msra.mxu0 0
  %1294 = vmatprep.subr.bf16.mxu0 0
  %1295 = vmatpush1.bf16.msra.mxu0 0
  %1296 = vmatprep.subr.bf16.mxu0 0
  %1297 = vmatpush1.bf16.msra.mxu0 0
  %1298 = vmatprep.subr.bf16.mxu0 0
  %1299 = vmatpush1.bf16.msra.mxu0 0
  %1300 = vmatprep.subr.bf16.mxu0 0
  %1301 = vmatpush1.bf16.msra.mxu0 0
  %1302 = vmatprep.subr.bf16.mxu0 0
  %1303 = vmatpush1.bf16.msra.mxu0 0
  %1304 = vmatprep.mubr.bf16.mxu0 0
  %1305 = vmatmul.mubr.bf16.gmra.mrb[0].mxu0 %v1249
  %v1306 = vpop.f32.mrb[0].mxu0
  %v1307 = vadd.f32 %v1131, %v1306
  %v1308 = vpop.f32.mrb[0].mxu0
  %v1309 = vadd.f32 %v1131, %v1308
  %v1310 = vpop.f32.mrb[0].mxu0
  %v1311 = vadd.f32 %v1136, %v1310
  %v1312 = vpop.f32.mrb[0].mxu0
  %v1313 = vadd.f32 %v1136, %v1312
  %1314 = vmatprep.mubr.bf16.mxu0 0
  %1315 = vmatmul.mubr.bf16.gmra.mrb[0].mxu0 %v1252
  %v1316 = vpop.f32.mrb[0].mxu0
  %v1317 = vadd.f32 %v1141, %v1316
  %v1318 = vpop.f32.mrb[0].mxu0
  %v1319 = vadd.f32 %v1141, %v1318
  %v1320 = vpop.f32.mrb[0].mxu0
  %v1321 = vadd.f32 %v1146, %v1320
  %v1322 = vpop.f32.mrb[0].mxu0
  %v1323 = vadd.f32 %v1146, %v1322
  %1324 = vmatprep.mubr.bf16.mxu0 0
  %1325 = vmatmul.mubr.bf16.gmra.mrb[0].mxu0 %v1255
  %v1326 = vpop.f32.mrb[0].mxu0
  %v1327 = vadd.f32 %v1151, %v1326
  %v1328 = vpop.f32.mrb[0].mxu0
  %v1329 = vadd.f32 %v1151, %v1328
  %v1330 = vpop.f32.mrb[0].mxu0
  %v1331 = vadd.f32 %v1156, %v1330
  %v1332 = vpop.f32.mrb[0].mxu0
  %v1333 = vadd.f32 %v1156, %v1332
  %1334 = vmatprep.mubr.bf16.mxu0 0
  %1335 = vmatmul.mubr.bf16.gmra.mrb[0].mxu0 %v1258
  %v1336 = vpop.f32.mrb[0].mxu0
  %v1337 = vadd.f32 %v1161, %v1336
  %v1338 = vpop.f32.mrb[0].mxu0
  %v1339 = vadd.f32 %v1161, %v1338
  %v1340 = vpop.f32.mrb[0].mxu0
  %v1341 = vadd.f32 %v1166, %v1340
  %v1342 = vpop.f32.mrb[0].mxu0
  %v1343 = vadd.f32 %v1166, %v1342
  %1344 = vmatprep.mubr.bf16.mxu0 0
  %1345 = vmatmul.mubr.bf16.gmra.mrb[0].mxu0 %v1261
  %v1346 = vpop.f32.mrb[0].mxu0
  %v1347 = vadd.f32 %v1171, %v1346
  %v1348 = vpop.f32.mrb[0].mxu0
  %v1349 = vadd.f32 %v1171, %v1348
  %v1350 = vpop.f32.mrb[0].mxu0
  %v1351 = vadd.f32 %v1176, %v1350
  %v1352 = vpop.f32.mrb[0].mxu0
  %v1353 = vadd.f32 %v1176, %v1352
  %1354 = vmatprep.mubr.bf16.mxu0 0
  %1355 = vmatmul.mubr.bf16.gmra.mrb[0].mxu0 %v1264
  %v1356 = vpop.f32.mrb[0].mxu0
  %v1357 = vadd.f32 %v1181, %v1356
  %v1358 = vpop.f32.mrb[0].mxu0
  %v1359 = vadd.f32 %v1181, %v1358
  %v1360 = vpop.f32.mrb[0].mxu0
  %v1361 = vadd.f32 %v1186, %v1360
  %v1362 = vpop.f32.mrb[0].mxu0
  %v1363 = vadd.f32 %v1186, %v1362
  %1364 = vmatprep.mubr.bf16.mxu0 0
  %1365 = vmatmul.mubr.bf16.gmra.mrb[0].mxu0 %v1267
  %v1366 = vpop.f32.mrb[0].mxu0
  %v1367 = vadd.f32 %v1191, %v1366
  %v1368 = vpop.f32.mrb[0].mxu0
  %v1369 = vadd.f32 %v1191, %v1368
  %v1370 = vpop.f32.mrb[0].mxu0
  %v1371 = vadd.f32 %v1196, %v1370
  %v1372 = vpop.f32.mrb[0].mxu0
  %v1373 = vadd.f32 %v1196, %v1372
  %1374 = vmatprep.mubr.bf16.mxu0 0
  %1375 = vmatmul.mubr.bf16.gmra.mrb[0].mxu0 %v1270
  %v1376 = vpop.f32.mrb[0].mxu0
  %v1377 = vadd.f32 %v1201, %v1376
  %v1378 = vpop.f32.mrb[0].mxu0
  %v1379 = vadd.f32 %v1201, %v1378
  %v1380 = vpop.f32.mrb[0].mxu0
  %v1381 = vadd.f32 %v1206, %v1380
  %v1382 = vpop.f32.mrb[0].mxu0
  %v1383 = vadd.f32 %v1206, %v1382
  %1384 = vdwg.mxu0
  %1385 = vmatprep.subr.bf16.mxu0 %v1083
  %1386 = vmatpush1.bf16.msra.mxu0 %v1082
  %1387 = vmatprep.subr.bf16.mxu0 %v1087
  %1388 = vmatpush1.bf16.msra.mxu0 %v1086
  %1389 = vmatprep.subr.bf16.mxu0 %v1091
  %1390 = vmatpush1.bf16.msra.mxu0 %v1090
  %1391 = vmatprep.subr.bf16.mxu0 %v1095
  %1392 = vmatpush1.bf16.msra.mxu0 %v1094
  %1393 = vmatprep.subr.bf16.mxu0 0
  %1394 = vmatpush1.bf16.msra.mxu0 0
  %1395 = vmatprep.subr.bf16.mxu0 0
  %1396 = vmatpush1.bf16.msra.mxu0 0
  %1397 = vmatprep.subr.bf16.mxu0 0
  %1398 = vmatpush1.bf16.msra.mxu0 0
  %1399 = vmatprep.subr.bf16.mxu0 0
  %1400 = vmatpush1.bf16.msra.mxu0 0
  %1401 = vmatprep.subr.bf16.mxu0 0
  %1402 = vmatpush1.bf16.msra.mxu0 0
  %1403 = vmatprep.subr.bf16.mxu0 0
  %1404 = vmatpush1.bf16.msra.mxu0 0
  %1405 = vmatprep.subr.bf16.mxu0 0
  %1406 = vmatpush1.bf16.msra.mxu0 0
  %1407 = vmatprep.subr.bf16.mxu0 0
  %1408 = vmatpush1.bf16.msra.mxu0 0
  %1409 = vmatprep.subr.bf16.mxu0 0
  %1410 = vmatpush1.bf16.msra.mxu0 0
  %1411 = vmatprep.subr.bf16.mxu0 0
  %1412 = vmatpush1.bf16.msra.mxu0 0
  %1413 = vmatprep.subr.bf16.mxu0 0
  %1414 = vmatpush1.bf16.msra.mxu0 0
  %1415 = vmatprep.subr.bf16.mxu0 0
  %1416 = vmatpush1.bf16.msra.mxu0 0
  %1417 = vmatprep.mubr.bf16.mxu0 0
  %1418 = vmatmul.mubr.bf16.gmra.mrb[0].mxu0 %v1249
  %v1419 = vpop.f32.mrb[0].mxu0
  %v1420 = vadd.f32 %v1131, %v1419
  %v1421 = vpop.f32.mrb[0].mxu0
  %v1422 = vadd.f32 %v1131, %v1421
  %v1423 = vpop.f32.mrb[0].mxu0
  %v1424 = vadd.f32 %v1136, %v1423
  %v1425 = vpop.f32.mrb[0].mxu0
  %v1426 = vadd.f32 %v1136, %v1425
  %1427 = vmatprep.mubr.bf16.mxu0 0
  %1428 = vmatmul.mubr.bf16.gmra.mrb[0].mxu0 %v1252
  %v1429 = vpop.f32.mrb[0].mxu0
  %v1430 = vadd.f32 %v1141, %v1429
  %v1431 = vpop.f32.mrb[0].mxu0
  %v1432 = vadd.f32 %v1141, %v1431
  %v1433 = vpop.f32.mrb[0].mxu0
  %v1434 = vadd.f32 %v1146, %v1433
  %v1435 = vpop.f32.mrb[0].mxu0
  %v1436 = vadd.f32 %v1146, %v1435
  %1437 = vmatprep.mubr.bf16.mxu0 0
  %1438 = vmatmul.mubr.bf16.gmra.mrb[0].mxu0 %v1255
  %v1439 = vpop.f32.mrb[0].mxu0
  %v1440 = vadd.f32 %v1151, %v1439
  %v1441 = vpop.f32.mrb[0].mxu0
  %v1442 = vadd.f32 %v1151, %v1441
  %v1443 = vpop.f32.mrb[0].mxu0
  %v1444 = vadd.f32 %v1156, %v1443
  %v1445 = vpop.f32.mrb[0].mxu0
  %v1446 = vadd.f32 %v1156, %v1445
  %1447 = vmatprep.mubr.bf16.mxu0 0
  %1448 = vmatmul.mubr.bf16.gmra.mrb[0].mxu0 %v1258
  %v1449 = vpop.f32.mrb[0].mxu0
  %v1450 = vadd.f32 %v1161, %v1449
  %v1451 = vpop.f32.mrb[0].mxu0
  %v1452 = vadd.f32 %v1161, %v1451
  %v1453 = vpop.f32.mrb[0].mxu0
  %v1454 = vadd.f32 %v1166, %v1453
  %v1455 = vpop.f32.mrb[0].mxu0
  %v1456 = vadd.f32 %v1166, %v1455
  %1457 = vmatprep.mubr.bf16.mxu0 0
  %1458 = vmatmul.mubr.bf16.gmra.mrb[0].mxu0 %v1261
  %v1459 = vpop.f32.mrb[0].mxu0
  %v1460 = vadd.f32 %v1171, %v1459
  %v1461 = vpop.f32.mrb[0].mxu0
  %v1462 = vadd.f32 %v1171, %v1461
  %v1463 = vpop.f32.mrb[0].mxu0
  %v1464 = vadd.f32 %v1176, %v1463
  %v1465 = vpop.f32.mrb[0].mxu0
  %v1466 = vadd.f32 %v1176, %v1465
  %1467 = vmatprep.mubr.bf16.mxu0 0
  %1468 = vmatmul.mubr.bf16.gmra.mrb[0].mxu0 %v1264
  %v1469 = vpop.f32.mrb[0].mxu0
  %v1470 = vadd.f32 %v1181, %v1469
  %v1471 = vpop.f32.mrb[0].mxu0
  %v1472 = vadd.f32 %v1181, %v1471
  %v1473 = vpop.f32.mrb[0].mxu0
  %v1474 = vadd.f32 %v1186, %v1473
  %v1475 = vpop.f32.mrb[0].mxu0
  %v1476 = vadd.f32 %v1186, %v1475
  %1477 = vmatprep.mubr.bf16.mxu0 0
  %1478 = vmatmul.mubr.bf16.gmra.mrb[0].mxu0 %v1267
  %v1479 = vpop.f32.mrb[0].mxu0
  %v1480 = vadd.f32 %v1191, %v1479
  %v1481 = vpop.f32.mrb[0].mxu0
  %v1482 = vadd.f32 %v1191, %v1481
  %v1483 = vpop.f32.mrb[0].mxu0
  %v1484 = vadd.f32 %v1196, %v1483
  %v1485 = vpop.f32.mrb[0].mxu0
  %v1486 = vadd.f32 %v1196, %v1485
  %1487 = vmatprep.mubr.bf16.mxu0 0
  %1488 = vmatmul.mubr.bf16.gmra.mrb[0].mxu0 %v1270
  %v1489 = vpop.f32.mrb[0].mxu0
  %v1490 = vadd.f32 %v1201, %v1489
  %v1491 = vpop.f32.mrb[0].mxu0
  %v1492 = vadd.f32 %v1201, %v1491
  %v1493 = vpop.f32.mrb[0].mxu0
  %v1494 = vadd.f32 %v1206, %v1493
  %v1495 = vpop.f32.mrb[0].mxu0
  %v1496 = vadd.f32 %v1206, %v1495
  %1497 = vdwg.mxu0
  %v1498 = vmul.f32 %v1307, 0.5
  %v1499 = vmul.f32 %v1309, 0.5
  %v1500 = vmul.f32 %v1420, 0.5
  %v1501 = vmul.f32 %v1422, 0.5
  %v1502 = vmul.f32 %v1311, 0.5
  %v1503 = vmul.f32 %v1313, 0.5
  %v1504 = vmul.f32 %v1424, 0.5
  %v1505 = vmul.f32 %v1426, 0.5
  %v1506 = vmul.f32 %v1317, 0.5
  %v1507 = vmul.f32 %v1319, 0.5
  %v1508 = vmul.f32 %v1430, 0.5
  %v1509 = vmul.f32 %v1432, 0.5
  %v1510 = vmul.f32 %v1321, 0.5
  %v1511 = vmul.f32 %v1323, 0.5
  %v1512 = vmul.f32 %v1434, 0.5
  %v1513 = vmul.f32 %v1436, 0.5
  %v1514 = vmul.f32 %v1327, 0.5
  %v1515 = vmul.f32 %v1329, 0.5
  %v1516 = vmul.f32 %v1440, 0.5
  %v1517 = vmul.f32 %v1442, 0.5
  %v1518 = vmul.f32 %v1331, 0.5
  %v1519 = vmul.f32 %v1333, 0.5
  %v1520 = vmul.f32 %v1444, 0.5
  %v1521 = vmul.f32 %v1446, 0.5
  %v1522 = vmul.f32 %v1337, 0.5
  %v1523 = vmul.f32 %v1339, 0.5
  %v1524 = vmul.f32 %v1450, 0.5
  %v1525 = vmul.f32 %v1452, 0.5
  %v1526 = vmul.f32 %v1341, 0.5
  %v1527 = vmul.f32 %v1343, 0.5
  %v1528 = vmul.f32 %v1454, 0.5
  %v1529 = vmul.f32 %v1456, 0.5
  %v1530 = vmul.f32 %v1347, 0.5
  %v1531 = vmul.f32 %v1349, 0.5
  %v1532 = vmul.f32 %v1460, 0.5
  %v1533 = vmul.f32 %v1462, 0.5
  %v1534 = vmul.f32 %v1351, 0.5
  %v1535 = vmul.f32 %v1353, 0.5
  %v1536 = vmul.f32 %v1464, 0.5
  %v1537 = vmul.f32 %v1466, 0.5
  %v1538 = vmul.f32 %v1357, 0.5
  %v1539 = vmul.f32 %v1359, 0.5
  %v1540 = vmul.f32 %v1470, 0.5
  %v1541 = vmul.f32 %v1472, 0.5
  %v1542 = vmul.f32 %v1361, 0.5
  %v1543 = vmul.f32 %v1363, 0.5
  %v1544 = vmul.f32 %v1474, 0.5
  %v1545 = vmul.f32 %v1476, 0.5
  %v1546 = vmul.f32 %v1367, 0.5
  %v1547 = vmul.f32 %v1369, 0.5
  %v1548 = vmul.f32 %v1480, 0.5
  %v1549 = vmul.f32 %v1482, 0.5
  %v1550 = vmul.f32 %v1371, 0.5
  %v1551 = vmul.f32 %v1373, 0.5
  %v1552 = vmul.f32 %v1484, 0.5
  %v1553 = vmul.f32 %v1486, 0.5
  %v1554 = vmul.f32 %v1377, 0.5
  %v1555 = vmul.f32 %v1379, 0.5
  %v1556 = vmul.f32 %v1490, 0.5
  %v1557 = vmul.f32 %v1492, 0.5
  %v1558 = vmul.f32 %v1381, 0.5
  %v1559 = vmul.f32 %v1383, 0.5
  %v1560 = vmul.f32 %v1494, 0.5
  %v1561 = vmul.f32 %v1496, 0.5
  %v1562 = vmul.f32 %v1307, 0.70710677
  %v1563 = vmul.f32 %v1309, 0.70710677
  %v1564 = vmul.f32 %v1420, 0.70710677
  %v1565 = vmul.f32 %v1422, 0.70710677
  %v1566 = vmul.f32 %v1311, 0.70710677
  %v1567 = vmul.f32 %v1313, 0.70710677
  %v1568 = vmul.f32 %v1424, 0.70710677
  %v1569 = vmul.f32 %v1426, 0.70710677
  %v1570 = vmul.f32 %v1317, 0.70710677
  %v1571 = vmul.f32 %v1319, 0.70710677
  %v1572 = vmul.f32 %v1430, 0.70710677
  %v1573 = vmul.f32 %v1432, 0.70710677
  %v1574 = vmul.f32 %v1321, 0.70710677
  %v1575 = vmul.f32 %v1323, 0.70710677
  %v1576 = vmul.f32 %v1434, 0.70710677
  %v1577 = vmul.f32 %v1436, 0.70710677
  %v1578 = vmul.f32 %v1327, 0.70710677
  %v1579 = vmul.f32 %v1329, 0.70710677
  %v1580 = vmul.f32 %v1440, 0.70710677
  %v1581 = vmul.f32 %v1442, 0.70710677
  %v1582 = vmul.f32 %v1331, 0.70710677
  %v1583 = vmul.f32 %v1333, 0.70710677
  %v1584 = vmul.f32 %v1444, 0.70710677
  %v1585 = vmul.f32 %v1446, 0.70710677
  %v1586 = vmul.f32 %v1337, 0.70710677
  %v1587 = vmul.f32 %v1339, 0.70710677
  %v1588 = vmul.f32 %v1450, 0.70710677
  %v1589 = vmul.f32 %v1452, 0.70710677
  %v1590 = vmul.f32 %v1341, 0.70710677
  %v1591 = vmul.f32 %v1343, 0.70710677
  %v1592 = vmul.f32 %v1454, 0.70710677
  %v1593 = vmul.f32 %v1456, 0.70710677
  %v1594 = vmul.f32 %v1347, 0.70710677
  %v1595 = vmul.f32 %v1349, 0.70710677
  %v1596 = vmul.f32 %v1460, 0.70710677
  %v1597 = vmul.f32 %v1462, 0.70710677
  %v1598 = vmul.f32 %v1351, 0.70710677
  %v1599 = vmul.f32 %v1353, 0.70710677
  %v1600 = vmul.f32 %v1464, 0.70710677
  %v1601 = vmul.f32 %v1466, 0.70710677
  %v1602 = vmul.f32 %v1357, 0.70710677
  %v1603 = vmul.f32 %v1359, 0.70710677
  %v1604 = vmul.f32 %v1470, 0.70710677
  %v1605 = vmul.f32 %v1472, 0.70710677
  %v1606 = vmul.f32 %v1361, 0.70710677
  %v1607 = vmul.f32 %v1363, 0.70710677
  %v1608 = vmul.f32 %v1474, 0.70710677
  %v1609 = vmul.f32 %v1476, 0.70710677
  %v1610 = vmul.f32 %v1367, 0.70710677
  %v1611 = vmul.f32 %v1369, 0.70710677
  %v1612 = vmul.f32 %v1480, 0.70710677
  %v1613 = vmul.f32 %v1482, 0.70710677
  %v1614 = vmul.f32 %v1371, 0.70710677
  %v1615 = vmul.f32 %v1373, 0.70710677
  %v1616 = vmul.f32 %v1484, 0.70710677
  %v1617 = vmul.f32 %v1486, 0.70710677
  %v1618 = vmul.f32 %v1377, 0.70710677
  %v1619 = vmul.f32 %v1379, 0.70710677
  %v1620 = vmul.f32 %v1490, 0.70710677
  %v1621 = vmul.f32 %v1492, 0.70710677
  %v1622 = vmul.f32 %v1381, 0.70710677
  %v1623 = vmul.f32 %v1383, 0.70710677
  %v1624 = vmul.f32 %v1494, 0.70710677
  %v1625 = vmul.f32 %v1496, 0.70710677
  %v1626 = verf.f32.pop %v1562
  %v1627 = verf.f32.pop %v1563
  %v1628 = verf.f32.pop %v1564
  %v1629 = verf.f32.pop %v1565
  %v1630 = verf.f32.pop %v1566
  %v1631 = verf.f32.pop %v1567
  %v1632 = verf.f32.pop %v1568
  %v1633 = verf.f32.pop %v1569
  %v1634 = verf.f32.pop %v1570
  %v1635 = verf.f32.pop %v1571
  %v1636 = verf.f32.pop %v1572
  %v1637 = verf.f32.pop %v1573
  %v1638 = verf.f32.pop %v1574
  %v1639 = verf.f32.pop %v1575
  %v1640 = verf.f32.pop %v1576
  %v1641 = verf.f32.pop %v1577
  %v1642 = verf.f32.pop %v1578
  %v1643 = verf.f32.pop %v1579
  %v1644 = verf.f32.pop %v1580
  %v1645 = verf.f32.pop %v1581
  %v1646 = verf.f32.pop %v1582
  %v1647 = verf.f32.pop %v1583
  %v1648 = verf.f32.pop %v1584
  %v1649 = verf.f32.pop %v1585
  %v1650 = verf.f32.pop %v1586
  %v1651 = verf.f32.pop %v1587
  %v1652 = verf.f32.pop %v1588
  %v1653 = verf.f32.pop %v1589
  %v1654 = verf.f32.pop %v1590
  %v1655 = verf.f32.pop %v1591
  %v1656 = verf.f32.pop %v1592
  %v1657 = verf.f32.pop %v1593
  %v1658 = verf.f32.pop %v1594
  %v1659 = verf.f32.pop %v1595
  %v1660 = verf.f32.pop %v1596
  %v1661 = verf.f32.pop %v1597
  %v1662 = verf.f32.pop %v1598
  %v1663 = verf.f32.pop %v1599
  %v1664 = verf.f32.pop %v1600
  %v1665 = verf.f32.pop %v1601
  %v1666 = verf.f32.pop %v1602
  %v1667 = verf.f32.pop %v1603
  %v1668 = verf.f32.pop %v1604
  %v1669 = verf.f32.pop %v1605
  %v1670 = verf.f32.pop %v1606
  %v1671 = verf.f32.pop %v1607
  %v1672 = verf.f32.pop %v1608
  %v1673 = verf.f32.pop %v1609
  %v1674 = verf.f32.pop %v1610
  %v1675 = verf.f32.pop %v1611
  %v1676 = verf.f32.pop %v1612
  %v1677 = verf.f32.pop %v1613
  %v1678 = verf.f32.pop %v1614
  %v1679 = verf.f32.pop %v1615
  %v1680 = verf.f32.pop %v1616
  %v1681 = verf.f32.pop %v1617
  %v1682 = verf.f32.pop %v1618
  %v1683 = verf.f32.pop %v1619
  %v1684 = verf.f32.pop %v1620
  %v1685 = verf.f32.pop %v1621
  %v1686 = verf.f32.pop %v1622
  %v1687 = verf.f32.pop %v1623
  %v1688 = verf.f32.pop %v1624
  %v1689 = verf.f32.pop %v1625
  %v1690 = vadd.f32 %v1626, 1.0
  %v1691 = vadd.f32 %v1627, 1.0
  %v1692 = vadd.f32 %v1628, 1.0
  %v1693 = vadd.f32 %v1629, 1.0
  %v1694 = vadd.f32 %v1630, 1.0
  %v1695 = vadd.f32 %v1631, 1.0
  %v1696 = vadd.f32 %v1632, 1.0
  %v1697 = vadd.f32 %v1633, 1.0
  %v1698 = vadd.f32 %v1634, 1.0
  %v1699 = vadd.f32 %v1635, 1.0
  %v1700 = vadd.f32 %v1636, 1.0
  %v1701 = vadd.f32 %v1637, 1.0
  %v1702 = vadd.f32 %v1638, 1.0
  %v1703 = vadd.f32 %v1639, 1.0
  %v1704 = vadd.f32 %v1640, 1.0
  %v1705 = vadd.f32 %v1641, 1.0
  %v1706 = vadd.f32 %v1642, 1.0
  %v1707 = vadd.f32 %v1643, 1.0
  %v1708 = vadd.f32 %v1644, 1.0
  %v1709 = vadd.f32 %v1645, 1.0
  %v1710 = vadd.f32 %v1646, 1.0
  %v1711 = vadd.f32 %v1647, 1.0
  %v1712 = vadd.f32 %v1648, 1.0
  %v1713 = vadd.f32 %v1649, 1.0
  %v1714 = vadd.f32 %v1650, 1.0
  %v1715 = vadd.f32 %v1651, 1.0
  %v1716 = vadd.f32 %v1652, 1.0
  %v1717 = vadd.f32 %v1653, 1.0
  %v1718 = vadd.f32 %v1654, 1.0
  %v1719 = vadd.f32 %v1655, 1.0
  %v1720 = vadd.f32 %v1656, 1.0
  %v1721 = vadd.f32 %v1657, 1.0
  %v1722 = vadd.f32 %v1658, 1.0
  %v1723 = vadd.f32 %v1659, 1.0
  %v1724 = vadd.f32 %v1660, 1.0
  %v1725 = vadd.f32 %v1661, 1.0
  %v1726 = vadd.f32 %v1662, 1.0
  %v1727 = vadd.f32 %v1663, 1.0
  %v1728 = vadd.f32 %v1664, 1.0
  %v1729 = vadd.f32 %v1665, 1.0
  %v1730 = vadd.f32 %v1666, 1.0
  %v1731 = vadd.f32 %v1667, 1.0
  %v1732 = vadd.f32 %v1668, 1.0
  %v1733 = vadd.f32 %v1669, 1.0
  %v1734 = vadd.f32 %v1670, 1.0
  %v1735 = vadd.f32 %v1671, 1.0
  %v1736 = vadd.f32 %v1672, 1.0
  %v1737 = vadd.f32 %v1673, 1.0
  %v1738 = vadd.f32 %v1674, 1.0
  %v1739 = vadd.f32 %v1675, 1.0
  %v1740 = vadd.f32 %v1676, 1.0
  %v1741 = vadd.f32 %v1677, 1.0
  %v1742 = vadd.f32 %v1678, 1.0
  %v1743 = vadd.f32 %v1679, 1.0
  %v1744 = vadd.f32 %v1680, 1.0
  %v1745 = vadd.f32 %v1681, 1.0
  %v1746 = vadd.f32 %v1682, 1.0
  %v1747 = vadd.f32 %v1683, 1.0
  %v1748 = vadd.f32 %v1684, 1.0
  %v1749 = vadd.f32 %v1685, 1.0
  %v1750 = vadd.f32 %v1686, 1.0
  %v1751 = vadd.f32 %v1687, 1.0
  %v1752 = vadd.f32 %v1688, 1.0
  %v1753 = vadd.f32 %v1689, 1.0
  %v1754 = vmul.f32 %v1498, %v1690
  %v1755 = vmul.f32 %v1499, %v1691
  %v1756 = vmul.f32 %v1500, %v1692
  %v1757 = vmul.f32 %v1501, %v1693
  %v1758 = vmul.f32 %v1502, %v1694
  %v1759 = vmul.f32 %v1503, %v1695
  %v1760 = vmul.f32 %v1504, %v1696
  %v1761 = vmul.f32 %v1505, %v1697
  %v1762 = vmul.f32 %v1506, %v1698
  %v1763 = vmul.f32 %v1507, %v1699
  %v1764 = vmul.f32 %v1508, %v1700
  %v1765 = vmul.f32 %v1509, %v1701
  %v1766 = vmul.f32 %v1510, %v1702
  %v1767 = vmul.f32 %v1511, %v1703
  %v1768 = vmul.f32 %v1512, %v1704
  %v1769 = vmul.f32 %v1513, %v1705
  %v1770 = vmul.f32 %v1514, %v1706
  %v1771 = vmul.f32 %v1515, %v1707
  %v1772 = vmul.f32 %v1516, %v1708
  %v1773 = vmul.f32 %v1517, %v1709
  %v1774 = vmul.f32 %v1518, %v1710
  %v1775 = vmul.f32 %v1519, %v1711
  %v1776 = vmul.f32 %v1520, %v1712
  %v1777 = vmul.f32 %v1521, %v1713
  %v1778 = vmul.f32 %v1522, %v1714
  %v1779 = vmul.f32 %v1523, %v1715
  %v1780 = vmul.f32 %v1524, %v1716
  %v1781 = vmul.f32 %v1525, %v1717
  %v1782 = vmul.f32 %v1526, %v1718
  %v1783 = vmul.f32 %v1527, %v1719
  %v1784 = vmul.f32 %v1528, %v1720
  %v1785 = vmul.f32 %v1529, %v1721
  %v1786 = vmul.f32 %v1530, %v1722
  %v1787 = vmul.f32 %v1531, %v1723
  %v1788 = vmul.f32 %v1532, %v1724
  %v1789 = vmul.f32 %v1533, %v1725
  %v1790 = vmul.f32 %v1534, %v1726
  %v1791 = vmul.f32 %v1535, %v1727
  %v1792 = vmul.f32 %v1536, %v1728
  %v1793 = vmul.f32 %v1537, %v1729
  %v1794 = vmul.f32 %v1538, %v1730
  %v1795 = vmul.f32 %v1539, %v1731
  %v1796 = vmul.f32 %v1540, %v1732
  %v1797 = vmul.f32 %v1541, %v1733
  %v1798 = vmul.f32 %v1542, %v1734
  %v1799 = vmul.f32 %v1543, %v1735
  %v1800 = vmul.f32 %v1544, %v1736
  %v1801 = vmul.f32 %v1545, %v1737
  %v1802 = vmul.f32 %v1546, %v1738
  %v1803 = vmul.f32 %v1547, %v1739
  %v1804 = vmul.f32 %v1548, %v1740
  %v1805 = vmul.f32 %v1549, %v1741
  %v1806 = vmul.f32 %v1550, %v1742
  %v1807 = vmul.f32 %v1551, %v1743
  %v1808 = vmul.f32 %v1552, %v1744
  %v1809 = vmul.f32 %v1553, %v1745
  %v1810 = vmul.f32 %v1554, %v1746
  %v1811 = vmul.f32 %v1555, %v1747
  %v1812 = vmul.f32 %v1556, %v1748
  %v1813 = vmul.f32 %v1557, %v1749
  %v1814 = vmul.f32 %v1558, %v1750
  %v1815 = vmul.f32 %v1559, %v1751
  %v1816 = vmul.f32 %v1560, %v1752
  %v1817 = vmul.f32 %v1561, %v1753
  %v1818 = vpack.c.bf16 %v1758, %v1754
  %v1819 = vpack.c.bf16 %v1759, %v1755
  %v1820 = vpack.c.bf16 %v1760, %v1756
  %v1821 = vpack.c.bf16 %v1761, %v1757
  %v1822 = vpack.c.bf16 %v1766, %v1762
  %v1823 = vpack.c.bf16 %v1767, %v1763
  %v1824 = vpack.c.bf16 %v1768, %v1764
  %v1825 = vpack.c.bf16 %v1769, %v1765
  %v1826 = vpack.c.bf16 %v1774, %v1770
  %v1827 = vpack.c.bf16 %v1775, %v1771
  %v1828 = vpack.c.bf16 %v1776, %v1772
  %v1829 = vpack.c.bf16 %v1777, %v1773
  %v1830 = vpack.c.bf16 %v1782, %v1778
  %v1831 = vpack.c.bf16 %v1783, %v1779
  %v1832 = vpack.c.bf16 %v1784, %v1780
  %v1833 = vpack.c.bf16 %v1785, %v1781
  %v1834 = vpack.c.bf16 %v1790, %v1786
  %v1835 = vpack.c.bf16 %v1791, %v1787
  %v1836 = vpack.c.bf16 %v1792, %v1788
  %v1837 = vpack.c.bf16 %v1793, %v1789
  %v1838 = vpack.c.bf16 %v1798, %v1794
  %v1839 = vpack.c.bf16 %v1799, %v1795
  %v1840 = vpack.c.bf16 %v1800, %v1796
  %v1841 = vpack.c.bf16 %v1801, %v1797
  %v1842 = vpack.c.bf16 %v1806, %v1802
  %v1843 = vpack.c.bf16 %v1807, %v1803
  %v1844 = vpack.c.bf16 %v1808, %v1804
  %v1845 = vpack.c.bf16 %v1809, %v1805
  %v1846 = vpack.c.bf16 %v1814, %v1810
  %v1847 = vpack.c.bf16 %v1815, %v1811
  %v1848 = vpack.c.bf16 %v1816, %v1812
  %v1849 = vpack.c.bf16 %v1817, %v1813
  %v1850 = vld [vmem:[%s7] sm:$0xf]
  %v1851 = vld [vmem:[%s7 + $0x4] sm:$0xf]
  %v1852 = vld [vmem:[%s7 + $0x8] sm:$0xf]
  %v1853 = vld [vmem:[%s7 + $0xc] sm:$0xf]
  %v1854 = vld [vmem:[%s7 + $0x10] sm:$0xf]
  %v1855 = vld [vmem:[%s7 + $0x14] sm:$0xf]
  %v1856 = vld [vmem:[%s7 + $0x18] sm:$0xf]
  %v1857 = vld [vmem:[%s7 + $0x1c] sm:$0xf]
  %v1858 = vld [vmem:[%s7 + $0x20] sm:$0xf]
  %v1859 = vld [vmem:[%s7 + $0x24] sm:$0xf]
  %v1860 = vld [vmem:[%s7 + $0x28] sm:$0xf]
  %v1861 = vld [vmem:[%s7 + $0x2c] sm:$0xf]
  %v1862 = vld [vmem:[%s7 + $0x30] sm:$0xf]
  %v1863 = vld [vmem:[%s7 + $0x34] sm:$0xf]
  %v1864 = vld [vmem:[%s7 + $0x38] sm:$0xf]
  %v1865 = vld [vmem:[%s7 + $0x3c] sm:$0xf]
  %v1866 = vld [vmem:[%s8] sm:$0xff]
  %v1867 = vld [vmem:[%s8 + $0x8] sm:$0xff]
  %v1868 = vld [vmem:[%s8 + $0x10] sm:$0xff]
  %v1869 = vld [vmem:[%s8 + $0x18] sm:$0xff]
  %v1870 = vld [vmem:[%s8 + $0x20] sm:$0xff]
  %v1871 = vld [vmem:[%s8 + $0x28] sm:$0xff]
  %v1872 = vld [vmem:[%s8 + $0x30] sm:$0xff]
  %v1873 = vld [vmem:[%s8 + $0x38] sm:$0xff]
  %v1874 = vld [vmem:[%s8 + $0x40] sm:$0xff]
  %v1875 = vld [vmem:[%s8 + $0x48] sm:$0xff]
  %v1876 = vld [vmem:[%s8 + $0x50] sm:$0xff]
  %v1877 = vld [vmem:[%s8 + $0x58] sm:$0xff]
  %v1878 = vld [vmem:[%s8 + $0x60] sm:$0xff]
  %v1879 = vld [vmem:[%s8 + $0x68] sm:$0xff]
  %v1880 = vld [vmem:[%s8 + $0x70] sm:$0xff]
  %v1881 = vld [vmem:[%s8 + $0x78] sm:$0xff]
  %1883 = vset.pattern.permute.xlu0 0
  %1884 = vperm.xlu0 %1883, %v1866
  %v1885 = vpop.permute.xlu0 %1884
  %1888 = vset.pattern.permute.xlu0 0
  %1889 = vperm.xlu0 %1888, %v1867
  %v1890 = vpop.permute.xlu0 %1889
  %1893 = vset.pattern.permute.xlu0 0
  %1894 = vperm.xlu0 %1893, %v1868
  %v1895 = vpop.permute.xlu0 %1894
  %1898 = vset.pattern.permute.xlu0 0
  %1899 = vperm.xlu0 %1898, %v1869
  %v1900 = vpop.permute.xlu0 %1899
  %1903 = vset.pattern.permute.xlu0 0
  %1904 = vperm.xlu0 %1903, %v1870
  %v1905 = vpop.permute.xlu0 %1904
  %1908 = vset.pattern.permute.xlu0 0
  %1909 = vperm.xlu0 %1908, %v1871
  %v1910 = vpop.permute.xlu0 %1909
  %1913 = vset.pattern.permute.xlu0 0
  %1914 = vperm.xlu0 %1913, %v1872
  %v1915 = vpop.permute.xlu0 %1914
  %1918 = vset.pattern.permute.xlu0 0
  %1919 = vperm.xlu0 %1918, %v1873
  %v1920 = vpop.permute.xlu0 %1919
  %1923 = vset.pattern.permute.xlu0 0
  %1924 = vperm.xlu0 %1923, %v1874
  %v1925 = vpop.permute.xlu0 %1924
  %1928 = vset.pattern.permute.xlu0 0
  %1929 = vperm.xlu0 %1928, %v1875
  %v1930 = vpop.permute.xlu0 %1929
  %1933 = vset.pattern.permute.xlu0 0
  %1934 = vperm.xlu0 %1933, %v1876
  %v1935 = vpop.permute.xlu0 %1934
  %1938 = vset.pattern.permute.xlu0 0
  %1939 = vperm.xlu0 %1938, %v1877
  %v1940 = vpop.permute.xlu0 %1939
  %1943 = vset.pattern.permute.xlu0 0
  %1944 = vperm.xlu0 %1943, %v1878
  %v1945 = vpop.permute.xlu0 %1944
  %1948 = vset.pattern.permute.xlu0 0
  %1949 = vperm.xlu0 %1948, %v1879
  %v1950 = vpop.permute.xlu0 %1949
  %1953 = vset.pattern.permute.xlu0 0
  %1954 = vperm.xlu0 %1953, %v1880
  %v1955 = vpop.permute.xlu0 %1954
  %1958 = vset.pattern.permute.xlu0 0
  %1959 = vperm.xlu0 %1958, %v1881
  %v1960 = vpop.permute.xlu0 %1959
  %v1978 = vunpack.c.l.b16 %v1850
  %v1979 = vunpack.c.l.b16 %v1851
  %v1980 = vunpack.c.l.b16 %v1852
  %v1981 = vunpack.c.l.b16 %v1853
  %v1982 = vunpack.c.l.b16 %v1854
  %v1983 = vunpack.c.l.b16 %v1855
  %v1984 = vunpack.c.l.b16 %v1856
  %v1985 = vunpack.c.l.b16 %v1857
  %v1986 = vunpack.c.l.b16 %v1858
  %v1987 = vunpack.c.l.b16 %v1859
  %v1988 = vunpack.c.l.b16 %v1860
  %v1989 = vunpack.c.l.b16 %v1861
  %v1990 = vunpack.c.l.b16 %v1862
  %v1991 = vunpack.c.l.b16 %v1863
  %v1992 = vunpack.c.l.b16 %v1864
  %v1993 = vunpack.c.l.b16 %v1865
  %v1994 = vpack.c.b16 %v1979, %v1978
  %v1995 = vpack.c.b16 %v1981, %v1980
  %v1996 = vpack.c.b16 %v1983, %v1982
  %v1997 = vpack.c.b16 %v1985, %v1984
  %v1998 = vpack.c.b16 %v1987, %v1986
  %v1999 = vpack.c.b16 %v1989, %v1988
  %v2000 = vpack.c.b16 %v1991, %v1990
  %v2001 = vpack.c.b16 %v1993, %v1992
  %2010 = vmatprep.subr.bf16.mxu0 %v1819
  %2011 = vmatpush1.bf16.msra.mxu0 %v1818
  %2012 = vmatprep.subr.bf16.mxu0 %v1823
  %2013 = vmatpush1.bf16.msra.mxu0 %v1822
  %2014 = vmatprep.subr.bf16.mxu0 %v1827
  %2015 = vmatpush1.bf16.msra.mxu0 %v1826
  %2016 = vmatprep.subr.bf16.mxu0 %v1831
  %2017 = vmatpush1.bf16.msra.mxu0 %v1830
  %2018 = vmatprep.subr.bf16.mxu0 %v1835
  %2019 = vmatpush1.bf16.msra.mxu0 %v1834
  %2020 = vmatprep.subr.bf16.mxu0 %v1839
  %2021 = vmatpush1.bf16.msra.mxu0 %v1838
  %2022 = vmatprep.subr.bf16.mxu0 %v1843
  %2023 = vmatpush1.bf16.msra.mxu0 %v1842
  %2024 = vmatprep.subr.bf16.mxu0 %v1847
  %2025 = vmatpush1.bf16.msra.mxu0 %v1846
  %2026 = vmatprep.subr.bf16.mxu0 0
  %2027 = vmatpush1.bf16.msra.mxu0 0
  %2028 = vmatprep.subr.bf16.mxu0 0
  %2029 = vmatpush1.bf16.msra.mxu0 0
  %2030 = vmatprep.subr.bf16.mxu0 0
  %2031 = vmatpush1.bf16.msra.mxu0 0
  %2032 = vmatprep.subr.bf16.mxu0 0
  %2033 = vmatpush1.bf16.msra.mxu0 0
  %2034 = vmatprep.subr.bf16.mxu0 0
  %2035 = vmatpush1.bf16.msra.mxu0 0
  %2036 = vmatprep.subr.bf16.mxu0 0
  %2037 = vmatpush1.bf16.msra.mxu0 0
  %2038 = vmatprep.subr.bf16.mxu0 0
  %2039 = vmatpush1.bf16.msra.mxu0 0
  %2040 = vmatprep.subr.bf16.mxu0 0
  %2041 = vmatpush1.bf16.msra.mxu0 0
  %2042 = vmatprep.mubr.bf16.mxu0 0
  %2043 = vmatmul.mubr.bf16.gmra.mrb[0].mxu0 %v1994
  %v2044 = vpop.f32.mrb[0].mxu0
  %v2045 = vadd.f32 %v1885, %v2044
  %v2046 = vpop.f32.mrb[0].mxu0
  %v2047 = vadd.f32 %v1885, %v2046
  %v2048 = vpop.f32.mrb[0].mxu0
  %v2049 = vadd.f32 %v1890, %v2048
  %v2050 = vpop.f32.mrb[0].mxu0
  %v2051 = vadd.f32 %v1890, %v2050
  %2052 = vmatprep.mubr.bf16.mxu0 0
  %2053 = vmatmul.mubr.bf16.gmra.mrb[0].mxu0 %v1995
  %v2054 = vpop.f32.mrb[0].mxu0
  %v2055 = vadd.f32 %v1895, %v2054
  %v2056 = vpop.f32.mrb[0].mxu0
  %v2057 = vadd.f32 %v1895, %v2056
  %v2058 = vpop.f32.mrb[0].mxu0
  %v2059 = vadd.f32 %v1900, %v2058
  %v2060 = vpop.f32.mrb[0].mxu0
  %v2061 = vadd.f32 %v1900, %v2060
  %2062 = vmatprep.mubr.bf16.mxu0 0
  %2063 = vmatmul.mubr.bf16.gmra.mrb[0].mxu0 %v1996
  %v2064 = vpop.f32.mrb[0].mxu0
  %v2065 = vadd.f32 %v1905, %v2064
  %v2066 = vpop.f32.mrb[0].mxu0
  %v2067 = vadd.f32 %v1905, %v2066
  %v2068 = vpop.f32.mrb[0].mxu0
  %v2069 = vadd.f32 %v1910, %v2068
  %v2070 = vpop.f32.mrb[0].mxu0
  %v2071 = vadd.f32 %v1910, %v2070
  %2072 = vmatprep.mubr.bf16.mxu0 0
  %2073 = vmatmul.mubr.bf16.gmra.mrb[0].mxu0 %v1997
  %v2074 = vpop.f32.mrb[0].mxu0
  %v2075 = vadd.f32 %v1915, %v2074
  %v2076 = vpop.f32.mrb[0].mxu0
  %v2077 = vadd.f32 %v1915, %v2076
  %v2078 = vpop.f32.mrb[0].mxu0
  %v2079 = vadd.f32 %v1920, %v2078
  %v2080 = vpop.f32.mrb[0].mxu0
  %v2081 = vadd.f32 %v1920, %v2080
  %2082 = vmatprep.mubr.bf16.mxu0 0
  %2083 = vmatmul.mubr.bf16.gmra.mrb[0].mxu0 %v1998
  %v2084 = vpop.f32.mrb[0].mxu0
  %v2085 = vadd.f32 %v1925, %v2084
  %v2086 = vpop.f32.mrb[0].mxu0
  %v2087 = vadd.f32 %v1925, %v2086
  %v2088 = vpop.f32.mrb[0].mxu0
  %v2089 = vadd.f32 %v1930, %v2088
  %v2090 = vpop.f32.mrb[0].mxu0
  %v2091 = vadd.f32 %v1930, %v2090
  %2092 = vmatprep.mubr.bf16.mxu0 0
  %2093 = vmatmul.mubr.bf16.gmra.mrb[0].mxu0 %v1999
  %v2094 = vpop.f32.mrb[0].mxu0
  %v2095 = vadd.f32 %v1935, %v2094
  %v2096 = vpop.f32.mrb[0].mxu0
  %v2097 = vadd.f32 %v1935, %v2096
  %v2098 = vpop.f32.mrb[0].mxu0
  %v2099 = vadd.f32 %v1940, %v2098
  %v2100 = vpop.f32.mrb[0].mxu0
  %v2101 = vadd.f32 %v1940, %v2100
  %2102 = vmatprep.mubr.bf16.mxu0 0
  %2103 = vmatmul.mubr.bf16.gmra.mrb[0].mxu0 %v2000
  %v2104 = vpop.f32.mrb[0].mxu0
  %v2105 = vadd.f32 %v1945, %v2104
  %v2106 = vpop.f32.mrb[0].mxu0
  %v2107 = vadd.f32 %v1945, %v2106
  %v2108 = vpop.f32.mrb[0].mxu0
  %v2109 = vadd.f32 %v1950, %v2108
  %v2110 = vpop.f32.mrb[0].mxu0
  %v2111 = vadd.f32 %v1950, %v2110
  %2112 = vmatprep.mubr.bf16.mxu0 0
  %2113 = vmatmul.mubr.bf16.gmra.mrb[0].mxu0 %v2001
  %v2114 = vpop.f32.mrb[0].mxu0
  %v2115 = vadd.f32 %v1955, %v2114
  %v2116 = vpop.f32.mrb[0].mxu0
  %v2117 = vadd.f32 %v1955, %v2116
  %v2118 = vpop.f32.mrb[0].mxu0
  %v2119 = vadd.f32 %v1960, %v2118
  %v2120 = vpop.f32.mrb[0].mxu0
  %v2121 = vadd.f32 %v1960, %v2120
  %2122 = vdwg.mxu0
  %2123 = vmatprep.subr.bf16.mxu0 %v1821
  %2124 = vmatpush1.bf16.msra.mxu0 %v1820
  %2125 = vmatprep.subr.bf16.mxu0 %v1825
  %2126 = vmatpush1.bf16.msra.mxu0 %v1824
  %2127 = vmatprep.subr.bf16.mxu0 %v1829
  %2128 = vmatpush1.bf16.msra.mxu0 %v1828
  %2129 = vmatprep.subr.bf16.mxu0 %v1833
  %2130 = vmatpush1.bf16.msra.mxu0 %v1832
  %2131 = vmatprep.subr.bf16.mxu0 %v1837
  %2132 = vmatpush1.bf16.msra.mxu0 %v1836
  %2133 = vmatprep.subr.bf16.mxu0 %v1841
  %2134 = vmatpush1.bf16.msra.mxu0 %v1840
  %2135 = vmatprep.subr.bf16.mxu0 %v1845
  %2136 = vmatpush1.bf16.msra.mxu0 %v1844
  %2137 = vmatprep.subr.bf16.mxu0 %v1849
  %2138 = vmatpush1.bf16.msra.mxu0 %v1848
  %2139 = vmatprep.subr.bf16.mxu0 0
  %2140 = vmatpush1.bf16.msra.mxu0 0
  %2141 = vmatprep.subr.bf16.mxu0 0
  %2142 = vmatpush1.bf16.msra.mxu0 0
  %2143 = vmatprep.subr.bf16.mxu0 0
  %2144 = vmatpush1.bf16.msra.mxu0 0
  %2145 = vmatprep.subr.bf16.mxu0 0
  %2146 = vmatpush1.bf16.msra.mxu0 0
  %2147 = vmatprep.subr.bf16.mxu0 0
  %2148 = vmatpush1.bf16.msra.mxu0 0
  %2149 = vmatprep.subr.bf16.mxu0 0
  %2150 = vmatpush1.bf16.msra.mxu0 0
  %2151 = vmatprep.subr.bf16.mxu0 0
  %2152 = vmatpush1.bf16.msra.mxu0 0
  %2153 = vmatprep.subr.bf16.mxu0 0
  %2154 = vmatpush1.bf16.msra.mxu0 0
  %2155 = vmatprep.mubr.bf16.mxu0 0
  %2156 = vmatmul.mubr.bf16.gmra.mrb[0].mxu0 %v1994
  %v2157 = vpop.f32.mrb[0].mxu0
  %v2158 = vadd.f32 %v1885, %v2157
  %v2159 = vpop.f32.mrb[0].mxu0
  %v2160 = vadd.f32 %v1885, %v2159
  %v2161 = vpop.f32.mrb[0].mxu0
  %v2162 = vadd.f32 %v1890, %v2161
  %v2163 = vpop.f32.mrb[0].mxu0
  %v2164 = vadd.f32 %v1890, %v2163
  %2165 = vmatprep.mubr.bf16.mxu0 0
  %2166 = vmatmul.mubr.bf16.gmra.mrb[0].mxu0 %v1995
  %v2167 = vpop.f32.mrb[0].mxu0
  %v2168 = vadd.f32 %v1895, %v2167
  %v2169 = vpop.f32.mrb[0].mxu0
  %v2170 = vadd.f32 %v1895, %v2169
  %v2171 = vpop.f32.mrb[0].mxu0
  %v2172 = vadd.f32 %v1900, %v2171
  %v2173 = vpop.f32.mrb[0].mxu0
  %v2174 = vadd.f32 %v1900, %v2173
  %2175 = vmatprep.mubr.bf16.mxu0 0
  %2176 = vmatmul.mubr.bf16.gmra.mrb[0].mxu0 %v1996
  %v2177 = vpop.f32.mrb[0].mxu0
  %v2178 = vadd.f32 %v1905, %v2177
  %v2179 = vpop.f32.mrb[0].mxu0
  %v2180 = vadd.f32 %v1905, %v2179
  %v2181 = vpop.f32.mrb[0].mxu0
  %v2182 = vadd.f32 %v1910, %v2181
  %v2183 = vpop.f32.mrb[0].mxu0
  %v2184 = vadd.f32 %v1910, %v2183
  %2185 = vmatprep.mubr.bf16.mxu0 0
  %2186 = vmatmul.mubr.bf16.gmra.mrb[0].mxu0 %v1997
  %v2187 = vpop.f32.mrb[0].mxu0
  %v2188 = vadd.f32 %v1915, %v2187
  %v2189 = vpop.f32.mrb[0].mxu0
  %v2190 = vadd.f32 %v1915, %v2189
  %v2191 = vpop.f32.mrb[0].mxu0
  %v2192 = vadd.f32 %v1920, %v2191
  %v2193 = vpop.f32.mrb[0].mxu0
  %v2194 = vadd.f32 %v1920, %v2193
  %2195 = vmatprep.mubr.bf16.mxu0 0
  %2196 = vmatmul.mubr.bf16.gmra.mrb[0].mxu0 %v1998
  %v2197 = vpop.f32.mrb[0].mxu0
  %v2198 = vadd.f32 %v1925, %v2197
  %v2199 = vpop.f32.mrb[0].mxu0
  %v2200 = vadd.f32 %v1925, %v2199
  %v2201 = vpop.f32.mrb[0].mxu0
  %v2202 = vadd.f32 %v1930, %v2201
  %v2203 = vpop.f32.mrb[0].mxu0
  %v2204 = vadd.f32 %v1930, %v2203
  %2205 = vmatprep.mubr.bf16.mxu0 0
  %2206 = vmatmul.mubr.bf16.gmra.mrb[0].mxu0 %v1999
  %v2207 = vpop.f32.mrb[0].mxu0
  %v2208 = vadd.f32 %v1935, %v2207
  %v2209 = vpop.f32.mrb[0].mxu0
  %v2210 = vadd.f32 %v1935, %v2209
  %v2211 = vpop.f32.mrb[0].mxu0
  %v2212 = vadd.f32 %v1940, %v2211
  %v2213 = vpop.f32.mrb[0].mxu0
  %v2214 = vadd.f32 %v1940, %v2213
  %2215 = vmatprep.mubr.bf16.mxu0 0
  %2216 = vmatmul.mubr.bf16.gmra.mrb[0].mxu0 %v2000
  %v2217 = vpop.f32.mrb[0].mxu0
  %v2218 = vadd.f32 %v1945, %v2217
  %v2219 = vpop.f32.mrb[0].mxu0
  %v2220 = vadd.f32 %v1945, %v2219
  %v2221 = vpop.f32.mrb[0].mxu0
  %v2222 = vadd.f32 %v1950, %v2221
  %v2223 = vpop.f32.mrb[0].mxu0
  %v2224 = vadd.f32 %v1950, %v2223
  %2225 = vmatprep.mubr.bf16.mxu0 0
  %2226 = vmatmul.mubr.bf16.gmra.mrb[0].mxu0 %v2001
  %v2227 = vpop.f32.mrb[0].mxu0
  %v2228 = vadd.f32 %v1955, %v2227
  %v2229 = vpop.f32.mrb[0].mxu0
  %v2230 = vadd.f32 %v1955, %v2229
  %v2231 = vpop.f32.mrb[0].mxu0
  %v2232 = vadd.f32 %v1960, %v2231
  %v2233 = vpop.f32.mrb[0].mxu0
  %v2234 = vadd.f32 %v1960, %v2233
  %2235 = vdwg.mxu0
  %v2236 = vmul.f32 %v2045, 0.5
  %v2237 = vmul.f32 %v2047, 0.5
  %v2238 = vmul.f32 %v2158, 0.5
  %v2239 = vmul.f32 %v2160, 0.5
  %v2240 = vmul.f32 %v2049, 0.5
  %v2241 = vmul.f32 %v2051, 0.5
  %v2242 = vmul.f32 %v2162, 0.5
  %v2243 = vmul.f32 %v2164, 0.5
  %v2244 = vmul.f32 %v2055, 0.5
  %v2245 = vmul.f32 %v2057, 0.5
  %v2246 = vmul.f32 %v2168, 0.5
  %v2247 = vmul.f32 %v2170, 0.5
  %v2248 = vmul.f32 %v2059, 0.5
  %v2249 = vmul.f32 %v2061, 0.5
  %v2250 = vmul.f32 %v2172, 0.5
  %v2251 = vmul.f32 %v2174, 0.5
  %v2252 = vmul.f32 %v2065, 0.5
  %v2253 = vmul.f32 %v2067, 0.5
  %v2254 = vmul.f32 %v2178, 0.5
  %v2255 = vmul.f32 %v2180, 0.5
  %v2256 = vmul.f32 %v2069, 0.5
  %v2257 = vmul.f32 %v2071, 0.5
  %v2258 = vmul.f32 %v2182, 0.5
  %v2259 = vmul.f32 %v2184, 0.5
  %v2260 = vmul.f32 %v2075, 0.5
  %v2261 = vmul.f32 %v2077, 0.5
  %v2262 = vmul.f32 %v2188, 0.5
  %v2263 = vmul.f32 %v2190, 0.5
  %v2264 = vmul.f32 %v2079, 0.5
  %v2265 = vmul.f32 %v2081, 0.5
  %v2266 = vmul.f32 %v2192, 0.5
  %v2267 = vmul.f32 %v2194, 0.5
  %v2268 = vmul.f32 %v2085, 0.5
  %v2269 = vmul.f32 %v2087, 0.5
  %v2270 = vmul.f32 %v2198, 0.5
  %v2271 = vmul.f32 %v2200, 0.5
  %v2272 = vmul.f32 %v2089, 0.5
  %v2273 = vmul.f32 %v2091, 0.5
  %v2274 = vmul.f32 %v2202, 0.5
  %v2275 = vmul.f32 %v2204, 0.5
  %v2276 = vmul.f32 %v2095, 0.5
  %v2277 = vmul.f32 %v2097, 0.5
  %v2278 = vmul.f32 %v2208, 0.5
  %v2279 = vmul.f32 %v2210, 0.5
  %v2280 = vmul.f32 %v2099, 0.5
  %v2281 = vmul.f32 %v2101, 0.5
  %v2282 = vmul.f32 %v2212, 0.5
  %v2283 = vmul.f32 %v2214, 0.5
  %v2284 = vmul.f32 %v2105, 0.5
  %v2285 = vmul.f32 %v2107, 0.5
  %v2286 = vmul.f32 %v2218, 0.5
  %v2287 = vmul.f32 %v2220, 0.5
  %v2288 = vmul.f32 %v2109, 0.5
  %v2289 = vmul.f32 %v2111, 0.5
  %v2290 = vmul.f32 %v2222, 0.5
  %v2291 = vmul.f32 %v2224, 0.5
  %v2292 = vmul.f32 %v2115, 0.5
  %v2293 = vmul.f32 %v2117, 0.5
  %v2294 = vmul.f32 %v2228, 0.5
  %v2295 = vmul.f32 %v2230, 0.5
  %v2296 = vmul.f32 %v2119, 0.5
  %v2297 = vmul.f32 %v2121, 0.5
  %v2298 = vmul.f32 %v2232, 0.5
  %v2299 = vmul.f32 %v2234, 0.5
  %v2300 = vmul.f32 %v2045, 0.70710677
  %v2301 = vmul.f32 %v2047, 0.70710677
  %v2302 = vmul.f32 %v2158, 0.70710677
  %v2303 = vmul.f32 %v2160, 0.70710677
  %v2304 = vmul.f32 %v2049, 0.70710677
  %v2305 = vmul.f32 %v2051, 0.70710677
  %v2306 = vmul.f32 %v2162, 0.70710677
  %v2307 = vmul.f32 %v2164, 0.70710677
  %v2308 = vmul.f32 %v2055, 0.70710677
  %v2309 = vmul.f32 %v2057, 0.70710677
  %v2310 = vmul.f32 %v2168, 0.70710677
  %v2311 = vmul.f32 %v2170, 0.70710677
  %v2312 = vmul.f32 %v2059, 0.70710677
  %v2313 = vmul.f32 %v2061, 0.70710677
  %v2314 = vmul.f32 %v2172, 0.70710677
  %v2315 = vmul.f32 %v2174, 0.70710677
  %v2316 = vmul.f32 %v2065, 0.70710677
  %v2317 = vmul.f32 %v2067, 0.70710677
  %v2318 = vmul.f32 %v2178, 0.70710677
  %v2319 = vmul.f32 %v2180, 0.70710677
  %v2320 = vmul.f32 %v2069, 0.70710677
  %v2321 = vmul.f32 %v2071, 0.70710677
  %v2322 = vmul.f32 %v2182, 0.70710677
  %v2323 = vmul.f32 %v2184, 0.70710677
  %v2324 = vmul.f32 %v2075, 0.70710677
  %v2325 = vmul.f32 %v2077, 0.70710677
  %v2326 = vmul.f32 %v2188, 0.70710677
  %v2327 = vmul.f32 %v2190, 0.70710677
  %v2328 = vmul.f32 %v2079, 0.70710677
  %v2329 = vmul.f32 %v2081, 0.70710677
  %v2330 = vmul.f32 %v2192, 0.70710677
  %v2331 = vmul.f32 %v2194, 0.70710677
  %v2332 = vmul.f32 %v2085, 0.70710677
  %v2333 = vmul.f32 %v2087, 0.70710677
  %v2334 = vmul.f32 %v2198, 0.70710677
  %v2335 = vmul.f32 %v2200, 0.70710677
  %v2336 = vmul.f32 %v2089, 0.70710677
  %v2337 = vmul.f32 %v2091, 0.70710677
  %v2338 = vmul.f32 %v2202, 0.70710677
  %v2339 = vmul.f32 %v2204, 0.70710677
  %v2340 = vmul.f32 %v2095, 0.70710677
  %v2341 = vmul.f32 %v2097, 0.70710677
  %v2342 = vmul.f32 %v2208, 0.70710677
  %v2343 = vmul.f32 %v2210, 0.70710677
  %v2344 = vmul.f32 %v2099, 0.70710677
  %v2345 = vmul.f32 %v2101, 0.70710677
  %v2346 = vmul.f32 %v2212, 0.70710677
  %v2347 = vmul.f32 %v2214, 0.70710677
  %v2348 = vmul.f32 %v2105, 0.70710677
  %v2349 = vmul.f32 %v2107, 0.70710677
  %v2350 = vmul.f32 %v2218, 0.70710677
  %v2351 = vmul.f32 %v2220, 0.70710677
  %v2352 = vmul.f32 %v2109, 0.70710677
  %v2353 = vmul.f32 %v2111, 0.70710677
  %v2354 = vmul.f32 %v2222, 0.70710677
  %v2355 = vmul.f32 %v2224, 0.70710677
  %v2356 = vmul.f32 %v2115, 0.70710677
  %v2357 = vmul.f32 %v2117, 0.70710677
  %v2358 = vmul.f32 %v2228, 0.70710677
  %v2359 = vmul.f32 %v2230, 0.70710677
  %v2360 = vmul.f32 %v2119, 0.70710677
  %v2361 = vmul.f32 %v2121, 0.70710677
  %v2362 = vmul.f32 %v2232, 0.70710677
  %v2363 = vmul.f32 %v2234, 0.70710677
  %v2364 = verf.f32.pop %v2300
  %v2365 = verf.f32.pop %v2301
  %v2366 = verf.f32.pop %v2302
  %v2367 = verf.f32.pop %v2303
  %v2368 = verf.f32.pop %v2304
  %v2369 = verf.f32.pop %v2305
  %v2370 = verf.f32.pop %v2306
  %v2371 = verf.f32.pop %v2307
  %v2372 = verf.f32.pop %v2308
  %v2373 = verf.f32.pop %v2309
  %v2374 = verf.f32.pop %v2310
  %v2375 = verf.f32.pop %v2311
  %v2376 = verf.f32.pop %v2312
  %v2377 = verf.f32.pop %v2313
  %v2378 = verf.f32.pop %v2314
  %v2379 = verf.f32.pop %v2315
  %v2380 = verf.f32.pop %v2316
  %v2381 = verf.f32.pop %v2317
  %v2382 = verf.f32.pop %v2318
  %v2383 = verf.f32.pop %v2319
  %v2384 = verf.f32.pop %v2320
  %v2385 = verf.f32.pop %v2321
  %v2386 = verf.f32.pop %v2322
  %v2387 = verf.f32.pop %v2323
  %v2388 = verf.f32.pop %v2324
  %v2389 = verf.f32.pop %v2325
  %v2390 = verf.f32.pop %v2326
  %v2391 = verf.f32.pop %v2327
  %v2392 = verf.f32.pop %v2328
  %v2393 = verf.f32.pop %v2329
  %v2394 = verf.f32.pop %v2330
  %v2395 = verf.f32.pop %v2331
  %v2396 = verf.f32.pop %v2332
  %v2397 = verf.f32.pop %v2333
  %v2398 = verf.f32.pop %v2334
  %v2399 = verf.f32.pop %v2335
  %v2400 = verf.f32.pop %v2336
  %v2401 = verf.f32.pop %v2337
  %v2402 = verf.f32.pop %v2338
  %v2403 = verf.f32.pop %v2339
  %v2404 = verf.f32.pop %v2340
  %v2405 = verf.f32.pop %v2341
  %v2406 = verf.f32.pop %v2342
  %v2407 = verf.f32.pop %v2343
  %v2408 = verf.f32.pop %v2344
  %v2409 = verf.f32.pop %v2345
  %v2410 = verf.f32.pop %v2346
  %v2411 = verf.f32.pop %v2347
  %v2412 = verf.f32.pop %v2348
  %v2413 = verf.f32.pop %v2349
  %v2414 = verf.f32.pop %v2350
  %v2415 = verf.f32.pop %v2351
  %v2416 = verf.f32.pop %v2352
  %v2417 = verf.f32.pop %v2353
  %v2418 = verf.f32.pop %v2354
  %v2419 = verf.f32.pop %v2355
  %v2420 = verf.f32.pop %v2356
  %v2421 = verf.f32.pop %v2357
  %v2422 = verf.f32.pop %v2358
  %v2423 = verf.f32.pop %v2359
  %v2424 = verf.f32.pop %v2360
  %v2425 = verf.f32.pop %v2361
  %v2426 = verf.f32.pop %v2362
  %v2427 = verf.f32.pop %v2363
  %v2428 = vadd.f32 %v2364, 1.0
  %v2429 = vadd.f32 %v2365, 1.0
  %v2430 = vadd.f32 %v2366, 1.0
  %v2431 = vadd.f32 %v2367, 1.0
  %v2432 = vadd.f32 %v2368, 1.0
  %v2433 = vadd.f32 %v2369, 1.0
  %v2434 = vadd.f32 %v2370, 1.0
  %v2435 = vadd.f32 %v2371, 1.0
  %v2436 = vadd.f32 %v2372, 1.0
  %v2437 = vadd.f32 %v2373, 1.0
  %v2438 = vadd.f32 %v2374, 1.0
  %v2439 = vadd.f32 %v2375, 1.0
  %v2440 = vadd.f32 %v2376, 1.0
  %v2441 = vadd.f32 %v2377, 1.0
  %v2442 = vadd.f32 %v2378, 1.0
  %v2443 = vadd.f32 %v2379, 1.0
  %v2444 = vadd.f32 %v2380, 1.0
  %v2445 = vadd.f32 %v2381, 1.0
  %v2446 = vadd.f32 %v2382, 1.0
  %v2447 = vadd.f32 %v2383, 1.0
  %v2448 = vadd.f32 %v2384, 1.0
  %v2449 = vadd.f32 %v2385, 1.0
  %v2450 = vadd.f32 %v2386, 1.0
  %v2451 = vadd.f32 %v2387, 1.0
  %v2452 = vadd.f32 %v2388, 1.0
  %v2453 = vadd.f32 %v2389, 1.0
  %v2454 = vadd.f32 %v2390, 1.0
  %v2455 = vadd.f32 %v2391, 1.0
  %v2456 = vadd.f32 %v2392, 1.0
  %v2457 = vadd.f32 %v2393, 1.0
  %v2458 = vadd.f32 %v2394, 1.0
  %v2459 = vadd.f32 %v2395, 1.0
  %v2460 = vadd.f32 %v2396, 1.0
  %v2461 = vadd.f32 %v2397, 1.0
  %v2462 = vadd.f32 %v2398, 1.0
  %v2463 = vadd.f32 %v2399, 1.0
  %v2464 = vadd.f32 %v2400, 1.0
  %v2465 = vadd.f32 %v2401, 1.0
  %v2466 = vadd.f32 %v2402, 1.0
  %v2467 = vadd.f32 %v2403, 1.0
  %v2468 = vadd.f32 %v2404, 1.0
  %v2469 = vadd.f32 %v2405, 1.0
  %v2470 = vadd.f32 %v2406, 1.0
  %v2471 = vadd.f32 %v2407, 1.0
  %v2472 = vadd.f32 %v2408, 1.0
  %v2473 = vadd.f32 %v2409, 1.0
  %v2474 = vadd.f32 %v2410, 1.0
  %v2475 = vadd.f32 %v2411, 1.0
  %v2476 = vadd.f32 %v2412, 1.0
  %v2477 = vadd.f32 %v2413, 1.0
  %v2478 = vadd.f32 %v2414, 1.0
  %v2479 = vadd.f32 %v2415, 1.0
  %v2480 = vadd.f32 %v2416, 1.0
  %v2481 = vadd.f32 %v2417, 1.0
  %v2482 = vadd.f32 %v2418, 1.0
  %v2483 = vadd.f32 %v2419, 1.0
  %v2484 = vadd.f32 %v2420, 1.0
  %v2485 = vadd.f32 %v2421, 1.0
  %v2486 = vadd.f32 %v2422, 1.0
  %v2487 = vadd.f32 %v2423, 1.0
  %v2488 = vadd.f32 %v2424, 1.0
  %v2489 = vadd.f32 %v2425, 1.0
  %v2490 = vadd.f32 %v2426, 1.0
  %v2491 = vadd.f32 %v2427, 1.0
  %v2492 = vmul.f32 %v2236, %v2428
  %v2493 = vmul.f32 %v2237, %v2429
  %v2494 = vmul.f32 %v2238, %v2430
  %v2495 = vmul.f32 %v2239, %v2431
  %v2496 = vmul.f32 %v2240, %v2432
  %v2497 = vmul.f32 %v2241, %v2433
  %v2498 = vmul.f32 %v2242, %v2434
  %v2499 = vmul.f32 %v2243, %v2435
  %v2500 = vmul.f32 %v2244, %v2436
  %v2501 = vmul.f32 %v2245, %v2437
  %v2502 = vmul.f32 %v2246, %v2438
  %v2503 = vmul.f32 %v2247, %v2439
  %v2504 = vmul.f32 %v2248, %v2440
  %v2505 = vmul.f32 %v2249, %v2441
  %v2506 = vmul.f32 %v2250, %v2442
  %v2507 = vmul.f32 %v2251, %v2443
  %v2508 = vmul.f32 %v2252, %v2444
  %v2509 = vmul.f32 %v2253, %v2445
  %v2510 = vmul.f32 %v2254, %v2446
  %v2511 = vmul.f32 %v2255, %v2447
  %v2512 = vmul.f32 %v2256, %v2448
  %v2513 = vmul.f32 %v2257, %v2449
  %v2514 = vmul.f32 %v2258, %v2450
  %v2515 = vmul.f32 %v2259, %v2451
  %v2516 = vmul.f32 %v2260, %v2452
  %v2517 = vmul.f32 %v2261, %v2453
  %v2518 = vmul.f32 %v2262, %v2454
  %v2519 = vmul.f32 %v2263, %v2455
  %v2520 = vmul.f32 %v2264, %v2456
  %v2521 = vmul.f32 %v2265, %v2457
  %v2522 = vmul.f32 %v2266, %v2458
  %v2523 = vmul.f32 %v2267, %v2459
  %v2524 = vmul.f32 %v2268, %v2460
  %v2525 = vmul.f32 %v2269, %v2461
  %v2526 = vmul.f32 %v2270, %v2462
  %v2527 = vmul.f32 %v2271, %v2463
  %v2528 = vmul.f32 %v2272, %v2464
  %v2529 = vmul.f32 %v2273, %v2465
  %v2530 = vmul.f32 %v2274, %v2466
  %v2531 = vmul.f32 %v2275, %v2467
  %v2532 = vmul.f32 %v2276, %v2468
  %v2533 = vmul.f32 %v2277, %v2469
  %v2534 = vmul.f32 %v2278, %v2470
  %v2535 = vmul.f32 %v2279, %v2471
  %v2536 = vmul.f32 %v2280, %v2472
  %v2537 = vmul.f32 %v2281, %v2473
  %v2538 = vmul.f32 %v2282, %v2474
  %v2539 = vmul.f32 %v2283, %v2475
  %v2540 = vmul.f32 %v2284, %v2476
  %v2541 = vmul.f32 %v2285, %v2477
  %v2542 = vmul.f32 %v2286, %v2478
  %v2543 = vmul.f32 %v2287, %v2479
  %v2544 = vmul.f32 %v2288, %v2480
  %v2545 = vmul.f32 %v2289, %v2481
  %v2546 = vmul.f32 %v2290, %v2482
  %v2547 = vmul.f32 %v2291, %v2483
  %v2548 = vmul.f32 %v2292, %v2484
  %v2549 = vmul.f32 %v2293, %v2485
  %v2550 = vmul.f32 %v2294, %v2486
  %v2551 = vmul.f32 %v2295, %v2487
  %v2552 = vmul.f32 %v2296, %v2488
  %v2553 = vmul.f32 %v2297, %v2489
  %v2554 = vmul.f32 %v2298, %v2490
  %v2555 = vmul.f32 %v2299, %v2491
  %v2556 = vpack.c.bf16 %v2496, %v2492
  %v2557 = vpack.c.bf16 %v2497, %v2493
  %v2558 = vpack.c.bf16 %v2498, %v2494
  %v2559 = vpack.c.bf16 %v2499, %v2495
  %v2560 = vpack.c.bf16 %v2504, %v2500
  %v2561 = vpack.c.bf16 %v2505, %v2501
  %v2562 = vpack.c.bf16 %v2506, %v2502
  %v2563 = vpack.c.bf16 %v2507, %v2503
  %v2564 = vpack.c.bf16 %v2512, %v2508
  %v2565 = vpack.c.bf16 %v2513, %v2509
  %v2566 = vpack.c.bf16 %v2514, %v2510
  %v2567 = vpack.c.bf16 %v2515, %v2511
  %v2568 = vpack.c.bf16 %v2520, %v2516
  %v2569 = vpack.c.bf16 %v2521, %v2517
  %v2570 = vpack.c.bf16 %v2522, %v2518
  %v2571 = vpack.c.bf16 %v2523, %v2519
  %v2572 = vpack.c.bf16 %v2528, %v2524
  %v2573 = vpack.c.bf16 %v2529, %v2525
  %v2574 = vpack.c.bf16 %v2530, %v2526
  %v2575 = vpack.c.bf16 %v2531, %v2527
  %v2576 = vpack.c.bf16 %v2536, %v2532
  %v2577 = vpack.c.bf16 %v2537, %v2533
  %v2578 = vpack.c.bf16 %v2538, %v2534
  %v2579 = vpack.c.bf16 %v2539, %v2535
  %v2580 = vpack.c.bf16 %v2544, %v2540
  %v2581 = vpack.c.bf16 %v2545, %v2541
  %v2582 = vpack.c.bf16 %v2546, %v2542
  %v2583 = vpack.c.bf16 %v2547, %v2543
  %v2584 = vpack.c.bf16 %v2552, %v2548
  %v2585 = vpack.c.bf16 %v2553, %v2549
  %v2586 = vpack.c.bf16 %v2554, %v2550
  %v2587 = vpack.c.bf16 %v2555, %v2551
  %v2588 = vld [vmem:[%s9] sm:$0xf]
  %v2589 = vld [vmem:[%s9 + $0x4] sm:$0xf]
  %v2590 = vld [vmem:[%s9 + $0x8] sm:$0xf]
  %v2591 = vld [vmem:[%s9 + $0xc] sm:$0xf]
  %v2592 = vld [vmem:[%s9 + $0x10] sm:$0xf]
  %v2593 = vld [vmem:[%s9 + $0x14] sm:$0xf]
  %v2594 = vld [vmem:[%s9 + $0x18] sm:$0xf]
  %v2595 = vld [vmem:[%s9 + $0x1c] sm:$0xf]
  %v2596 = vld [vmem:[%s9 + $0x20] sm:$0xf]
  %v2597 = vld [vmem:[%s9 + $0x24] sm:$0xf]
  %v2598 = vld [vmem:[%s9 + $0x28] sm:$0xf]
  %v2599 = vld [vmem:[%s9 + $0x2c] sm:$0xf]
  %v2600 = vld [vmem:[%s9 + $0x30] sm:$0xf]
  %v2601 = vld [vmem:[%s9 + $0x34] sm:$0xf]
  %v2602 = vld [vmem:[%s9 + $0x38] sm:$0xf]
  %v2603 = vld [vmem:[%s9 + $0x3c] sm:$0xf]
  %v2604 = vld [vmem:[%s9 + $0x40] sm:$0xf]
  %v2605 = vld [vmem:[%s9 + $0x44] sm:$0xf]
  %v2606 = vld [vmem:[%s9 + $0x48] sm:$0xf]
  %v2607 = vld [vmem:[%s9 + $0x4c] sm:$0xf]
  %v2608 = vld [vmem:[%s9 + $0x50] sm:$0xf]
  %v2609 = vld [vmem:[%s9 + $0x54] sm:$0xf]
  %v2610 = vld [vmem:[%s9 + $0x58] sm:$0xf]
  %v2611 = vld [vmem:[%s9 + $0x5c] sm:$0xf]
  %v2612 = vld [vmem:[%s9 + $0x60] sm:$0xf]
  %v2613 = vld [vmem:[%s9 + $0x64] sm:$0xf]
  %v2614 = vld [vmem:[%s9 + $0x68] sm:$0xf]
  %v2615 = vld [vmem:[%s9 + $0x6c] sm:$0xf]
  %v2616 = vld [vmem:[%s9 + $0x70] sm:$0xf]
  %v2617 = vld [vmem:[%s9 + $0x74] sm:$0xf]
  %v2618 = vld [vmem:[%s9 + $0x78] sm:$0xf]
  %v2619 = vld [vmem:[%s9 + $0x7c] sm:$0xf]
  %v2620 = vld [vmem:[%s10] sm:$0xff]
  %v2621 = vld [vmem:[%s10 + $0x8] sm:$0xff]
  %v2622 = vld [vmem:[%s10 + $0x10] sm:$0xff]
  %v2623 = vld [vmem:[%s10 + $0x18] sm:$0xff]
  %v2624 = vld [vmem:[%s10 + $0x20] sm:$0xff]
  %v2625 = vld [vmem:[%s10 + $0x28] sm:$0xff]
  %v2626 = vld [vmem:[%s10 + $0x30] sm:$0xff]
  %v2627 = vld [vmem:[%s10 + $0x38] sm:$0xff]
  %v2628 = vld [vmem:[%s10 + $0x40] sm:$0xff]
  %v2629 = vld [vmem:[%s10 + $0x48] sm:$0xff]
  %v2630 = vld [vmem:[%s10 + $0x50] sm:$0xff]
  %v2631 = vld [vmem:[%s10 + $0x58] sm:$0xff]
  %v2632 = vld [vmem:[%s10 + $0x60] sm:$0xff]
  %v2633 = vld [vmem:[%s10 + $0x68] sm:$0xff]
  %v2634 = vld [vmem:[%s10 + $0x70] sm:$0xff]
  %v2635 = vld [vmem:[%s10 + $0x78] sm:$0xff]
  %v2636 = vld [vmem:[%s10 + $0x80] sm:$0xff]
  %v2637 = vld [vmem:[%s10 + $0x88] sm:$0xff]
  %v2638 = vld [vmem:[%s10 + $0x90] sm:$0xff]
  %v2639 = vld [vmem:[%s10 + $0x98] sm:$0xff]
  %v2640 = vld [vmem:[%s10 + $0xa0] sm:$0xff]
  %v2641 = vld [vmem:[%s10 + $0xa8] sm:$0xff]
  %v2642 = vld [vmem:[%s10 + $0xb0] sm:$0xff]
  %v2643 = vld [vmem:[%s10 + $0xb8] sm:$0xff]
  %v2644 = vld [vmem:[%s10 + $0xc0] sm:$0xff]
  %v2645 = vld [vmem:[%s10 + $0xc8] sm:$0xff]
  %v2646 = vld [vmem:[%s10 + $0xd0] sm:$0xff]
  %v2647 = vld [vmem:[%s10 + $0xd8] sm:$0xff]
  %v2648 = vld [vmem:[%s10 + $0xe0] sm:$0xff]
  %v2649 = vld [vmem:[%s10 + $0xe8] sm:$0xff]
  %v2650 = vld [vmem:[%s10 + $0xf0] sm:$0xff]
  %v2651 = vld [vmem:[%s10 + $0xf8] sm:$0xff]
  %2653 = vset.pattern.permute.xlu0 0
  %2654 = vperm.xlu0 %2653, %v2620
  %v2655 = vpop.permute.xlu0 %2654
  %2658 = vset.pattern.permute.xlu0 0
  %2659 = vperm.xlu0 %2658, %v2621
  %v2660 = vpop.permute.xlu0 %2659
  %2663 = vset.pattern.permute.xlu0 0
  %2664 = vperm.xlu0 %2663, %v2622
  %v2665 = vpop.permute.xlu0 %2664
  %2668 = vset.pattern.permute.xlu0 0
  %2669 = vperm.xlu0 %2668, %v2623
  %v2670 = vpop.permute.xlu0 %2669
  %2673 = vset.pattern.permute.xlu0 0
  %2674 = vperm.xlu0 %2673, %v2624
  %v2675 = vpop.permute.xlu0 %2674
  %2678 = vset.pattern.permute.xlu0 0
  %2679 = vperm.xlu0 %2678, %v2625
  %v2680 = vpop.permute.xlu0 %2679
  %2683 = vset.pattern.permute.xlu0 0
  %2684 = vperm.xlu0 %2683, %v2626
  %v2685 = vpop.permute.xlu0 %2684
  %2688 = vset.pattern.permute.xlu0 0
  %2689 = vperm.xlu0 %2688, %v2627
  %v2690 = vpop.permute.xlu0 %2689
  %2693 = vset.pattern.permute.xlu0 0
  %2694 = vperm.xlu0 %2693, %v2628
  %v2695 = vpop.permute.xlu0 %2694
  %2698 = vset.pattern.permute.xlu0 0
  %2699 = vperm.xlu0 %2698, %v2629
  %v2700 = vpop.permute.xlu0 %2699
  %2703 = vset.pattern.permute.xlu0 0
  %2704 = vperm.xlu0 %2703, %v2630
  %v2705 = vpop.permute.xlu0 %2704
  %2708 = vset.pattern.permute.xlu0 0
  %2709 = vperm.xlu0 %2708, %v2631
  %v2710 = vpop.permute.xlu0 %2709
  %2713 = vset.pattern.permute.xlu0 0
  %2714 = vperm.xlu0 %2713, %v2632
  %v2715 = vpop.permute.xlu0 %2714
  %2718 = vset.pattern.permute.xlu0 0
  %2719 = vperm.xlu0 %2718, %v2633
  %v2720 = vpop.permute.xlu0 %2719
  %2723 = vset.pattern.permute.xlu0 0
  %2724 = vperm.xlu0 %2723, %v2634
  %v2725 = vpop.permute.xlu0 %2724
  %2728 = vset.pattern.permute.xlu0 0
  %2729 = vperm.xlu0 %2728, %v2635
  %v2730 = vpop.permute.xlu0 %2729
  %2733 = vset.pattern.permute.xlu0 0
  %2734 = vperm.xlu0 %2733, %v2636
  %v2735 = vpop.permute.xlu0 %2734
  %2738 = vset.pattern.permute.xlu0 0
  %2739 = vperm.xlu0 %2738, %v2637
  %v2740 = vpop.permute.xlu0 %2739
  %2743 = vset.pattern.permute.xlu0 0
  %2744 = vperm.xlu0 %2743, %v2638
  %v2745 = vpop.permute.xlu0 %2744
  %2748 = vset.pattern.permute.xlu0 0
  %2749 = vperm.xlu0 %2748, %v2639
  %v2750 = vpop.permute.xlu0 %2749
  %2753 = vset.pattern.permute.xlu0 0
  %2754 = vperm.xlu0 %2753, %v2640
  %v2755 = vpop.permute.xlu0 %2754
  %2758 = vset.pattern.permute.xlu0 0
  %2759 = vperm.xlu0 %2758, %v2641
  %v2760 = vpop.permute.xlu0 %2759
  %2763 = vset.pattern.permute.xlu0 0
  %2764 = vperm.xlu0 %2763, %v2642
  %v2765 = vpop.permute.xlu0 %2764
  %2768 = vset.pattern.permute.xlu0 0
  %2769 = vperm.xlu0 %2768, %v2643
  %v2770 = vpop.permute.xlu0 %2769
  %2773 = vset.pattern.permute.xlu0 0
  %2774 = vperm.xlu0 %2773, %v2644
  %v2775 = vpop.permute.xlu0 %2774
  %2778 = vset.pattern.permute.xlu0 0
  %2779 = vperm.xlu0 %2778, %v2645
  %v2780 = vpop.permute.xlu0 %2779
  %2783 = vset.pattern.permute.xlu0 0
  %2784 = vperm.xlu0 %2783, %v2646
  %v2785 = vpop.permute.xlu0 %2784
  %2788 = vset.pattern.permute.xlu0 0
  %2789 = vperm.xlu0 %2788, %v2647
  %v2790 = vpop.permute.xlu0 %2789
  %2793 = vset.pattern.permute.xlu0 0
  %2794 = vperm.xlu0 %2793, %v2648
  %v2795 = vpop.permute.xlu0 %2794
  %2798 = vset.pattern.permute.xlu0 0
  %2799 = vperm.xlu0 %2798, %v2649
  %v2800 = vpop.permute.xlu0 %2799
  %2803 = vset.pattern.permute.xlu0 0
  %2804 = vperm.xlu0 %2803, %v2650
  %v2805 = vpop.permute.xlu0 %2804
  %2808 = vset.pattern.permute.xlu0 0
  %2809 = vperm.xlu0 %2808, %v2651
  %v2810 = vpop.permute.xlu0 %2809
  %v2844 = vunpack.c.l.b16 %v2588
  %v2845 = vunpack.c.l.b16 %v2589
  %v2846 = vunpack.c.l.b16 %v2590
  %v2847 = vunpack.c.l.b16 %v2591
  %v2848 = vunpack.c.l.b16 %v2592
  %v2849 = vunpack.c.l.b16 %v2593
  %v2850 = vunpack.c.l.b16 %v2594
  %v2851 = vunpack.c.l.b16 %v2595
  %v2852 = vunpack.c.l.b16 %v2596
  %v2853 = vunpack.c.l.b16 %v2597
  %v2854 = vunpack.c.l.b16 %v2598
  %v2855 = vunpack.c.l.b16 %v2599
  %v2856 = vunpack.c.l.b16 %v2600
  %v2857 = vunpack.c.l.b16 %v2601
  %v2858 = vunpack.c.l.b16 %v2602
  %v2859 = vunpack.c.l.b16 %v2603
  %v2860 = vunpack.c.l.b16 %v2604
  %v2861 = vunpack.c.l.b16 %v2605
  %v2862 = vunpack.c.l.b16 %v2606
  %v2863 = vunpack.c.l.b16 %v2607
  %v2864 = vunpack.c.l.b16 %v2608
  %v2865 = vunpack.c.l.b16 %v2609
  %v2866 = vunpack.c.l.b16 %v2610
  %v2867 = vunpack.c.l.b16 %v2611
  %v2868 = vunpack.c.l.b16 %v2612
  %v2869 = vunpack.c.l.b16 %v2613
  %v2870 = vunpack.c.l.b16 %v2614
  %v2871 = vunpack.c.l.b16 %v2615
  %v2872 = vunpack.c.l.b16 %v2616
  %v2873 = vunpack.c.l.b16 %v2617
  %v2874 = vunpack.c.l.b16 %v2618
  %v2875 = vunpack.c.l.b16 %v2619
  %v2876 = vpack.c.b16 %v2845, %v2844
  %v2877 = vpack.c.b16 %v2847, %v2846
  %v2878 = vpack.c.b16 %v2849, %v2848
  %v2879 = vpack.c.b16 %v2851, %v2850
  %v2880 = vpack.c.b16 %v2853, %v2852
  %v2881 = vpack.c.b16 %v2855, %v2854
  %v2882 = vpack.c.b16 %v2857, %v2856
  %v2883 = vpack.c.b16 %v2859, %v2858
  %v2884 = vpack.c.b16 %v2861, %v2860
  %v2885 = vpack.c.b16 %v2863, %v2862
  %v2886 = vpack.c.b16 %v2865, %v2864
  %v2887 = vpack.c.b16 %v2867, %v2866
  %v2888 = vpack.c.b16 %v2869, %v2868
  %v2889 = vpack.c.b16 %v2871, %v2870
  %v2890 = vpack.c.b16 %v2873, %v2872
  %v2891 = vpack.c.b16 %v2875, %v2874
  %2908 = vmatprep.subr.bf16.mxu0 %v2557
  %2909 = vmatpush1.bf16.msra.mxu0 %v2556
  %2910 = vmatprep.subr.bf16.mxu0 %v2561
  %2911 = vmatpush1.bf16.msra.mxu0 %v2560
  %2912 = vmatprep.subr.bf16.mxu0 %v2565
  %2913 = vmatpush1.bf16.msra.mxu0 %v2564
  %2914 = vmatprep.subr.bf16.mxu0 %v2569
  %2915 = vmatpush1.bf16.msra.mxu0 %v2568
  %2916 = vmatprep.subr.bf16.mxu0 %v2573
  %2917 = vmatpush1.bf16.msra.mxu0 %v2572
  %2918 = vmatprep.subr.bf16.mxu0 %v2577
  %2919 = vmatpush1.bf16.msra.mxu0 %v2576
  %2920 = vmatprep.subr.bf16.mxu0 %v2581
  %2921 = vmatpush1.bf16.msra.mxu0 %v2580
  %2922 = vmatprep.subr.bf16.mxu0 %v2585
  %2923 = vmatpush1.bf16.msra.mxu0 %v2584
  %2924 = vmatprep.subr.bf16.mxu0 0
  %2925 = vmatpush1.bf16.msra.mxu0 0
  %2926 = vmatprep.subr.bf16.mxu0 0
  %2927 = vmatpush1.bf16.msra.mxu0 0
  %2928 = vmatprep.subr.bf16.mxu0 0
  %2929 = vmatpush1.bf16.msra.mxu0 0
  %2930 = vmatprep.subr.bf16.mxu0 0
  %2931 = vmatpush1.bf16.msra.mxu0 0
  %2932 = vmatprep.subr.bf16.mxu0 0
  %2933 = vmatpush1.bf16.msra.mxu0 0
  %2934 = vmatprep.subr.bf16.mxu0 0
  %2935 = vmatpush1.bf16.msra.mxu0 0
  %2936 = vmatprep.subr.bf16.mxu0 0
  %2937 = vmatpush1.bf16.msra.mxu0 0
  %2938 = vmatprep.subr.bf16.mxu0 0
  %2939 = vmatpush1.bf16.msra.mxu0 0
  %2940 = vmatprep.mubr.bf16.mxu0 0
  %2941 = vmatmul.mubr.bf16.gmra.mrb[0].mxu0 %v2876
  %v2942 = vpop.f32.mrb[0].mxu0
  %v2943 = vadd.f32 %v2655, %v2942
  %v2944 = vpop.f32.mrb[0].mxu0
  %v2945 = vadd.f32 %v2655, %v2944
  %v2946 = vpop.f32.mrb[0].mxu0
  %v2947 = vadd.f32 %v2660, %v2946
  %v2948 = vpop.f32.mrb[0].mxu0
  %v2949 = vadd.f32 %v2660, %v2948
  %2950 = vmatprep.mubr.bf16.mxu0 0
  %2951 = vmatmul.mubr.bf16.gmra.mrb[0].mxu0 %v2877
  %v2952 = vpop.f32.mrb[0].mxu0
  %v2953 = vadd.f32 %v2665, %v2952
  %v2954 = vpop.f32.mrb[0].mxu0
  %v2955 = vadd.f32 %v2665, %v2954
  %v2956 = vpop.f32.mrb[0].mxu0
  %v2957 = vadd.f32 %v2670, %v2956
  %v2958 = vpop.f32.mrb[0].mxu0
  %v2959 = vadd.f32 %v2670, %v2958
  %2960 = vmatprep.mubr.bf16.mxu0 0
  %2961 = vmatmul.mubr.bf16.gmra.mrb[0].mxu0 %v2878
  %v2962 = vpop.f32.mrb[0].mxu0
  %v2963 = vadd.f32 %v2675, %v2962
  %v2964 = vpop.f32.mrb[0].mxu0
  %v2965 = vadd.f32 %v2675, %v2964
  %v2966 = vpop.f32.mrb[0].mxu0
  %v2967 = vadd.f32 %v2680, %v2966
  %v2968 = vpop.f32.mrb[0].mxu0
  %v2969 = vadd.f32 %v2680, %v2968
  %2970 = vmatprep.mubr.bf16.mxu0 0
  %2971 = vmatmul.mubr.bf16.gmra.mrb[0].mxu0 %v2879
  %v2972 = vpop.f32.mrb[0].mxu0
  %v2973 = vadd.f32 %v2685, %v2972
  %v2974 = vpop.f32.mrb[0].mxu0
  %v2975 = vadd.f32 %v2685, %v2974
  %v2976 = vpop.f32.mrb[0].mxu0
  %v2977 = vadd.f32 %v2690, %v2976
  %v2978 = vpop.f32.mrb[0].mxu0
  %v2979 = vadd.f32 %v2690, %v2978
  %2980 = vmatprep.mubr.bf16.mxu0 0
  %2981 = vmatmul.mubr.bf16.gmra.mrb[0].mxu0 %v2880
  %v2982 = vpop.f32.mrb[0].mxu0
  %v2983 = vadd.f32 %v2695, %v2982
  %v2984 = vpop.f32.mrb[0].mxu0
  %v2985 = vadd.f32 %v2695, %v2984
  %v2986 = vpop.f32.mrb[0].mxu0
  %v2987 = vadd.f32 %v2700, %v2986
  %v2988 = vpop.f32.mrb[0].mxu0
  %v2989 = vadd.f32 %v2700, %v2988
  %2990 = vmatprep.mubr.bf16.mxu0 0
  %2991 = vmatmul.mubr.bf16.gmra.mrb[0].mxu0 %v2881
  %v2992 = vpop.f32.mrb[0].mxu0
  %v2993 = vadd.f32 %v2705, %v2992
  %v2994 = vpop.f32.mrb[0].mxu0
  %v2995 = vadd.f32 %v2705, %v2994
  %v2996 = vpop.f32.mrb[0].mxu0
  %v2997 = vadd.f32 %v2710, %v2996
  %v2998 = vpop.f32.mrb[0].mxu0
  %v2999 = vadd.f32 %v2710, %v2998
  %3000 = vmatprep.mubr.bf16.mxu0 0
  %3001 = vmatmul.mubr.bf16.gmra.mrb[0].mxu0 %v2882
  %v3002 = vpop.f32.mrb[0].mxu0
  %v3003 = vadd.f32 %v2715, %v3002
  %v3004 = vpop.f32.mrb[0].mxu0
  %v3005 = vadd.f32 %v2715, %v3004
  %v3006 = vpop.f32.mrb[0].mxu0
  %v3007 = vadd.f32 %v2720, %v3006
  %v3008 = vpop.f32.mrb[0].mxu0
  %v3009 = vadd.f32 %v2720, %v3008
  %3010 = vmatprep.mubr.bf16.mxu0 0
  %3011 = vmatmul.mubr.bf16.gmra.mrb[0].mxu0 %v2883
  %v3012 = vpop.f32.mrb[0].mxu0
  %v3013 = vadd.f32 %v2725, %v3012
  %v3014 = vpop.f32.mrb[0].mxu0
  %v3015 = vadd.f32 %v2725, %v3014
  %v3016 = vpop.f32.mrb[0].mxu0
  %v3017 = vadd.f32 %v2730, %v3016
  %v3018 = vpop.f32.mrb[0].mxu0
  %v3019 = vadd.f32 %v2730, %v3018
  %3020 = vmatprep.mubr.bf16.mxu0 0
  %3021 = vmatmul.mubr.bf16.gmra.mrb[0].mxu0 %v2884
  %v3022 = vpop.f32.mrb[0].mxu0
  %v3023 = vadd.f32 %v2735, %v3022
  %v3024 = vpop.f32.mrb[0].mxu0
  %v3025 = vadd.f32 %v2735, %v3024
  %v3026 = vpop.f32.mrb[0].mxu0
  %v3027 = vadd.f32 %v2740, %v3026
  %v3028 = vpop.f32.mrb[0].mxu0
  %v3029 = vadd.f32 %v2740, %v3028
  %3030 = vmatprep.mubr.bf16.mxu0 0
  %3031 = vmatmul.mubr.bf16.gmra.mrb[0].mxu0 %v2885
  %v3032 = vpop.f32.mrb[0].mxu0
  %v3033 = vadd.f32 %v2745, %v3032
  %v3034 = vpop.f32.mrb[0].mxu0
  %v3035 = vadd.f32 %v2745, %v3034
  %v3036 = vpop.f32.mrb[0].mxu0
  %v3037 = vadd.f32 %v2750, %v3036
  %v3038 = vpop.f32.mrb[0].mxu0
  %v3039 = vadd.f32 %v2750, %v3038
  %3040 = vmatprep.mubr.bf16.mxu0 0
  %3041 = vmatmul.mubr.bf16.gmra.mrb[0].mxu0 %v2886
  %v3042 = vpop.f32.mrb[0].mxu0
  %v3043 = vadd.f32 %v2755, %v3042
  %v3044 = vpop.f32.mrb[0].mxu0
  %v3045 = vadd.f32 %v2755, %v3044
  %v3046 = vpop.f32.mrb[0].mxu0
  %v3047 = vadd.f32 %v2760, %v3046
  %v3048 = vpop.f32.mrb[0].mxu0
  %v3049 = vadd.f32 %v2760, %v3048
  %3050 = vmatprep.mubr.bf16.mxu0 0
  %3051 = vmatmul.mubr.bf16.gmra.mrb[0].mxu0 %v2887
  %v3052 = vpop.f32.mrb[0].mxu0
  %v3053 = vadd.f32 %v2765, %v3052
  %v3054 = vpop.f32.mrb[0].mxu0
  %v3055 = vadd.f32 %v2765, %v3054
  %v3056 = vpop.f32.mrb[0].mxu0
  %v3057 = vadd.f32 %v2770, %v3056
  %v3058 = vpop.f32.mrb[0].mxu0
  %v3059 = vadd.f32 %v2770, %v3058
  %3060 = vmatprep.mubr.bf16.mxu0 0
  %3061 = vmatmul.mubr.bf16.gmra.mrb[0].mxu0 %v2888
  %v3062 = vpop.f32.mrb[0].mxu0
  %v3063 = vadd.f32 %v2775, %v3062
  %v3064 = vpop.f32.mrb[0].mxu0
  %v3065 = vadd.f32 %v2775, %v3064
  %v3066 = vpop.f32.mrb[0].mxu0
  %v3067 = vadd.f32 %v2780, %v3066
  %v3068 = vpop.f32.mrb[0].mxu0
  %v3069 = vadd.f32 %v2780, %v3068
  %3070 = vmatprep.mubr.bf16.mxu0 0
  %3071 = vmatmul.mubr.bf16.gmra.mrb[0].mxu0 %v2889
  %v3072 = vpop.f32.mrb[0].mxu0
  %v3073 = vadd.f32 %v2785, %v3072
  %v3074 = vpop.f32.mrb[0].mxu0
  %v3075 = vadd.f32 %v2785, %v3074
  %v3076 = vpop.f32.mrb[0].mxu0
  %v3077 = vadd.f32 %v2790, %v3076
  %v3078 = vpop.f32.mrb[0].mxu0
  %v3079 = vadd.f32 %v2790, %v3078
  %3080 = vmatprep.mubr.bf16.mxu0 0
  %3081 = vmatmul.mubr.bf16.gmra.mrb[0].mxu0 %v2890
  %v3082 = vpop.f32.mrb[0].mxu0
  %v3083 = vadd.f32 %v2795, %v3082
  %v3084 = vpop.f32.mrb[0].mxu0
  %v3085 = vadd.f32 %v2795, %v3084
  %v3086 = vpop.f32.mrb[0].mxu0
  %v3087 = vadd.f32 %v2800, %v3086
  %v3088 = vpop.f32.mrb[0].mxu0
  %v3089 = vadd.f32 %v2800, %v3088
  %3090 = vmatprep.mubr.bf16.mxu0 0
  %3091 = vmatmul.mubr.bf16.gmra.mrb[0].mxu0 %v2891
  %v3092 = vpop.f32.mrb[0].mxu0
  %v3093 = vadd.f32 %v2805, %v3092
  %v3094 = vpop.f32.mrb[0].mxu0
  %v3095 = vadd.f32 %v2805, %v3094
  %v3096 = vpop.f32.mrb[0].mxu0
  %v3097 = vadd.f32 %v2810, %v3096
  %v3098 = vpop.f32.mrb[0].mxu0
  %v3099 = vadd.f32 %v2810, %v3098
  %3100 = vdwg.mxu0
  %3101 = vmatprep.subr.bf16.mxu0 %v2559
  %3102 = vmatpush1.bf16.msra.mxu0 %v2558
  %3103 = vmatprep.subr.bf16.mxu0 %v2563
  %3104 = vmatpush1.bf16.msra.mxu0 %v2562
  %3105 = vmatprep.subr.bf16.mxu0 %v2567
  %3106 = vmatpush1.bf16.msra.mxu0 %v2566
  %3107 = vmatprep.subr.bf16.mxu0 %v2571
  %3108 = vmatpush1.bf16.msra.mxu0 %v2570
  %3109 = vmatprep.subr.bf16.mxu0 %v2575
  %3110 = vmatpush1.bf16.msra.mxu0 %v2574
  %3111 = vmatprep.subr.bf16.mxu0 %v2579
  %3112 = vmatpush1.bf16.msra.mxu0 %v2578
  %3113 = vmatprep.subr.bf16.mxu0 %v2583
  %3114 = vmatpush1.bf16.msra.mxu0 %v2582
  %3115 = vmatprep.subr.bf16.mxu0 %v2587
  %3116 = vmatpush1.bf16.msra.mxu0 %v2586
  %3117 = vmatprep.subr.bf16.mxu0 0
  %3118 = vmatpush1.bf16.msra.mxu0 0
  %3119 = vmatprep.subr.bf16.mxu0 0
  %3120 = vmatpush1.bf16.msra.mxu0 0
  %3121 = vmatprep.subr.bf16.mxu0 0
  %3122 = vmatpush1.bf16.msra.mxu0 0
  %3123 = vmatprep.subr.bf16.mxu0 0
  %3124 = vmatpush1.bf16.msra.mxu0 0
  %3125 = vmatprep.subr.bf16.mxu0 0
  %3126 = vmatpush1.bf16.msra.mxu0 0
  %3127 = vmatprep.subr.bf16.mxu0 0
  %3128 = vmatpush1.bf16.msra.mxu0 0
  %3129 = vmatprep.subr.bf16.mxu0 0
  %3130 = vmatpush1.bf16.msra.mxu0 0
  %3131 = vmatprep.subr.bf16.mxu0 0
  %3132 = vmatpush1.bf16.msra.mxu0 0
  %3133 = vmatprep.mubr.bf16.mxu0 0
  %3134 = vmatmul.mubr.bf16.gmra.mrb[0].mxu0 %v2876
  %v3135 = vpop.f32.mrb[0].mxu0
  %v3136 = vadd.f32 %v2655, %v3135
  %v3137 = vpop.f32.mrb[0].mxu0
  %v3138 = vadd.f32 %v2655, %v3137
  %v3139 = vpop.f32.mrb[0].mxu0
  %v3140 = vadd.f32 %v2660, %v3139
  %v3141 = vpop.f32.mrb[0].mxu0
  %v3142 = vadd.f32 %v2660, %v3141
  %3143 = vmatprep.mubr.bf16.mxu0 0
  %3144 = vmatmul.mubr.bf16.gmra.mrb[0].mxu0 %v2877
  %v3145 = vpop.f32.mrb[0].mxu0
  %v3146 = vadd.f32 %v2665, %v3145
  %v3147 = vpop.f32.mrb[0].mxu0
  %v3148 = vadd.f32 %v2665, %v3147
  %v3149 = vpop.f32.mrb[0].mxu0
  %v3150 = vadd.f32 %v2670, %v3149
  %v3151 = vpop.f32.mrb[0].mxu0
  %v3152 = vadd.f32 %v2670, %v3151
  %3153 = vmatprep.mubr.bf16.mxu0 0
  %3154 = vmatmul.mubr.bf16.gmra.mrb[0].mxu0 %v2878
  %v3155 = vpop.f32.mrb[0].mxu0
  %v3156 = vadd.f32 %v2675, %v3155
  %v3157 = vpop.f32.mrb[0].mxu0
  %v3158 = vadd.f32 %v2675, %v3157
  %v3159 = vpop.f32.mrb[0].mxu0
  %v3160 = vadd.f32 %v2680, %v3159
  %v3161 = vpop.f32.mrb[0].mxu0
  %v3162 = vadd.f32 %v2680, %v3161
  %3163 = vmatprep.mubr.bf16.mxu0 0
  %3164 = vmatmul.mubr.bf16.gmra.mrb[0].mxu0 %v2879
  %v3165 = vpop.f32.mrb[0].mxu0
  %v3166 = vadd.f32 %v2685, %v3165
  %v3167 = vpop.f32.mrb[0].mxu0
  %v3168 = vadd.f32 %v2685, %v3167
  %v3169 = vpop.f32.mrb[0].mxu0
  %v3170 = vadd.f32 %v2690, %v3169
  %v3171 = vpop.f32.mrb[0].mxu0
  %v3172 = vadd.f32 %v2690, %v3171
  %3173 = vmatprep.mubr.bf16.mxu0 0
  %3174 = vmatmul.mubr.bf16.gmra.mrb[0].mxu0 %v2880
  %v3175 = vpop.f32.mrb[0].mxu0
  %v3176 = vadd.f32 %v2695, %v3175
  %v3177 = vpop.f32.mrb[0].mxu0
  %v3178 = vadd.f32 %v2695, %v3177
  %v3179 = vpop.f32.mrb[0].mxu0
  %v3180 = vadd.f32 %v2700, %v3179
  %v3181 = vpop.f32.mrb[0].mxu0
  %v3182 = vadd.f32 %v2700, %v3181
  %3183 = vmatprep.mubr.bf16.mxu0 0
  %3184 = vmatmul.mubr.bf16.gmra.mrb[0].mxu0 %v2881
  %v3185 = vpop.f32.mrb[0].mxu0
  %v3186 = vadd.f32 %v2705, %v3185
  %v3187 = vpop.f32.mrb[0].mxu0
  %v3188 = vadd.f32 %v2705, %v3187
  %v3189 = vpop.f32.mrb[0].mxu0
  %v3190 = vadd.f32 %v2710, %v3189
  %v3191 = vpop.f32.mrb[0].mxu0
  %v3192 = vadd.f32 %v2710, %v3191
  %3193 = vmatprep.mubr.bf16.mxu0 0
  %3194 = vmatmul.mubr.bf16.gmra.mrb[0].mxu0 %v2882
  %v3195 = vpop.f32.mrb[0].mxu0
  %v3196 = vadd.f32 %v2715, %v3195
  %v3197 = vpop.f32.mrb[0].mxu0
  %v3198 = vadd.f32 %v2715, %v3197
  %v3199 = vpop.f32.mrb[0].mxu0
  %v3200 = vadd.f32 %v2720, %v3199
  %v3201 = vpop.f32.mrb[0].mxu0
  %v3202 = vadd.f32 %v2720, %v3201
  %3203 = vmatprep.mubr.bf16.mxu0 0
  %3204 = vmatmul.mubr.bf16.gmra.mrb[0].mxu0 %v2883
  %v3205 = vpop.f32.mrb[0].mxu0
  %v3206 = vadd.f32 %v2725, %v3205
  %v3207 = vpop.f32.mrb[0].mxu0
  %v3208 = vadd.f32 %v2725, %v3207
  %v3209 = vpop.f32.mrb[0].mxu0
  %v3210 = vadd.f32 %v2730, %v3209
  %v3211 = vpop.f32.mrb[0].mxu0
  %v3212 = vadd.f32 %v2730, %v3211
  %3213 = vmatprep.mubr.bf16.mxu0 0
  %3214 = vmatmul.mubr.bf16.gmra.mrb[0].mxu0 %v2884
  %v3215 = vpop.f32.mrb[0].mxu0
  %v3216 = vadd.f32 %v2735, %v3215
  %v3217 = vpop.f32.mrb[0].mxu0
  %v3218 = vadd.f32 %v2735, %v3217
  %v3219 = vpop.f32.mrb[0].mxu0
  %v3220 = vadd.f32 %v2740, %v3219
  %v3221 = vpop.f32.mrb[0].mxu0
  %v3222 = vadd.f32 %v2740, %v3221
  %3223 = vmatprep.mubr.bf16.mxu0 0
  %3224 = vmatmul.mubr.bf16.gmra.mrb[0].mxu0 %v2885
  %v3225 = vpop.f32.mrb[0].mxu0
  %v3226 = vadd.f32 %v2745, %v3225
  %v3227 = vpop.f32.mrb[0].mxu0
  %v3228 = vadd.f32 %v2745, %v3227
  %v3229 = vpop.f32.mrb[0].mxu0
  %v3230 = vadd.f32 %v2750, %v3229
  %v3231 = vpop.f32.mrb[0].mxu0
  %v3232 = vadd.f32 %v2750, %v3231
  %3233 = vmatprep.mubr.bf16.mxu0 0
  %3234 = vmatmul.mubr.bf16.gmra.mrb[0].mxu0 %v2886
  %v3235 = vpop.f32.mrb[0].mxu0
  %v3236 = vadd.f32 %v2755, %v3235
  %v3237 = vpop.f32.mrb[0].mxu0
  %v3238 = vadd.f32 %v2755, %v3237
  %v3239 = vpop.f32.mrb[0].mxu0
  %v3240 = vadd.f32 %v2760, %v3239
  %v3241 = vpop.f32.mrb[0].mxu0
  %v3242 = vadd.f32 %v2760, %v3241
  %3243 = vmatprep.mubr.bf16.mxu0 0
  %3244 = vmatmul.mubr.bf16.gmra.mrb[0].mxu0 %v2887
  %v3245 = vpop.f32.mrb[0].mxu0
  %v3246 = vadd.f32 %v2765, %v3245
  %v3247 = vpop.f32.mrb[0].mxu0
  %v3248 = vadd.f32 %v2765, %v3247
  %v3249 = vpop.f32.mrb[0].mxu0
  %v3250 = vadd.f32 %v2770, %v3249
  %v3251 = vpop.f32.mrb[0].mxu0
  %v3252 = vadd.f32 %v2770, %v3251
  %3253 = vmatprep.mubr.bf16.mxu0 0
  %3254 = vmatmul.mubr.bf16.gmra.mrb[0].mxu0 %v2888
  %v3255 = vpop.f32.mrb[0].mxu0
  %v3256 = vadd.f32 %v2775, %v3255
  %v3257 = vpop.f32.mrb[0].mxu0
  %v3258 = vadd.f32 %v2775, %v3257
  %v3259 = vpop.f32.mrb[0].mxu0
  %v3260 = vadd.f32 %v2780, %v3259
  %v3261 = vpop.f32.mrb[0].mxu0
  %v3262 = vadd.f32 %v2780, %v3261
  %3263 = vmatprep.mubr.bf16.mxu0 0
  %3264 = vmatmul.mubr.bf16.gmra.mrb[0].mxu0 %v2889
  %v3265 = vpop.f32.mrb[0].mxu0
  %v3266 = vadd.f32 %v2785, %v3265
  %v3267 = vpop.f32.mrb[0].mxu0
  %v3268 = vadd.f32 %v2785, %v3267
  %v3269 = vpop.f32.mrb[0].mxu0
  %v3270 = vadd.f32 %v2790, %v3269
  %v3271 = vpop.f32.mrb[0].mxu0
  %v3272 = vadd.f32 %v2790, %v3271
  %3273 = vmatprep.mubr.bf16.mxu0 0
  %3274 = vmatmul.mubr.bf16.gmra.mrb[0].mxu0 %v2890
  %v3275 = vpop.f32.mrb[0].mxu0
  %v3276 = vadd.f32 %v2795, %v3275
  %v3277 = vpop.f32.mrb[0].mxu0
  %v3278 = vadd.f32 %v2795, %v3277
  %v3279 = vpop.f32.mrb[0].mxu0
  %v3280 = vadd.f32 %v2800, %v3279
  %v3281 = vpop.f32.mrb[0].mxu0
  %v3282 = vadd.f32 %v2800, %v3281
  %3283 = vmatprep.mubr.bf16.mxu0 0
  %3284 = vmatmul.mubr.bf16.gmra.mrb[0].mxu0 %v2891
  %v3285 = vpop.f32.mrb[0].mxu0
  %v3286 = vadd.f32 %v2805, %v3285
  %v3287 = vpop.f32.mrb[0].mxu0
  %v3288 = vadd.f32 %v2805, %v3287
  %v3289 = vpop.f32.mrb[0].mxu0
  %v3290 = vadd.f32 %v2810, %v3289
  %v3291 = vpop.f32.mrb[0].mxu0
  %v3292 = vadd.f32 %v2810, %v3291
  %3293 = vdwg.mxu0
  %v3294 = vmul.f32 %v2943, 0.5
  %v3295 = vmul.f32 %v2945, 0.5
  %v3296 = vmul.f32 %v3136, 0.5
  %v3297 = vmul.f32 %v3138, 0.5
  %v3298 = vmul.f32 %v2947, 0.5
  %v3299 = vmul.f32 %v2949, 0.5
  %v3300 = vmul.f32 %v3140, 0.5
  %v3301 = vmul.f32 %v3142, 0.5
  %v3302 = vmul.f32 %v2953, 0.5
  %v3303 = vmul.f32 %v2955, 0.5
  %v3304 = vmul.f32 %v3146, 0.5
  %v3305 = vmul.f32 %v3148, 0.5
  %v3306 = vmul.f32 %v2957, 0.5
  %v3307 = vmul.f32 %v2959, 0.5
  %v3308 = vmul.f32 %v3150, 0.5
  %v3309 = vmul.f32 %v3152, 0.5
  %v3310 = vmul.f32 %v2963, 0.5
  %v3311 = vmul.f32 %v2965, 0.5
  %v3312 = vmul.f32 %v3156, 0.5
  %v3313 = vmul.f32 %v3158, 0.5
  %v3314 = vmul.f32 %v2967, 0.5
  %v3315 = vmul.f32 %v2969, 0.5
  %v3316 = vmul.f32 %v3160, 0.5
  %v3317 = vmul.f32 %v3162, 0.5
  %v3318 = vmul.f32 %v2973, 0.5
  %v3319 = vmul.f32 %v2975, 0.5
  %v3320 = vmul.f32 %v3166, 0.5
  %v3321 = vmul.f32 %v3168, 0.5
  %v3322 = vmul.f32 %v2977, 0.5
  %v3323 = vmul.f32 %v2979, 0.5
  %v3324 = vmul.f32 %v3170, 0.5
  %v3325 = vmul.f32 %v3172, 0.5
  %v3326 = vmul.f32 %v2983, 0.5
  %v3327 = vmul.f32 %v2985, 0.5
  %v3328 = vmul.f32 %v3176, 0.5
  %v3329 = vmul.f32 %v3178, 0.5
  %v3330 = vmul.f32 %v2987, 0.5
  %v3331 = vmul.f32 %v2989, 0.5
  %v3332 = vmul.f32 %v3180, 0.5
  %v3333 = vmul.f32 %v3182, 0.5
  %v3334 = vmul.f32 %v2993, 0.5
  %v3335 = vmul.f32 %v2995, 0.5
  %v3336 = vmul.f32 %v3186, 0.5
  %v3337 = vmul.f32 %v3188, 0.5
  %v3338 = vmul.f32 %v2997, 0.5
  %v3339 = vmul.f32 %v2999, 0.5
  %v3340 = vmul.f32 %v3190, 0.5
  %v3341 = vmul.f32 %v3192, 0.5
  %v3342 = vmul.f32 %v3003, 0.5
  %v3343 = vmul.f32 %v3005, 0.5
  %v3344 = vmul.f32 %v3196, 0.5
  %v3345 = vmul.f32 %v3198, 0.5
  %v3346 = vmul.f32 %v3007, 0.5
  %v3347 = vmul.f32 %v3009, 0.5
  %v3348 = vmul.f32 %v3200, 0.5
  %v3349 = vmul.f32 %v3202, 0.5
  %v3350 = vmul.f32 %v3013, 0.5
  %v3351 = vmul.f32 %v3015, 0.5
  %v3352 = vmul.f32 %v3206, 0.5
  %v3353 = vmul.f32 %v3208, 0.5
  %v3354 = vmul.f32 %v3017, 0.5
  %v3355 = vmul.f32 %v3019, 0.5
  %v3356 = vmul.f32 %v3210, 0.5
  %v3357 = vmul.f32 %v3212, 0.5
  %v3358 = vmul.f32 %v3023, 0.5
  %v3359 = vmul.f32 %v3025, 0.5
  %v3360 = vmul.f32 %v3216, 0.5
  %v3361 = vmul.f32 %v3218, 0.5
  %v3362 = vmul.f32 %v3027, 0.5
  %v3363 = vmul.f32 %v3029, 0.5
  %v3364 = vmul.f32 %v3220, 0.5
  %v3365 = vmul.f32 %v3222, 0.5
  %v3366 = vmul.f32 %v3033, 0.5
  %v3367 = vmul.f32 %v3035, 0.5
  %v3368 = vmul.f32 %v3226, 0.5
  %v3369 = vmul.f32 %v3228, 0.5
  %v3370 = vmul.f32 %v3037, 0.5
  %v3371 = vmul.f32 %v3039, 0.5
  %v3372 = vmul.f32 %v3230, 0.5
  %v3373 = vmul.f32 %v3232, 0.5
  %v3374 = vmul.f32 %v3043, 0.5
  %v3375 = vmul.f32 %v3045, 0.5
  %v3376 = vmul.f32 %v3236, 0.5
  %v3377 = vmul.f32 %v3238, 0.5
  %v3378 = vmul.f32 %v3047, 0.5
  %v3379 = vmul.f32 %v3049, 0.5
  %v3380 = vmul.f32 %v3240, 0.5
  %v3381 = vmul.f32 %v3242, 0.5
  %v3382 = vmul.f32 %v3053, 0.5
  %v3383 = vmul.f32 %v3055, 0.5
  %v3384 = vmul.f32 %v3246, 0.5
  %v3385 = vmul.f32 %v3248, 0.5
  %v3386 = vmul.f32 %v3057, 0.5
  %v3387 = vmul.f32 %v3059, 0.5
  %v3388 = vmul.f32 %v3250, 0.5
  %v3389 = vmul.f32 %v3252, 0.5
  %v3390 = vmul.f32 %v3063, 0.5
  %v3391 = vmul.f32 %v3065, 0.5
  %v3392 = vmul.f32 %v3256, 0.5
  %v3393 = vmul.f32 %v3258, 0.5
  %v3394 = vmul.f32 %v3067, 0.5
  %v3395 = vmul.f32 %v3069, 0.5
  %v3396 = vmul.f32 %v3260, 0.5
  %v3397 = vmul.f32 %v3262, 0.5
  %v3398 = vmul.f32 %v3073, 0.5
  %v3399 = vmul.f32 %v3075, 0.5
  %v3400 = vmul.f32 %v3266, 0.5
  %v3401 = vmul.f32 %v3268, 0.5
  %v3402 = vmul.f32 %v3077, 0.5
  %v3403 = vmul.f32 %v3079, 0.5
  %v3404 = vmul.f32 %v3270, 0.5
  %v3405 = vmul.f32 %v3272, 0.5
  %v3406 = vmul.f32 %v3083, 0.5
  %v3407 = vmul.f32 %v3085, 0.5
  %v3408 = vmul.f32 %v3276, 0.5
  %v3409 = vmul.f32 %v3278, 0.5
  %v3410 = vmul.f32 %v3087, 0.5
  %v3411 = vmul.f32 %v3089, 0.5
  %v3412 = vmul.f32 %v3280, 0.5
  %v3413 = vmul.f32 %v3282, 0.5
  %v3414 = vmul.f32 %v3093, 0.5
  %v3415 = vmul.f32 %v3095, 0.5
  %v3416 = vmul.f32 %v3286, 0.5
  %v3417 = vmul.f32 %v3288, 0.5
  %v3418 = vmul.f32 %v3097, 0.5
  %v3419 = vmul.f32 %v3099, 0.5
  %v3420 = vmul.f32 %v3290, 0.5
  %v3421 = vmul.f32 %v3292, 0.5
  %v3422 = vmul.f32 %v2943, 0.70710677
  %v3423 = vmul.f32 %v2945, 0.70710677
  %v3424 = vmul.f32 %v3136, 0.70710677
  %v3425 = vmul.f32 %v3138, 0.70710677
  %v3426 = vmul.f32 %v2947, 0.70710677
  %v3427 = vmul.f32 %v2949, 0.70710677
  %v3428 = vmul.f32 %v3140, 0.70710677
  %v3429 = vmul.f32 %v3142, 0.70710677
  %v3430 = vmul.f32 %v2953, 0.70710677
  %v3431 = vmul.f32 %v2955, 0.70710677
  %v3432 = vmul.f32 %v3146, 0.70710677
  %v3433 = vmul.f32 %v3148, 0.70710677
  %v3434 = vmul.f32 %v2957, 0.70710677
  %v3435 = vmul.f32 %v2959, 0.70710677
  %v3436 = vmul.f32 %v3150, 0.70710677
  %v3437 = vmul.f32 %v3152, 0.70710677
  %v3438 = vmul.f32 %v2963, 0.70710677
  %v3439 = vmul.f32 %v2965, 0.70710677
  %v3440 = vmul.f32 %v3156, 0.70710677
  %v3441 = vmul.f32 %v3158, 0.70710677
  %v3442 = vmul.f32 %v2967, 0.70710677
  %v3443 = vmul.f32 %v2969, 0.70710677
  %v3444 = vmul.f32 %v3160, 0.70710677
  %v3445 = vmul.f32 %v3162, 0.70710677
  %v3446 = vmul.f32 %v2973, 0.70710677
  %v3447 = vmul.f32 %v2975, 0.70710677
  %v3448 = vmul.f32 %v3166, 0.70710677
  %v3449 = vmul.f32 %v3168, 0.70710677
  %v3450 = vmul.f32 %v2977, 0.70710677
  %v3451 = vmul.f32 %v2979, 0.70710677
  %v3452 = vmul.f32 %v3170, 0.70710677
  %v3453 = vmul.f32 %v3172, 0.70710677
  %v3454 = vmul.f32 %v2983, 0.70710677
  %v3455 = vmul.f32 %v2985, 0.70710677
  %v3456 = vmul.f32 %v3176, 0.70710677
  %v3457 = vmul.f32 %v3178, 0.70710677
  %v3458 = vmul.f32 %v2987, 0.70710677
  %v3459 = vmul.f32 %v2989, 0.70710677
  %v3460 = vmul.f32 %v3180, 0.70710677
  %v3461 = vmul.f32 %v3182, 0.70710677
  %v3462 = vmul.f32 %v2993, 0.70710677
  %v3463 = vmul.f32 %v2995, 0.70710677
  %v3464 = vmul.f32 %v3186, 0.70710677
  %v3465 = vmul.f32 %v3188, 0.70710677
  %v3466 = vmul.f32 %v2997, 0.70710677
  %v3467 = vmul.f32 %v2999, 0.70710677
  %v3468 = vmul.f32 %v3190, 0.70710677
  %v3469 = vmul.f32 %v3192, 0.70710677
  %v3470 = vmul.f32 %v3003, 0.70710677
  %v3471 = vmul.f32 %v3005, 0.70710677
  %v3472 = vmul.f32 %v3196, 0.70710677
  %v3473 = vmul.f32 %v3198, 0.70710677
  %v3474 = vmul.f32 %v3007, 0.70710677
  %v3475 = vmul.f32 %v3009, 0.70710677
  %v3476 = vmul.f32 %v3200, 0.70710677
  %v3477 = vmul.f32 %v3202, 0.70710677
  %v3478 = vmul.f32 %v3013, 0.70710677
  %v3479 = vmul.f32 %v3015, 0.70710677
  %v3480 = vmul.f32 %v3206, 0.70710677
  %v3481 = vmul.f32 %v3208, 0.70710677
  %v3482 = vmul.f32 %v3017, 0.70710677
  %v3483 = vmul.f32 %v3019, 0.70710677
  %v3484 = vmul.f32 %v3210, 0.70710677
  %v3485 = vmul.f32 %v3212, 0.70710677
  %v3486 = vmul.f32 %v3023, 0.70710677
  %v3487 = vmul.f32 %v3025, 0.70710677
  %v3488 = vmul.f32 %v3216, 0.70710677
  %v3489 = vmul.f32 %v3218, 0.70710677
  %v3490 = vmul.f32 %v3027, 0.70710677
  %v3491 = vmul.f32 %v3029, 0.70710677
  %v3492 = vmul.f32 %v3220, 0.70710677
  %v3493 = vmul.f32 %v3222, 0.70710677
  %v3494 = vmul.f32 %v3033, 0.70710677
  %v3495 = vmul.f32 %v3035, 0.70710677
  %v3496 = vmul.f32 %v3226, 0.70710677
  %v3497 = vmul.f32 %v3228, 0.70710677
  %v3498 = vmul.f32 %v3037, 0.70710677
  %v3499 = vmul.f32 %v3039, 0.70710677
  %v3500 = vmul.f32 %v3230, 0.70710677
  %v3501 = vmul.f32 %v3232, 0.70710677
  %v3502 = vmul.f32 %v3043, 0.70710677
  %v3503 = vmul.f32 %v3045, 0.70710677
  %v3504 = vmul.f32 %v3236, 0.70710677
  %v3505 = vmul.f32 %v3238, 0.70710677
  %v3506 = vmul.f32 %v3047, 0.70710677
  %v3507 = vmul.f32 %v3049, 0.70710677
  %v3508 = vmul.f32 %v3240, 0.70710677
  %v3509 = vmul.f32 %v3242, 0.70710677
  %v3510 = vmul.f32 %v3053, 0.70710677
  %v3511 = vmul.f32 %v3055, 0.70710677
  %v3512 = vmul.f32 %v3246, 0.70710677
  %v3513 = vmul.f32 %v3248, 0.70710677
  %v3514 = vmul.f32 %v3057, 0.70710677
  %v3515 = vmul.f32 %v3059, 0.70710677
  %v3516 = vmul.f32 %v3250, 0.70710677
  %v3517 = vmul.f32 %v3252, 0.70710677
  %v3518 = vmul.f32 %v3063, 0.70710677
  %v3519 = vmul.f32 %v3065, 0.70710677
  %v3520 = vmul.f32 %v3256, 0.70710677
  %v3521 = vmul.f32 %v3258, 0.70710677
  %v3522 = vmul.f32 %v3067, 0.70710677
  %v3523 = vmul.f32 %v3069, 0.70710677
  %v3524 = vmul.f32 %v3260, 0.70710677
  %v3525 = vmul.f32 %v3262, 0.70710677
  %v3526 = vmul.f32 %v3073, 0.70710677
  %v3527 = vmul.f32 %v3075, 0.70710677
  %v3528 = vmul.f32 %v3266, 0.70710677
  %v3529 = vmul.f32 %v3268, 0.70710677
  %v3530 = vmul.f32 %v3077, 0.70710677
  %v3531 = vmul.f32 %v3079, 0.70710677
  %v3532 = vmul.f32 %v3270, 0.70710677
  %v3533 = vmul.f32 %v3272, 0.70710677
  %v3534 = vmul.f32 %v3083, 0.70710677
  %v3535 = vmul.f32 %v3085, 0.70710677
  %v3536 = vmul.f32 %v3276, 0.70710677
  %v3537 = vmul.f32 %v3278, 0.70710677
  %v3538 = vmul.f32 %v3087, 0.70710677
  %v3539 = vmul.f32 %v3089, 0.70710677
  %v3540 = vmul.f32 %v3280, 0.70710677
  %v3541 = vmul.f32 %v3282, 0.70710677
  %v3542 = vmul.f32 %v3093, 0.70710677
  %v3543 = vmul.f32 %v3095, 0.70710677
  %v3544 = vmul.f32 %v3286, 0.70710677
  %v3545 = vmul.f32 %v3288, 0.70710677
  %v3546 = vmul.f32 %v3097, 0.70710677
  %v3547 = vmul.f32 %v3099, 0.70710677
  %v3548 = vmul.f32 %v3290, 0.70710677
  %v3549 = vmul.f32 %v3292, 0.70710677
  %v3550 = verf.f32.pop %v3422
  %v3551 = verf.f32.pop %v3423
  %v3552 = verf.f32.pop %v3424
  %v3553 = verf.f32.pop %v3425
  %v3554 = verf.f32.pop %v3426
  %v3555 = verf.f32.pop %v3427
  %v3556 = verf.f32.pop %v3428
  %v3557 = verf.f32.pop %v3429
  %v3558 = verf.f32.pop %v3430
  %v3559 = verf.f32.pop %v3431
  %v3560 = verf.f32.pop %v3432
  %v3561 = verf.f32.pop %v3433
  %v3562 = verf.f32.pop %v3434
  %v3563 = verf.f32.pop %v3435
  %v3564 = verf.f32.pop %v3436
  %v3565 = verf.f32.pop %v3437
  %v3566 = verf.f32.pop %v3438
  %v3567 = verf.f32.pop %v3439
  %v3568 = verf.f32.pop %v3440
  %v3569 = verf.f32.pop %v3441
  %v3570 = verf.f32.pop %v3442
  %v3571 = verf.f32.pop %v3443
  %v3572 = verf.f32.pop %v3444
  %v3573 = verf.f32.pop %v3445
  %v3574 = verf.f32.pop %v3446
  %v3575 = verf.f32.pop %v3447
  %v3576 = verf.f32.pop %v3448
  %v3577 = verf.f32.pop %v3449
  %v3578 = verf.f32.pop %v3450
  %v3579 = verf.f32.pop %v3451
  %v3580 = verf.f32.pop %v3452
  %v3581 = verf.f32.pop %v3453
  %v3582 = verf.f32.pop %v3454
  %v3583 = verf.f32.pop %v3455
  %v3584 = verf.f32.pop %v3456
  %v3585 = verf.f32.pop %v3457
  %v3586 = verf.f32.pop %v3458
  %v3587 = verf.f32.pop %v3459
  %v3588 = verf.f32.pop %v3460
  %v3589 = verf.f32.pop %v3461
  %v3590 = verf.f32.pop %v3462
  %v3591 = verf.f32.pop %v3463
  %v3592 = verf.f32.pop %v3464
  %v3593 = verf.f32.pop %v3465
  %v3594 = verf.f32.pop %v3466
  %v3595 = verf.f32.pop %v3467
  %v3596 = verf.f32.pop %v3468
  %v3597 = verf.f32.pop %v3469
  %v3598 = verf.f32.pop %v3470
  %v3599 = verf.f32.pop %v3471
  %v3600 = verf.f32.pop %v3472
  %v3601 = verf.f32.pop %v3473
  %v3602 = verf.f32.pop %v3474
  %v3603 = verf.f32.pop %v3475
  %v3604 = verf.f32.pop %v3476
  %v3605 = verf.f32.pop %v3477
  %v3606 = verf.f32.pop %v3478
  %v3607 = verf.f32.pop %v3479
  %v3608 = verf.f32.pop %v3480
  %v3609 = verf.f32.pop %v3481
  %v3610 = verf.f32.pop %v3482
  %v3611 = verf.f32.pop %v3483
  %v3612 = verf.f32.pop %v3484
  %v3613 = verf.f32.pop %v3485
  %v3614 = verf.f32.pop %v3486
  %v3615 = verf.f32.pop %v3487
  %v3616 = verf.f32.pop %v3488
  %v3617 = verf.f32.pop %v3489
  %v3618 = verf.f32.pop %v3490
  %v3619 = verf.f32.pop %v3491
  %v3620 = verf.f32.pop %v3492
  %v3621 = verf.f32.pop %v3493
  %v3622 = verf.f32.pop %v3494
  %v3623 = verf.f32.pop %v3495
  %v3624 = verf.f32.pop %v3496
  %v3625 = verf.f32.pop %v3497
  %v3626 = verf.f32.pop %v3498
  %v3627 = verf.f32.pop %v3499
  %v3628 = verf.f32.pop %v3500
  %v3629 = verf.f32.pop %v3501
  %v3630 = verf.f32.pop %v3502
  %v3631 = verf.f32.pop %v3503
  %v3632 = verf.f32.pop %v3504
  %v3633 = verf.f32.pop %v3505
  %v3634 = verf.f32.pop %v3506
  %v3635 = verf.f32.pop %v3507
  %v3636 = verf.f32.pop %v3508
  %v3637 = verf.f32.pop %v3509
  %v3638 = verf.f32.pop %v3510
  %v3639 = verf.f32.pop %v3511
  %v3640 = verf.f32.pop %v3512
  %v3641 = verf.f32.pop %v3513
  %v3642 = verf.f32.pop %v3514
  %v3643 = verf.f32.pop %v3515
  %v3644 = verf.f32.pop %v3516
  %v3645 = verf.f32.pop %v3517
  %v3646 = verf.f32.pop %v3518
  %v3647 = verf.f32.pop %v3519
  %v3648 = verf.f32.pop %v3520
  %v3649 = verf.f32.pop %v3521
  %v3650 = verf.f32.pop %v3522
  %v3651 = verf.f32.pop %v3523
  %v3652 = verf.f32.pop %v3524
  %v3653 = verf.f32.pop %v3525
  %v3654 = verf.f32.pop %v3526
  %v3655 = verf.f32.pop %v3527
  %v3656 = verf.f32.pop %v3528
  %v3657 = verf.f32.pop %v3529
  %v3658 = verf.f32.pop %v3530
  %v3659 = verf.f32.pop %v3531
  %v3660 = verf.f32.pop %v3532
  %v3661 = verf.f32.pop %v3533
  %v3662 = verf.f32.pop %v3534
  %v3663 = verf.f32.pop %v3535
  %v3664 = verf.f32.pop %v3536
  %v3665 = verf.f32.pop %v3537
  %v3666 = verf.f32.pop %v3538
  %v3667 = verf.f32.pop %v3539
  %v3668 = verf.f32.pop %v3540
  %v3669 = verf.f32.pop %v3541
  %v3670 = verf.f32.pop %v3542
  %v3671 = verf.f32.pop %v3543
  %v3672 = verf.f32.pop %v3544
  %v3673 = verf.f32.pop %v3545
  %v3674 = verf.f32.pop %v3546
  %v3675 = verf.f32.pop %v3547
  %v3676 = verf.f32.pop %v3548
  %v3677 = verf.f32.pop %v3549
  %v3678 = vadd.f32 %v3550, 1.0
  %v3679 = vadd.f32 %v3551, 1.0
  %v3680 = vadd.f32 %v3552, 1.0
  %v3681 = vadd.f32 %v3553, 1.0
  %v3682 = vadd.f32 %v3554, 1.0
  %v3683 = vadd.f32 %v3555, 1.0
  %v3684 = vadd.f32 %v3556, 1.0
  %v3685 = vadd.f32 %v3557, 1.0
  %v3686 = vadd.f32 %v3558, 1.0
  %v3687 = vadd.f32 %v3559, 1.0
  %v3688 = vadd.f32 %v3560, 1.0
  %v3689 = vadd.f32 %v3561, 1.0
  %v3690 = vadd.f32 %v3562, 1.0
  %v3691 = vadd.f32 %v3563, 1.0
  %v3692 = vadd.f32 %v3564, 1.0
  %v3693 = vadd.f32 %v3565, 1.0
  %v3694 = vadd.f32 %v3566, 1.0
  %v3695 = vadd.f32 %v3567, 1.0
  %v3696 = vadd.f32 %v3568, 1.0
  %v3697 = vadd.f32 %v3569, 1.0
  %v3698 = vadd.f32 %v3570, 1.0
  %v3699 = vadd.f32 %v3571, 1.0
  %v3700 = vadd.f32 %v3572, 1.0
  %v3701 = vadd.f32 %v3573, 1.0
  %v3702 = vadd.f32 %v3574, 1.0
  %v3703 = vadd.f32 %v3575, 1.0
  %v3704 = vadd.f32 %v3576, 1.0
  %v3705 = vadd.f32 %v3577, 1.0
  %v3706 = vadd.f32 %v3578, 1.0
  %v3707 = vadd.f32 %v3579, 1.0
  %v3708 = vadd.f32 %v3580, 1.0
  %v3709 = vadd.f32 %v3581, 1.0
  %v3710 = vadd.f32 %v3582, 1.0
  %v3711 = vadd.f32 %v3583, 1.0
  %v3712 = vadd.f32 %v3584, 1.0
  %v3713 = vadd.f32 %v3585, 1.0
  %v3714 = vadd.f32 %v3586, 1.0
  %v3715 = vadd.f32 %v3587, 1.0
  %v3716 = vadd.f32 %v3588, 1.0
  %v3717 = vadd.f32 %v3589, 1.0
  %v3718 = vadd.f32 %v3590, 1.0
  %v3719 = vadd.f32 %v3591, 1.0
  %v3720 = vadd.f32 %v3592, 1.0
  %v3721 = vadd.f32 %v3593, 1.0
  %v3722 = vadd.f32 %v3594, 1.0
  %v3723 = vadd.f32 %v3595, 1.0
  %v3724 = vadd.f32 %v3596, 1.0
  %v3725 = vadd.f32 %v3597, 1.0
  %v3726 = vadd.f32 %v3598, 1.0
  %v3727 = vadd.f32 %v3599, 1.0
  %v3728 = vadd.f32 %v3600, 1.0
  %v3729 = vadd.f32 %v3601, 1.0
  %v3730 = vadd.f32 %v3602, 1.0
  %v3731 = vadd.f32 %v3603, 1.0
  %v3732 = vadd.f32 %v3604, 1.0
  %v3733 = vadd.f32 %v3605, 1.0
  %v3734 = vadd.f32 %v3606, 1.0
  %v3735 = vadd.f32 %v3607, 1.0
  %v3736 = vadd.f32 %v3608, 1.0
  %v3737 = vadd.f32 %v3609, 1.0
  %v3738 = vadd.f32 %v3610, 1.0
  %v3739 = vadd.f32 %v3611, 1.0
  %v3740 = vadd.f32 %v3612, 1.0
  %v3741 = vadd.f32 %v3613, 1.0
  %v3742 = vadd.f32 %v3614, 1.0
  %v3743 = vadd.f32 %v3615, 1.0
  %v3744 = vadd.f32 %v3616, 1.0
  %v3745 = vadd.f32 %v3617, 1.0
  %v3746 = vadd.f32 %v3618, 1.0
  %v3747 = vadd.f32 %v3619, 1.0
  %v3748 = vadd.f32 %v3620, 1.0
  %v3749 = vadd.f32 %v3621, 1.0
  %v3750 = vadd.f32 %v3622, 1.0
  %v3751 = vadd.f32 %v3623, 1.0
  %v3752 = vadd.f32 %v3624, 1.0
  %v3753 = vadd.f32 %v3625, 1.0
  %v3754 = vadd.f32 %v3626, 1.0
  %v3755 = vadd.f32 %v3627, 1.0
  %v3756 = vadd.f32 %v3628, 1.0
  %v3757 = vadd.f32 %v3629, 1.0
  %v3758 = vadd.f32 %v3630, 1.0
  %v3759 = vadd.f32 %v3631, 1.0
  %v3760 = vadd.f32 %v3632, 1.0
  %v3761 = vadd.f32 %v3633, 1.0
  %v3762 = vadd.f32 %v3634, 1.0
  %v3763 = vadd.f32 %v3635, 1.0
  %v3764 = vadd.f32 %v3636, 1.0
  %v3765 = vadd.f32 %v3637, 1.0
  %v3766 = vadd.f32 %v3638, 1.0
  %v3767 = vadd.f32 %v3639, 1.0
  %v3768 = vadd.f32 %v3640, 1.0
  %v3769 = vadd.f32 %v3641, 1.0
  %v3770 = vadd.f32 %v3642, 1.0
  %v3771 = vadd.f32 %v3643, 1.0
  %v3772 = vadd.f32 %v3644, 1.0
  %v3773 = vadd.f32 %v3645, 1.0
  %v3774 = vadd.f32 %v3646, 1.0
  %v3775 = vadd.f32 %v3647, 1.0
  %v3776 = vadd.f32 %v3648, 1.0
  %v3777 = vadd.f32 %v3649, 1.0
  %v3778 = vadd.f32 %v3650, 1.0
  %v3779 = vadd.f32 %v3651, 1.0
  %v3780 = vadd.f32 %v3652, 1.0
  %v3781 = vadd.f32 %v3653, 1.0
  %v3782 = vadd.f32 %v3654, 1.0
  %v3783 = vadd.f32 %v3655, 1.0
  %v3784 = vadd.f32 %v3656, 1.0
  %v3785 = vadd.f32 %v3657, 1.0
  %v3786 = vadd.f32 %v3658, 1.0
  %v3787 = vadd.f32 %v3659, 1.0
  %v3788 = vadd.f32 %v3660, 1.0
  %v3789 = vadd.f32 %v3661, 1.0
  %v3790 = vadd.f32 %v3662, 1.0
  %v3791 = vadd.f32 %v3663, 1.0
  %v3792 = vadd.f32 %v3664, 1.0
  %v3793 = vadd.f32 %v3665, 1.0
  %v3794 = vadd.f32 %v3666, 1.0
  %v3795 = vadd.f32 %v3667, 1.0
  %v3796 = vadd.f32 %v3668, 1.0
  %v3797 = vadd.f32 %v3669, 1.0
  %v3798 = vadd.f32 %v3670, 1.0
  %v3799 = vadd.f32 %v3671, 1.0
  %v3800 = vadd.f32 %v3672, 1.0
  %v3801 = vadd.f32 %v3673, 1.0
  %v3802 = vadd.f32 %v3674, 1.0
  %v3803 = vadd.f32 %v3675, 1.0
  %v3804 = vadd.f32 %v3676, 1.0
  %v3805 = vadd.f32 %v3677, 1.0
  %v3806 = vmul.f32 %v3294, %v3678
  %v3807 = vmul.f32 %v3295, %v3679
  %v3808 = vmul.f32 %v3296, %v3680
  %v3809 = vmul.f32 %v3297, %v3681
  %v3810 = vmul.f32 %v3298, %v3682
  %v3811 = vmul.f32 %v3299, %v3683
  %v3812 = vmul.f32 %v3300, %v3684
  %v3813 = vmul.f32 %v3301, %v3685
  %v3814 = vmul.f32 %v3302, %v3686
  %v3815 = vmul.f32 %v3303, %v3687
  %v3816 = vmul.f32 %v3304, %v3688
  %v3817 = vmul.f32 %v3305, %v3689
  %v3818 = vmul.f32 %v3306, %v3690
  %v3819 = vmul.f32 %v3307, %v3691
  %v3820 = vmul.f32 %v3308, %v3692
  %v3821 = vmul.f32 %v3309, %v3693
  %v3822 = vmul.f32 %v3310, %v3694
  %v3823 = vmul.f32 %v3311, %v3695
  %v3824 = vmul.f32 %v3312, %v3696
  %v3825 = vmul.f32 %v3313, %v3697
  %v3826 = vmul.f32 %v3314, %v3698
  %v3827 = vmul.f32 %v3315, %v3699
  %v3828 = vmul.f32 %v3316, %v3700
  %v3829 = vmul.f32 %v3317, %v3701
  %v3830 = vmul.f32 %v3318, %v3702
  %v3831 = vmul.f32 %v3319, %v3703
  %v3832 = vmul.f32 %v3320, %v3704
  %v3833 = vmul.f32 %v3321, %v3705
  %v3834 = vmul.f32 %v3322, %v3706
  %v3835 = vmul.f32 %v3323, %v3707
  %v3836 = vmul.f32 %v3324, %v3708
  %v3837 = vmul.f32 %v3325, %v3709
  %v3838 = vmul.f32 %v3326, %v3710
  %v3839 = vmul.f32 %v3327, %v3711
  %v3840 = vmul.f32 %v3328, %v3712
  %v3841 = vmul.f32 %v3329, %v3713
  %v3842 = vmul.f32 %v3330, %v3714
  %v3843 = vmul.f32 %v3331, %v3715
  %v3844 = vmul.f32 %v3332, %v3716
  %v3845 = vmul.f32 %v3333, %v3717
  %v3846 = vmul.f32 %v3334, %v3718
  %v3847 = vmul.f32 %v3335, %v3719
  %v3848 = vmul.f32 %v3336, %v3720
  %v3849 = vmul.f32 %v3337, %v3721
  %v3850 = vmul.f32 %v3338, %v3722
  %v3851 = vmul.f32 %v3339, %v3723
  %v3852 = vmul.f32 %v3340, %v3724
  %v3853 = vmul.f32 %v3341, %v3725
  %v3854 = vmul.f32 %v3342, %v3726
  %v3855 = vmul.f32 %v3343, %v3727
  %v3856 = vmul.f32 %v3344, %v3728
  %v3857 = vmul.f32 %v3345, %v3729
  %v3858 = vmul.f32 %v3346, %v3730
  %v3859 = vmul.f32 %v3347, %v3731
  %v3860 = vmul.f32 %v3348, %v3732
  %v3861 = vmul.f32 %v3349, %v3733
  %v3862 = vmul.f32 %v3350, %v3734
  %v3863 = vmul.f32 %v3351, %v3735
  %v3864 = vmul.f32 %v3352, %v3736
  %v3865 = vmul.f32 %v3353, %v3737
  %v3866 = vmul.f32 %v3354, %v3738
  %v3867 = vmul.f32 %v3355, %v3739
  %v3868 = vmul.f32 %v3356, %v3740
  %v3869 = vmul.f32 %v3357, %v3741
  %v3870 = vmul.f32 %v3358, %v3742
  %v3871 = vmul.f32 %v3359, %v3743
  %v3872 = vmul.f32 %v3360, %v3744
  %v3873 = vmul.f32 %v3361, %v3745
  %v3874 = vmul.f32 %v3362, %v3746
  %v3875 = vmul.f32 %v3363, %v3747
  %v3876 = vmul.f32 %v3364, %v3748
  %v3877 = vmul.f32 %v3365, %v3749
  %v3878 = vmul.f32 %v3366, %v3750
  %v3879 = vmul.f32 %v3367, %v3751
  %v3880 = vmul.f32 %v3368, %v3752
  %v3881 = vmul.f32 %v3369, %v3753
  %v3882 = vmul.f32 %v3370, %v3754
  %v3883 = vmul.f32 %v3371, %v3755
  %v3884 = vmul.f32 %v3372, %v3756
  %v3885 = vmul.f32 %v3373, %v3757
  %v3886 = vmul.f32 %v3374, %v3758
  %v3887 = vmul.f32 %v3375, %v3759
  %v3888 = vmul.f32 %v3376, %v3760
  %v3889 = vmul.f32 %v3377, %v3761
  %v3890 = vmul.f32 %v3378, %v3762
  %v3891 = vmul.f32 %v3379, %v3763
  %v3892 = vmul.f32 %v3380, %v3764
  %v3893 = vmul.f32 %v3381, %v3765
  %v3894 = vmul.f32 %v3382, %v3766
  %v3895 = vmul.f32 %v3383, %v3767
  %v3896 = vmul.f32 %v3384, %v3768
  %v3897 = vmul.f32 %v3385, %v3769
  %v3898 = vmul.f32 %v3386, %v3770
  %v3899 = vmul.f32 %v3387, %v3771
  %v3900 = vmul.f32 %v3388, %v3772
  %v3901 = vmul.f32 %v3389, %v3773
  %v3902 = vmul.f32 %v3390, %v3774
  %v3903 = vmul.f32 %v3391, %v3775
  %v3904 = vmul.f32 %v3392, %v3776
  %v3905 = vmul.f32 %v3393, %v3777
  %v3906 = vmul.f32 %v3394, %v3778
  %v3907 = vmul.f32 %v3395, %v3779
  %v3908 = vmul.f32 %v3396, %v3780
  %v3909 = vmul.f32 %v3397, %v3781
  %v3910 = vmul.f32 %v3398, %v3782
  %v3911 = vmul.f32 %v3399, %v3783
  %v3912 = vmul.f32 %v3400, %v3784
  %v3913 = vmul.f32 %v3401, %v3785
  %v3914 = vmul.f32 %v3402, %v3786
  %v3915 = vmul.f32 %v3403, %v3787
  %v3916 = vmul.f32 %v3404, %v3788
  %v3917 = vmul.f32 %v3405, %v3789
  %v3918 = vmul.f32 %v3406, %v3790
  %v3919 = vmul.f32 %v3407, %v3791
  %v3920 = vmul.f32 %v3408, %v3792
  %v3921 = vmul.f32 %v3409, %v3793
  %v3922 = vmul.f32 %v3410, %v3794
  %v3923 = vmul.f32 %v3411, %v3795
  %v3924 = vmul.f32 %v3412, %v3796
  %v3925 = vmul.f32 %v3413, %v3797
  %v3926 = vmul.f32 %v3414, %v3798
  %v3927 = vmul.f32 %v3415, %v3799
  %v3928 = vmul.f32 %v3416, %v3800
  %v3929 = vmul.f32 %v3417, %v3801
  %v3930 = vmul.f32 %v3418, %v3802
  %v3931 = vmul.f32 %v3419, %v3803
  %v3932 = vmul.f32 %v3420, %v3804
  %v3933 = vmul.f32 %v3421, %v3805
  %v3934 = vpack.c.bf16 %v3810, %v3806
  %v3935 = vpack.c.bf16 %v3811, %v3807
  %v3936 = vpack.c.bf16 %v3812, %v3808
  %v3937 = vpack.c.bf16 %v3813, %v3809
  %v3938 = vpack.c.bf16 %v3818, %v3814
  %v3939 = vpack.c.bf16 %v3819, %v3815
  %v3940 = vpack.c.bf16 %v3820, %v3816
  %v3941 = vpack.c.bf16 %v3821, %v3817
  %v3942 = vpack.c.bf16 %v3826, %v3822
  %v3943 = vpack.c.bf16 %v3827, %v3823
  %v3944 = vpack.c.bf16 %v3828, %v3824
  %v3945 = vpack.c.bf16 %v3829, %v3825
  %v3946 = vpack.c.bf16 %v3834, %v3830
  %v3947 = vpack.c.bf16 %v3835, %v3831
  %v3948 = vpack.c.bf16 %v3836, %v3832
  %v3949 = vpack.c.bf16 %v3837, %v3833
  %v3950 = vpack.c.bf16 %v3842, %v3838
  %v3951 = vpack.c.bf16 %v3843, %v3839
  %v3952 = vpack.c.bf16 %v3844, %v3840
  %v3953 = vpack.c.bf16 %v3845, %v3841
  %v3954 = vpack.c.bf16 %v3850, %v3846
  %v3955 = vpack.c.bf16 %v3851, %v3847
  %v3956 = vpack.c.bf16 %v3852, %v3848
  %v3957 = vpack.c.bf16 %v3853, %v3849
  %v3958 = vpack.c.bf16 %v3858, %v3854
  %v3959 = vpack.c.bf16 %v3859, %v3855
  %v3960 = vpack.c.bf16 %v3860, %v3856
  %v3961 = vpack.c.bf16 %v3861, %v3857
  %v3962 = vpack.c.bf16 %v3866, %v3862
  %v3963 = vpack.c.bf16 %v3867, %v3863
  %v3964 = vpack.c.bf16 %v3868, %v3864
  %v3965 = vpack.c.bf16 %v3869, %v3865
  %v3966 = vpack.c.bf16 %v3874, %v3870
  %v3967 = vpack.c.bf16 %v3875, %v3871
  %v3968 = vpack.c.bf16 %v3876, %v3872
  %v3969 = vpack.c.bf16 %v3877, %v3873
  %v3970 = vpack.c.bf16 %v3882, %v3878
  %v3971 = vpack.c.bf16 %v3883, %v3879
  %v3972 = vpack.c.bf16 %v3884, %v3880
  %v3973 = vpack.c.bf16 %v3885, %v3881
  %v3974 = vpack.c.bf16 %v3890, %v3886
  %v3975 = vpack.c.bf16 %v3891, %v3887
  %v3976 = vpack.c.bf16 %v3892, %v3888
  %v3977 = vpack.c.bf16 %v3893, %v3889
  %v3978 = vpack.c.bf16 %v3898, %v3894
  %v3979 = vpack.c.bf16 %v3899, %v3895
  %v3980 = vpack.c.bf16 %v3900, %v3896
  %v3981 = vpack.c.bf16 %v3901, %v3897
  %v3982 = vpack.c.bf16 %v3906, %v3902
  %v3983 = vpack.c.bf16 %v3907, %v3903
  %v3984 = vpack.c.bf16 %v3908, %v3904
  %v3985 = vpack.c.bf16 %v3909, %v3905
  %v3986 = vpack.c.bf16 %v3914, %v3910
  %v3987 = vpack.c.bf16 %v3915, %v3911
  %v3988 = vpack.c.bf16 %v3916, %v3912
  %v3989 = vpack.c.bf16 %v3917, %v3913
  %v3990 = vpack.c.bf16 %v3922, %v3918
  %v3991 = vpack.c.bf16 %v3923, %v3919
  %v3992 = vpack.c.bf16 %v3924, %v3920
  %v3993 = vpack.c.bf16 %v3925, %v3921
  %v3994 = vpack.c.bf16 %v3930, %v3926
  %v3995 = vpack.c.bf16 %v3931, %v3927
  %v3996 = vpack.c.bf16 %v3932, %v3928
  %v3997 = vpack.c.bf16 %v3933, %v3929
  %v3998 = vld [vmem:[%s11] sm:$0xff]
  %v3999 = vld [vmem:[%s11 + $0x8] sm:$0xff]
  %v4000 = vld [vmem:[%s11 + $0x10] sm:$0xff]
  %v4001 = vld [vmem:[%s11 + $0x18] sm:$0xff]
  %v4002 = vld [vmem:[%s11 + $0x20] sm:$0xff]
  %v4003 = vld [vmem:[%s11 + $0x28] sm:$0xff]
  %v4004 = vld [vmem:[%s11 + $0x30] sm:$0xff]
  %v4005 = vld [vmem:[%s11 + $0x38] sm:$0xff]
  %v4006 = vld [vmem:[%s11 + $0x40] sm:$0xff]
  %v4007 = vld [vmem:[%s11 + $0x48] sm:$0xff]
  %v4008 = vld [vmem:[%s11 + $0x50] sm:$0xff]
  %v4009 = vld [vmem:[%s11 + $0x58] sm:$0xff]
  %v4010 = vld [vmem:[%s11 + $0x60] sm:$0xff]
  %v4011 = vld [vmem:[%s11 + $0x68] sm:$0xff]
  %v4012 = vld [vmem:[%s11 + $0x70] sm:$0xff]
  %v4013 = vld [vmem:[%s11 + $0x78] sm:$0xff]
  %v4014 = vld [vmem:[%s11 + $0x80] sm:$0xff]
  %v4015 = vld [vmem:[%s11 + $0x88] sm:$0xff]
  %v4016 = vld [vmem:[%s11 + $0x90] sm:$0xff]
  %v4017 = vld [vmem:[%s11 + $0x98] sm:$0xff]
  %v4018 = vld [vmem:[%s11 + $0xa0] sm:$0xff]
  %v4019 = vld [vmem:[%s11 + $0xa8] sm:$0xff]
  %v4020 = vld [vmem:[%s11 + $0xb0] sm:$0xff]
  %v4021 = vld [vmem:[%s11 + $0xb8] sm:$0xff]
  %v4022 = vld [vmem:[%s11 + $0xc0] sm:$0xff]
  %v4023 = vld [vmem:[%s11 + $0xc8] sm:$0xff]
  %v4024 = vld [vmem:[%s11 + $0xd0] sm:$0xff]
  %v4025 = vld [vmem:[%s11 + $0xd8] sm:$0xff]
  %v4026 = vld [vmem:[%s11 + $0xe0] sm:$0xff]
  %v4027 = vld [vmem:[%s11 + $0xe8] sm:$0xff]
  %v4028 = vld [vmem:[%s11 + $0xf0] sm:$0xff]
  %v4029 = vld [vmem:[%s11 + $0xf8] sm:$0xff]
  %v4030 = vld [vmem:[%s12] sm:$0xff]
  %v4031 = vld [vmem:[%s12 + $0x8] sm:$0xff]
  %v4032 = vld [vmem:[%s12 + $0x10] sm:$0xff]
  %v4033 = vld [vmem:[%s12 + $0x18] sm:$0xff]
  %v4034 = vld [vmem:[%s12 + $0x20] sm:$0xff]
  %v4035 = vld [vmem:[%s12 + $0x28] sm:$0xff]
  %v4036 = vld [vmem:[%s12 + $0x30] sm:$0xff]
  %v4037 = vld [vmem:[%s12 + $0x38] sm:$0xff]
  %v4038 = vld [vmem:[%s12 + $0x40] sm:$0xff]
  %v4039 = vld [vmem:[%s12 + $0x48] sm:$0xff]
  %v4040 = vld [vmem:[%s12 + $0x50] sm:$0xff]
  %v4041 = vld [vmem:[%s12 + $0x58] sm:$0xff]
  %v4042 = vld [vmem:[%s12 + $0x60] sm:$0xff]
  %v4043 = vld [vmem:[%s12 + $0x68] sm:$0xff]
  %v4044 = vld [vmem:[%s12 + $0x70] sm:$0xff]
  %v4045 = vld [vmem:[%s12 + $0x78] sm:$0xff]
  %v4046 = vld [vmem:[%s12 + $0x80] sm:$0xff]
  %v4047 = vld [vmem:[%s12 + $0x88] sm:$0xff]
  %v4048 = vld [vmem:[%s12 + $0x90] sm:$0xff]
  %v4049 = vld [vmem:[%s12 + $0x98] sm:$0xff]
  %v4050 = vld [vmem:[%s12 + $0xa0] sm:$0xff]
  %v4051 = vld [vmem:[%s12 + $0xa8] sm:$0xff]
  %v4052 = vld [vmem:[%s12 + $0xb0] sm:$0xff]
  %v4053 = vld [vmem:[%s12 + $0xb8] sm:$0xff]
  %v4054 = vld [vmem:[%s12 + $0xc0] sm:$0xff]
  %v4055 = vld [vmem:[%s12 + $0xc8] sm:$0xff]
  %v4056 = vld [vmem:[%s12 + $0xd0] sm:$0xff]
  %v4057 = vld [vmem:[%s12 + $0xd8] sm:$0xff]
  %v4058 = vld [vmem:[%s12 + $0xe0] sm:$0xff]
  %v4059 = vld [vmem:[%s12 + $0xe8] sm:$0xff]
  %v4060 = vld [vmem:[%s12 + $0xf0] sm:$0xff]
  %v4061 = vld [vmem:[%s12 + $0xf8] sm:$0xff]
  %4063 = vset.pattern.permute.xlu0 0
  %4064 = vperm.xlu0 %4063, %v4030
  %v4065 = vpop.permute.xlu0 %4064
  %4068 = vset.pattern.permute.xlu0 0
  %4069 = vperm.xlu0 %4068, %v4031
  %v4070 = vpop.permute.xlu0 %4069
  %4073 = vset.pattern.permute.xlu0 0
  %4074 = vperm.xlu0 %4073, %v4032
  %v4075 = vpop.permute.xlu0 %4074
  %4078 = vset.pattern.permute.xlu0 0
  %4079 = vperm.xlu0 %4078, %v4033
  %v4080 = vpop.permute.xlu0 %4079
  %4083 = vset.pattern.permute.xlu0 0
  %4084 = vperm.xlu0 %4083, %v4034
  %v4085 = vpop.permute.xlu0 %4084
  %4088 = vset.pattern.permute.xlu0 0
  %4089 = vperm.xlu0 %4088, %v4035
  %v4090 = vpop.permute.xlu0 %4089
  %4093 = vset.pattern.permute.xlu0 0
  %4094 = vperm.xlu0 %4093, %v4036
  %v4095 = vpop.permute.xlu0 %4094
  %4098 = vset.pattern.permute.xlu0 0
  %4099 = vperm.xlu0 %4098, %v4037
  %v4100 = vpop.permute.xlu0 %4099
  %4103 = vset.pattern.permute.xlu0 0
  %4104 = vperm.xlu0 %4103, %v4038
  %v4105 = vpop.permute.xlu0 %4104
  %4108 = vset.pattern.permute.xlu0 0
  %4109 = vperm.xlu0 %4108, %v4039
  %v4110 = vpop.permute.xlu0 %4109
  %4113 = vset.pattern.permute.xlu0 0
  %4114 = vperm.xlu0 %4113, %v4040
  %v4115 = vpop.permute.xlu0 %4114
  %4118 = vset.pattern.permute.xlu0 0
  %4119 = vperm.xlu0 %4118, %v4041
  %v4120 = vpop.permute.xlu0 %4119
  %4123 = vset.pattern.permute.xlu0 0
  %4124 = vperm.xlu0 %4123, %v4042
  %v4125 = vpop.permute.xlu0 %4124
  %4128 = vset.pattern.permute.xlu0 0
  %4129 = vperm.xlu0 %4128, %v4043
  %v4130 = vpop.permute.xlu0 %4129
  %4133 = vset.pattern.permute.xlu0 0
  %4134 = vperm.xlu0 %4133, %v4044
  %v4135 = vpop.permute.xlu0 %4134
  %4138 = vset.pattern.permute.xlu0 0
  %4139 = vperm.xlu0 %4138, %v4045
  %v4140 = vpop.permute.xlu0 %4139
  %4143 = vset.pattern.permute.xlu0 0
  %4144 = vperm.xlu0 %4143, %v4046
  %v4145 = vpop.permute.xlu0 %4144
  %4148 = vset.pattern.permute.xlu0 0
  %4149 = vperm.xlu0 %4148, %v4047
  %v4150 = vpop.permute.xlu0 %4149
  %4153 = vset.pattern.permute.xlu0 0
  %4154 = vperm.xlu0 %4153, %v4048
  %v4155 = vpop.permute.xlu0 %4154
  %4158 = vset.pattern.permute.xlu0 0
  %4159 = vperm.xlu0 %4158, %v4049
  %v4160 = vpop.permute.xlu0 %4159
  %4163 = vset.pattern.permute.xlu0 0
  %4164 = vperm.xlu0 %4163, %v4050
  %v4165 = vpop.permute.xlu0 %4164
  %4168 = vset.pattern.permute.xlu0 0
  %4169 = vperm.xlu0 %4168, %v4051
  %v4170 = vpop.permute.xlu0 %4169
  %4173 = vset.pattern.permute.xlu0 0
  %4174 = vperm.xlu0 %4173, %v4052
  %v4175 = vpop.permute.xlu0 %4174
  %4178 = vset.pattern.permute.xlu0 0
  %4179 = vperm.xlu0 %4178, %v4053
  %v4180 = vpop.permute.xlu0 %4179
  %4183 = vset.pattern.permute.xlu0 0
  %4184 = vperm.xlu0 %4183, %v4054
  %v4185 = vpop.permute.xlu0 %4184
  %4188 = vset.pattern.permute.xlu0 0
  %4189 = vperm.xlu0 %4188, %v4055
  %v4190 = vpop.permute.xlu0 %4189
  %4193 = vset.pattern.permute.xlu0 0
  %4194 = vperm.xlu0 %4193, %v4056
  %v4195 = vpop.permute.xlu0 %4194
  %4198 = vset.pattern.permute.xlu0 0
  %4199 = vperm.xlu0 %4198, %v4057
  %v4200 = vpop.permute.xlu0 %4199
  %4203 = vset.pattern.permute.xlu0 0
  %4204 = vperm.xlu0 %4203, %v4058
  %v4205 = vpop.permute.xlu0 %4204
  %4208 = vset.pattern.permute.xlu0 0
  %4209 = vperm.xlu0 %4208, %v4059
  %v4210 = vpop.permute.xlu0 %4209
  %4213 = vset.pattern.permute.xlu0 0
  %4214 = vperm.xlu0 %4213, %v4060
  %v4215 = vpop.permute.xlu0 %4214
  %4218 = vset.pattern.permute.xlu0 0
  %4219 = vperm.xlu0 %4218, %v4061
  %v4220 = vpop.permute.xlu0 %4219
  %v4254 = vunpack.c.l.b16 %v3998
  %v4255 = vunpack.c.h.b16 %v3998
  %v4256 = vunpack.c.l.b16 %v3999
  %v4257 = vunpack.c.h.b16 %v3999
  %v4258 = vunpack.c.l.b16 %v4000
  %v4259 = vunpack.c.h.b16 %v4000
  %v4260 = vunpack.c.l.b16 %v4001
  %v4261 = vunpack.c.h.b16 %v4001
  %v4262 = vunpack.c.l.b16 %v4002
  %v4263 = vunpack.c.h.b16 %v4002
  %v4264 = vunpack.c.l.b16 %v4003
  %v4265 = vunpack.c.h.b16 %v4003
  %v4266 = vunpack.c.l.b16 %v4004
  %v4267 = vunpack.c.h.b16 %v4004
  %v4268 = vunpack.c.l.b16 %v4005
  %v4269 = vunpack.c.h.b16 %v4005
  %v4270 = vunpack.c.l.b16 %v4006
  %v4271 = vunpack.c.h.b16 %v4006
  %v4272 = vunpack.c.l.b16 %v4007
  %v4273 = vunpack.c.h.b16 %v4007
  %v4274 = vunpack.c.l.b16 %v4008
  %v4275 = vunpack.c.h.b16 %v4008
  %v4276 = vunpack.c.l.b16 %v4009
  %v4277 = vunpack.c.h.b16 %v4009
  %v4278 = vunpack.c.l.b16 %v4010
  %v4279 = vunpack.c.h.b16 %v4010
  %v4280 = vunpack.c.l.b16 %v4011
  %v4281 = vunpack.c.h.b16 %v4011
  %v4282 = vunpack.c.l.b16 %v4012
  %v4283 = vunpack.c.h.b16 %v4012
  %v4284 = vunpack.c.l.b16 %v4013
  %v4285 = vunpack.c.h.b16 %v4013
  %v4286 = vunpack.c.l.b16 %v4014
  %v4287 = vunpack.c.h.b16 %v4014
  %v4288 = vunpack.c.l.b16 %v4015
  %v4289 = vunpack.c.h.b16 %v4015
  %v4290 = vunpack.c.l.b16 %v4016
  %v4291 = vunpack.c.h.b16 %v4016
  %v4292 = vunpack.c.l.b16 %v4017
  %v4293 = vunpack.c.h.b16 %v4017
  %v4294 = vunpack.c.l.b16 %v4018
  %v4295 = vunpack.c.h.b16 %v4018
  %v4296 = vunpack.c.l.b16 %v4019
  %v4297 = vunpack.c.h.b16 %v4019
  %v4298 = vunpack.c.l.b16 %v4020
  %v4299 = vunpack.c.h.b16 %v4020
  %v4300 = vunpack.c.l.b16 %v4021
  %v4301 = vunpack.c.h.b16 %v4021
  %v4302 = vunpack.c.l.b16 %v4022
  %v4303 = vunpack.c.h.b16 %v4022
  %v4304 = vunpack.c.l.b16 %v4023
  %v4305 = vunpack.c.h.b16 %v4023
  %v4306 = vunpack.c.l.b16 %v4024
  %v4307 = vunpack.c.h.b16 %v4024
  %v4308 = vunpack.c.l.b16 %v4025
  %v4309 = vunpack.c.h.b16 %v4025
  %v4310 = vunpack.c.l.b16 %v4026
  %v4311 = vunpack.c.h.b16 %v4026
  %v4312 = vunpack.c.l.b16 %v4027
  %v4313 = vunpack.c.h.b16 %v4027
  %v4314 = vunpack.c.l.b16 %v4028
  %v4315 = vunpack.c.h.b16 %v4028
  %v4316 = vunpack.c.l.b16 %v4029
  %v4317 = vunpack.c.h.b16 %v4029
  %v4318 = vpack.c.b16 %v4256, %v4254
  %v4319 = vpack.c.b16 %v4257, %v4255
  %v4320 = vpack.c.b16 %v4260, %v4258
  %v4321 = vpack.c.b16 %v4261, %v4259
  %v4322 = vpack.c.b16 %v4264, %v4262
  %v4323 = vpack.c.b16 %v4265, %v4263
  %v4324 = vpack.c.b16 %v4268, %v4266
  %v4325 = vpack.c.b16 %v4269, %v4267
  %v4326 = vpack.c.b16 %v4272, %v4270
  %v4327 = vpack.c.b16 %v4273, %v4271
  %v4328 = vpack.c.b16 %v4276, %v4274
  %v4329 = vpack.c.b16 %v4277, %v4275
  %v4330 = vpack.c.b16 %v4280, %v4278
  %v4331 = vpack.c.b16 %v4281, %v4279
  %v4332 = vpack.c.b16 %v4284, %v4282
  %v4333 = vpack.c.b16 %v4285, %v4283
  %v4334 = vpack.c.b16 %v4288, %v4286
  %v4335 = vpack.c.b16 %v4289, %v4287
  %v4336 = vpack.c.b16 %v4292, %v4290
  %v4337 = vpack.c.b16 %v4293, %v4291
  %v4338 = vpack.c.b16 %v4296, %v4294
  %v4339 = vpack.c.b16 %v4297, %v4295
  %v4340 = vpack.c.b16 %v4300, %v4298
  %v4341 = vpack.c.b16 %v4301, %v4299
  %v4342 = vpack.c.b16 %v4304, %v4302
  %v4343 = vpack.c.b16 %v4305, %v4303
  %v4344 = vpack.c.b16 %v4308, %v4306
  %v4345 = vpack.c.b16 %v4309, %v4307
  %v4346 = vpack.c.b16 %v4312, %v4310
  %v4347 = vpack.c.b16 %v4313, %v4311
  %v4348 = vpack.c.b16 %v4316, %v4314
  %v4349 = vpack.c.b16 %v4317, %v4315
  %4382 = vmatprep.subr.bf16.mxu0 %v3935
  %4383 = vmatpush1.bf16.msra.mxu0 %v3934
  %4384 = vmatprep.subr.bf16.mxu0 %v3939
  %4385 = vmatpush1.bf16.msra.mxu0 %v3938
  %4386 = vmatprep.subr.bf16.mxu0 %v3943
  %4387 = vmatpush1.bf16.msra.mxu0 %v3942
  %4388 = vmatprep.subr.bf16.mxu0 %v3947
  %4389 = vmatpush1.bf16.msra.mxu0 %v3946
  %4390 = vmatprep.subr.bf16.mxu0 %v3951
  %4391 = vmatpush1.bf16.msra.mxu0 %v3950
  %4392 = vmatprep.subr.bf16.mxu0 %v3955
  %4393 = vmatpush1.bf16.msra.mxu0 %v3954
  %4394 = vmatprep.subr.bf16.mxu0 %v3959
  %4395 = vmatpush1.bf16.msra.mxu0 %v3958
  %4396 = vmatprep.subr.bf16.mxu0 %v3963
  %4397 = vmatpush1.bf16.msra.mxu0 %v3962
  %4398 = vmatprep.subr.bf16.mxu0 %v3967
  %4399 = vmatpush1.bf16.msra.mxu0 %v3966
  %4400 = vmatprep.subr.bf16.mxu0 %v3971
  %4401 = vmatpush1.bf16.msra.mxu0 %v3970
  %4402 = vmatprep.subr.bf16.mxu0 %v3975
  %4403 = vmatpush1.bf16.msra.mxu0 %v3974
  %4404 = vmatprep.subr.bf16.mxu0 %v3979
  %4405 = vmatpush1.bf16.msra.mxu0 %v3978
  %4406 = vmatprep.subr.bf16.mxu0 %v3983
  %4407 = vmatpush1.bf16.msra.mxu0 %v3982
  %4408 = vmatprep.subr.bf16.mxu0 %v3987
  %4409 = vmatpush1.bf16.msra.mxu0 %v3986
  %4410 = vmatprep.subr.bf16.mxu0 %v3991
  %4411 = vmatpush1.bf16.msra.mxu0 %v3990
  %4412 = vmatprep.subr.bf16.mxu0 %v3995
  %4413 = vmatpush1.bf16.msra.mxu0 %v3994
  %4414 = vmatprep.mubr.bf16.mxu0 %v4319
  %4415 = vmatmul.mubr.bf16.gmra.mrb[0].mxu0 %v4318
  %v4416 = vpop.f32.mrb[0].mxu0
  %v4417 = vadd.f32 %v4065, %v4416
  %v4418 = vpop.f32.mrb[0].mxu0
  %v4419 = vadd.f32 %v4065, %v4418
  %v4420 = vpop.f32.mrb[0].mxu0
  %v4421 = vadd.f32 %v4070, %v4420
  %v4422 = vpop.f32.mrb[0].mxu0
  %v4423 = vadd.f32 %v4070, %v4422
  %4424 = vmatprep.mubr.bf16.mxu0 %v4321
  %4425 = vmatmul.mubr.bf16.gmra.mrb[0].mxu0 %v4320
  %v4426 = vpop.f32.mrb[0].mxu0
  %v4427 = vadd.f32 %v4075, %v4426
  %v4428 = vpop.f32.mrb[0].mxu0
  %v4429 = vadd.f32 %v4075, %v4428
  %v4430 = vpop.f32.mrb[0].mxu0
  %v4431 = vadd.f32 %v4080, %v4430
  %v4432 = vpop.f32.mrb[0].mxu0
  %v4433 = vadd.f32 %v4080, %v4432
  %4434 = vmatprep.mubr.bf16.mxu0 %v4323
  %4435 = vmatmul.mubr.bf16.gmra.mrb[0].mxu0 %v4322
  %v4436 = vpop.f32.mrb[0].mxu0
  %v4437 = vadd.f32 %v4085, %v4436
  %v4438 = vpop.f32.mrb[0].mxu0
  %v4439 = vadd.f32 %v4085, %v4438
  %v4440 = vpop.f32.mrb[0].mxu0
  %v4441 = vadd.f32 %v4090, %v4440
  %v4442 = vpop.f32.mrb[0].mxu0
  %v4443 = vadd.f32 %v4090, %v4442
  %4444 = vmatprep.mubr.bf16.mxu0 %v4325
  %4445 = vmatmul.mubr.bf16.gmra.mrb[0].mxu0 %v4324
  %v4446 = vpop.f32.mrb[0].mxu0
  %v4447 = vadd.f32 %v4095, %v4446
  %v4448 = vpop.f32.mrb[0].mxu0
  %v4449 = vadd.f32 %v4095, %v4448
  %v4450 = vpop.f32.mrb[0].mxu0
  %v4451 = vadd.f32 %v4100, %v4450
  %v4452 = vpop.f32.mrb[0].mxu0
  %v4453 = vadd.f32 %v4100, %v4452
  %4454 = vmatprep.mubr.bf16.mxu0 %v4327
  %4455 = vmatmul.mubr.bf16.gmra.mrb[0].mxu0 %v4326
  %v4456 = vpop.f32.mrb[0].mxu0
  %v4457 = vadd.f32 %v4105, %v4456
  %v4458 = vpop.f32.mrb[0].mxu0
  %v4459 = vadd.f32 %v4105, %v4458
  %v4460 = vpop.f32.mrb[0].mxu0
  %v4461 = vadd.f32 %v4110, %v4460
  %v4462 = vpop.f32.mrb[0].mxu0
  %v4463 = vadd.f32 %v4110, %v4462
  %4464 = vmatprep.mubr.bf16.mxu0 %v4329
  %4465 = vmatmul.mubr.bf16.gmra.mrb[0].mxu0 %v4328
  %v4466 = vpop.f32.mrb[0].mxu0
  %v4467 = vadd.f32 %v4115, %v4466
  %v4468 = vpop.f32.mrb[0].mxu0
  %v4469 = vadd.f32 %v4115, %v4468
  %v4470 = vpop.f32.mrb[0].mxu0
  %v4471 = vadd.f32 %v4120, %v4470
  %v4472 = vpop.f32.mrb[0].mxu0
  %v4473 = vadd.f32 %v4120, %v4472
  %4474 = vmatprep.mubr.bf16.mxu0 %v4331
  %4475 = vmatmul.mubr.bf16.gmra.mrb[0].mxu0 %v4330
  %v4476 = vpop.f32.mrb[0].mxu0
  %v4477 = vadd.f32 %v4125, %v4476
  %v4478 = vpop.f32.mrb[0].mxu0
  %v4479 = vadd.f32 %v4125, %v4478
  %v4480 = vpop.f32.mrb[0].mxu0
  %v4481 = vadd.f32 %v4130, %v4480
  %v4482 = vpop.f32.mrb[0].mxu0
  %v4483 = vadd.f32 %v4130, %v4482
  %4484 = vmatprep.mubr.bf16.mxu0 %v4333
  %4485 = vmatmul.mubr.bf16.gmra.mrb[0].mxu0 %v4332
  %v4486 = vpop.f32.mrb[0].mxu0
  %v4487 = vadd.f32 %v4135, %v4486
  %v4488 = vpop.f32.mrb[0].mxu0
  %v4489 = vadd.f32 %v4135, %v4488
  %v4490 = vpop.f32.mrb[0].mxu0
  %v4491 = vadd.f32 %v4140, %v4490
  %v4492 = vpop.f32.mrb[0].mxu0
  %v4493 = vadd.f32 %v4140, %v4492
  %4494 = vmatprep.mubr.bf16.mxu0 %v4335
  %4495 = vmatmul.mubr.bf16.gmra.mrb[0].mxu0 %v4334
  %v4496 = vpop.f32.mrb[0].mxu0
  %v4497 = vadd.f32 %v4145, %v4496
  %v4498 = vpop.f32.mrb[0].mxu0
  %v4499 = vadd.f32 %v4145, %v4498
  %v4500 = vpop.f32.mrb[0].mxu0
  %v4501 = vadd.f32 %v4150, %v4500
  %v4502 = vpop.f32.mrb[0].mxu0
  %v4503 = vadd.f32 %v4150, %v4502
  %4504 = vmatprep.mubr.bf16.mxu0 %v4337
  %4505 = vmatmul.mubr.bf16.gmra.mrb[0].mxu0 %v4336
  %v4506 = vpop.f32.mrb[0].mxu0
  %v4507 = vadd.f32 %v4155, %v4506
  %v4508 = vpop.f32.mrb[0].mxu0
  %v4509 = vadd.f32 %v4155, %v4508
  %v4510 = vpop.f32.mrb[0].mxu0
  %v4511 = vadd.f32 %v4160, %v4510
  %v4512 = vpop.f32.mrb[0].mxu0
  %v4513 = vadd.f32 %v4160, %v4512
  %4514 = vmatprep.mubr.bf16.mxu0 %v4339
  %4515 = vmatmul.mubr.bf16.gmra.mrb[0].mxu0 %v4338
  %v4516 = vpop.f32.mrb[0].mxu0
  %v4517 = vadd.f32 %v4165, %v4516
  %v4518 = vpop.f32.mrb[0].mxu0
  %v4519 = vadd.f32 %v4165, %v4518
  %v4520 = vpop.f32.mrb[0].mxu0
  %v4521 = vadd.f32 %v4170, %v4520
  %v4522 = vpop.f32.mrb[0].mxu0
  %v4523 = vadd.f32 %v4170, %v4522
  %4524 = vmatprep.mubr.bf16.mxu0 %v4341
  %4525 = vmatmul.mubr.bf16.gmra.mrb[0].mxu0 %v4340
  %v4526 = vpop.f32.mrb[0].mxu0
  %v4527 = vadd.f32 %v4175, %v4526
  %v4528 = vpop.f32.mrb[0].mxu0
  %v4529 = vadd.f32 %v4175, %v4528
  %v4530 = vpop.f32.mrb[0].mxu0
  %v4531 = vadd.f32 %v4180, %v4530
  %v4532 = vpop.f32.mrb[0].mxu0
  %v4533 = vadd.f32 %v4180, %v4532
  %4534 = vmatprep.mubr.bf16.mxu0 %v4343
  %4535 = vmatmul.mubr.bf16.gmra.mrb[0].mxu0 %v4342
  %v4536 = vpop.f32.mrb[0].mxu0
  %v4537 = vadd.f32 %v4185, %v4536
  %v4538 = vpop.f32.mrb[0].mxu0
  %v4539 = vadd.f32 %v4185, %v4538
  %v4540 = vpop.f32.mrb[0].mxu0
  %v4541 = vadd.f32 %v4190, %v4540
  %v4542 = vpop.f32.mrb[0].mxu0
  %v4543 = vadd.f32 %v4190, %v4542
  %4544 = vmatprep.mubr.bf16.mxu0 %v4345
  %4545 = vmatmul.mubr.bf16.gmra.mrb[0].mxu0 %v4344
  %v4546 = vpop.f32.mrb[0].mxu0
  %v4547 = vadd.f32 %v4195, %v4546
  %v4548 = vpop.f32.mrb[0].mxu0
  %v4549 = vadd.f32 %v4195, %v4548
  %v4550 = vpop.f32.mrb[0].mxu0
  %v4551 = vadd.f32 %v4200, %v4550
  %v4552 = vpop.f32.mrb[0].mxu0
  %v4553 = vadd.f32 %v4200, %v4552
  %4554 = vmatprep.mubr.bf16.mxu0 %v4347
  %4555 = vmatmul.mubr.bf16.gmra.mrb[0].mxu0 %v4346
  %v4556 = vpop.f32.mrb[0].mxu0
  %v4557 = vadd.f32 %v4205, %v4556
  %v4558 = vpop.f32.mrb[0].mxu0
  %v4559 = vadd.f32 %v4205, %v4558
  %v4560 = vpop.f32.mrb[0].mxu0
  %v4561 = vadd.f32 %v4210, %v4560
  %v4562 = vpop.f32.mrb[0].mxu0
  %v4563 = vadd.f32 %v4210, %v4562
  %4564 = vmatprep.mubr.bf16.mxu0 %v4349
  %4565 = vmatmul.mubr.bf16.gmra.mrb[0].mxu0 %v4348
  %v4566 = vpop.f32.mrb[0].mxu0
  %v4567 = vadd.f32 %v4215, %v4566
  %v4568 = vpop.f32.mrb[0].mxu0
  %v4569 = vadd.f32 %v4215, %v4568
  %v4570 = vpop.f32.mrb[0].mxu0
  %v4571 = vadd.f32 %v4220, %v4570
  %v4572 = vpop.f32.mrb[0].mxu0
  %v4573 = vadd.f32 %v4220, %v4572
  %4574 = vdwg.mxu0
  %4575 = vmatprep.subr.bf16.mxu0 %v3937
  %4576 = vmatpush1.bf16.msra.mxu0 %v3936
  %4577 = vmatprep.subr.bf16.mxu0 %v3941
  %4578 = vmatpush1.bf16.msra.mxu0 %v3940
  %4579 = vmatprep.subr.bf16.mxu0 %v3945
  %4580 = vmatpush1.bf16.msra.mxu0 %v3944
  %4581 = vmatprep.subr.bf16.mxu0 %v3949
  %4582 = vmatpush1.bf16.msra.mxu0 %v3948
  %4583 = vmatprep.subr.bf16.mxu0 %v3953
  %4584 = vmatpush1.bf16.msra.mxu0 %v3952
  %4585 = vmatprep.subr.bf16.mxu0 %v3957
  %4586 = vmatpush1.bf16.msra.mxu0 %v3956
  %4587 = vmatprep.subr.bf16.mxu0 %v3961
  %4588 = vmatpush1.bf16.msra.mxu0 %v3960
  %4589 = vmatprep.subr.bf16.mxu0 %v3965
  %4590 = vmatpush1.bf16.msra.mxu0 %v3964
  %4591 = vmatprep.subr.bf16.mxu0 %v3969
  %4592 = vmatpush1.bf16.msra.mxu0 %v3968
  %4593 = vmatprep.subr.bf16.mxu0 %v3973
  %4594 = vmatpush1.bf16.msra.mxu0 %v3972
  %4595 = vmatprep.subr.bf16.mxu0 %v3977
  %4596 = vmatpush1.bf16.msra.mxu0 %v3976
  %4597 = vmatprep.subr.bf16.mxu0 %v3981
  %4598 = vmatpush1.bf16.msra.mxu0 %v3980
  %4599 = vmatprep.subr.bf16.mxu0 %v3985
  %4600 = vmatpush1.bf16.msra.mxu0 %v3984
  %4601 = vmatprep.subr.bf16.mxu0 %v3989
  %4602 = vmatpush1.bf16.msra.mxu0 %v3988
  %4603 = vmatprep.subr.bf16.mxu0 %v3993
  %4604 = vmatpush1.bf16.msra.mxu0 %v3992
  %4605 = vmatprep.subr.bf16.mxu0 %v3997
  %4606 = vmatpush1.bf16.msra.mxu0 %v3996
  %4607 = vmatprep.mubr.bf16.mxu0 %v4319
  %4608 = vmatmul.mubr.bf16.gmra.mrb[0].mxu0 %v4318
  %v4609 = vpop.f32.mrb[0].mxu0
  %v4610 = vadd.f32 %v4065, %v4609
  %v4611 = vpop.f32.mrb[0].mxu0
  %v4612 = vadd.f32 %v4065, %v4611
  %v4613 = vpop.f32.mrb[0].mxu0
  %v4614 = vadd.f32 %v4070, %v4613
  %v4615 = vpop.f32.mrb[0].mxu0
  %v4616 = vadd.f32 %v4070, %v4615
  %4617 = vmatprep.mubr.bf16.mxu0 %v4321
  %4618 = vmatmul.mubr.bf16.gmra.mrb[0].mxu0 %v4320
  %v4619 = vpop.f32.mrb[0].mxu0
  %v4620 = vadd.f32 %v4075, %v4619
  %v4621 = vpop.f32.mrb[0].mxu0
  %v4622 = vadd.f32 %v4075, %v4621
  %v4623 = vpop.f32.mrb[0].mxu0
  %v4624 = vadd.f32 %v4080, %v4623
  %v4625 = vpop.f32.mrb[0].mxu0
  %v4626 = vadd.f32 %v4080, %v4625
  %4627 = vmatprep.mubr.bf16.mxu0 %v4323
  %4628 = vmatmul.mubr.bf16.gmra.mrb[0].mxu0 %v4322
  %v4629 = vpop.f32.mrb[0].mxu0
  %v4630 = vadd.f32 %v4085, %v4629
  %v4631 = vpop.f32.mrb[0].mxu0
  %v4632 = vadd.f32 %v4085, %v4631
  %v4633 = vpop.f32.mrb[0].mxu0
  %v4634 = vadd.f32 %v4090, %v4633
  %v4635 = vpop.f32.mrb[0].mxu0
  %v4636 = vadd.f32 %v4090, %v4635
  %4637 = vmatprep.mubr.bf16.mxu0 %v4325
  %4638 = vmatmul.mubr.bf16.gmra.mrb[0].mxu0 %v4324
  %v4639 = vpop.f32.mrb[0].mxu0
  %v4640 = vadd.f32 %v4095, %v4639
  %v4641 = vpop.f32.mrb[0].mxu0
  %v4642 = vadd.f32 %v4095, %v4641
  %v4643 = vpop.f32.mrb[0].mxu0
  %v4644 = vadd.f32 %v4100, %v4643
  %v4645 = vpop.f32.mrb[0].mxu0
  %v4646 = vadd.f32 %v4100, %v4645
  %4647 = vmatprep.mubr.bf16.mxu0 %v4327
  %4648 = vmatmul.mubr.bf16.gmra.mrb[0].mxu0 %v4326
  %v4649 = vpop.f32.mrb[0].mxu0
  %v4650 = vadd.f32 %v4105, %v4649
  %v4651 = vpop.f32.mrb[0].mxu0
  %v4652 = vadd.f32 %v4105, %v4651
  %v4653 = vpop.f32.mrb[0].mxu0
  %v4654 = vadd.f32 %v4110, %v4653
  %v4655 = vpop.f32.mrb[0].mxu0
  %v4656 = vadd.f32 %v4110, %v4655
  %4657 = vmatprep.mubr.bf16.mxu0 %v4329
  %4658 = vmatmul.mubr.bf16.gmra.mrb[0].mxu0 %v4328
  %v4659 = vpop.f32.mrb[0].mxu0
  %v4660 = vadd.f32 %v4115, %v4659
  %v4661 = vpop.f32.mrb[0].mxu0
  %v4662 = vadd.f32 %v4115, %v4661
  %v4663 = vpop.f32.mrb[0].mxu0
  %v4664 = vadd.f32 %v4120, %v4663
  %v4665 = vpop.f32.mrb[0].mxu0
  %v4666 = vadd.f32 %v4120, %v4665
  %4667 = vmatprep.mubr.bf16.mxu0 %v4331
  %4668 = vmatmul.mubr.bf16.gmra.mrb[0].mxu0 %v4330
  %v4669 = vpop.f32.mrb[0].mxu0
  %v4670 = vadd.f32 %v4125, %v4669
  %v4671 = vpop.f32.mrb[0].mxu0
  %v4672 = vadd.f32 %v4125, %v4671
  %v4673 = vpop.f32.mrb[0].mxu0
  %v4674 = vadd.f32 %v4130, %v4673
  %v4675 = vpop.f32.mrb[0].mxu0
  %v4676 = vadd.f32 %v4130, %v4675
  %4677 = vmatprep.mubr.bf16.mxu0 %v4333
  %4678 = vmatmul.mubr.bf16.gmra.mrb[0].mxu0 %v4332
  %v4679 = vpop.f32.mrb[0].mxu0
  %v4680 = vadd.f32 %v4135, %v4679
  %v4681 = vpop.f32.mrb[0].mxu0
  %v4682 = vadd.f32 %v4135, %v4681
  %v4683 = vpop.f32.mrb[0].mxu0
  %v4684 = vadd.f32 %v4140, %v4683
  %v4685 = vpop.f32.mrb[0].mxu0
  %v4686 = vadd.f32 %v4140, %v4685
  %4687 = vmatprep.mubr.bf16.mxu0 %v4335
  %4688 = vmatmul.mubr.bf16.gmra.mrb[0].mxu0 %v4334
  %v4689 = vpop.f32.mrb[0].mxu0
  %v4690 = vadd.f32 %v4145, %v4689
  %v4691 = vpop.f32.mrb[0].mxu0
  %v4692 = vadd.f32 %v4145, %v4691
  %v4693 = vpop.f32.mrb[0].mxu0
  %v4694 = vadd.f32 %v4150, %v4693
  %v4695 = vpop.f32.mrb[0].mxu0
  %v4696 = vadd.f32 %v4150, %v4695
  %4697 = vmatprep.mubr.bf16.mxu0 %v4337
  %4698 = vmatmul.mubr.bf16.gmra.mrb[0].mxu0 %v4336
  %v4699 = vpop.f32.mrb[0].mxu0
  %v4700 = vadd.f32 %v4155, %v4699
  %v4701 = vpop.f32.mrb[0].mxu0
  %v4702 = vadd.f32 %v4155, %v4701
  %v4703 = vpop.f32.mrb[0].mxu0
  %v4704 = vadd.f32 %v4160, %v4703
  %v4705 = vpop.f32.mrb[0].mxu0
  %v4706 = vadd.f32 %v4160, %v4705
  %4707 = vmatprep.mubr.bf16.mxu0 %v4339
  %4708 = vmatmul.mubr.bf16.gmra.mrb[0].mxu0 %v4338
  %v4709 = vpop.f32.mrb[0].mxu0
  %v4710 = vadd.f32 %v4165, %v4709
  %v4711 = vpop.f32.mrb[0].mxu0
  %v4712 = vadd.f32 %v4165, %v4711
  %v4713 = vpop.f32.mrb[0].mxu0
  %v4714 = vadd.f32 %v4170, %v4713
  %v4715 = vpop.f32.mrb[0].mxu0
  %v4716 = vadd.f32 %v4170, %v4715
  %4717 = vmatprep.mubr.bf16.mxu0 %v4341
  %4718 = vmatmul.mubr.bf16.gmra.mrb[0].mxu0 %v4340
  %v4719 = vpop.f32.mrb[0].mxu0
  %v4720 = vadd.f32 %v4175, %v4719
  %v4721 = vpop.f32.mrb[0].mxu0
  %v4722 = vadd.f32 %v4175, %v4721
  %v4723 = vpop.f32.mrb[0].mxu0
  %v4724 = vadd.f32 %v4180, %v4723
  %v4725 = vpop.f32.mrb[0].mxu0
  %v4726 = vadd.f32 %v4180, %v4725
  %4727 = vmatprep.mubr.bf16.mxu0 %v4343
  %4728 = vmatmul.mubr.bf16.gmra.mrb[0].mxu0 %v4342
  %v4729 = vpop.f32.mrb[0].mxu0
  %v4730 = vadd.f32 %v4185, %v4729
  %v4731 = vpop.f32.mrb[0].mxu0
  %v4732 = vadd.f32 %v4185, %v4731
  %v4733 = vpop.f32.mrb[0].mxu0
  %v4734 = vadd.f32 %v4190, %v4733
  %v4735 = vpop.f32.mrb[0].mxu0
  %v4736 = vadd.f32 %v4190, %v4735
  %4737 = vmatprep.mubr.bf16.mxu0 %v4345
  %4738 = vmatmul.mubr.bf16.gmra.mrb[0].mxu0 %v4344
  %v4739 = vpop.f32.mrb[0].mxu0
  %v4740 = vadd.f32 %v4195, %v4739
  %v4741 = vpop.f32.mrb[0].mxu0
  %v4742 = vadd.f32 %v4195, %v4741
  %v4743 = vpop.f32.mrb[0].mxu0
  %v4744 = vadd.f32 %v4200, %v4743
  %v4745 = vpop.f32.mrb[0].mxu0
  %v4746 = vadd.f32 %v4200, %v4745
  %4747 = vmatprep.mubr.bf16.mxu0 %v4347
  %4748 = vmatmul.mubr.bf16.gmra.mrb[0].mxu0 %v4346
  %v4749 = vpop.f32.mrb[0].mxu0
  %v4750 = vadd.f32 %v4205, %v4749
  %v4751 = vpop.f32.mrb[0].mxu0
  %v4752 = vadd.f32 %v4205, %v4751
  %v4753 = vpop.f32.mrb[0].mxu0
  %v4754 = vadd.f32 %v4210, %v4753
  %v4755 = vpop.f32.mrb[0].mxu0
  %v4756 = vadd.f32 %v4210, %v4755
  %4757 = vmatprep.mubr.bf16.mxu0 %v4349
  %4758 = vmatmul.mubr.bf16.gmra.mrb[0].mxu0 %v4348
  %v4759 = vpop.f32.mrb[0].mxu0
  %v4760 = vadd.f32 %v4215, %v4759
  %v4761 = vpop.f32.mrb[0].mxu0
  %v4762 = vadd.f32 %v4215, %v4761
  %v4763 = vpop.f32.mrb[0].mxu0
  %v4764 = vadd.f32 %v4220, %v4763
  %v4765 = vpop.f32.mrb[0].mxu0
  %v4766 = vadd.f32 %v4220, %v4765
  %4767 = vdwg.mxu0
  %v4768 = vmax.f32 %v4417, %v4419
  %4769 = vmax.xlane.f32.xlu0 %v4768
  %v4770 = vpop.xlane.xlu0 %4769
  %v4771 = vmax.f32 %v4421, %v4423
  %4772 = vmax.xlane.f32.xlu0 %v4771
  %v4773 = vpop.xlane.xlu0 %4772
  %v4774 = vmax.f32 %v4427, %v4429
  %4775 = vmax.xlane.f32.xlu0 %v4774
  %v4776 = vpop.xlane.xlu0 %4775
  %v4777 = vmax.f32 %v4431, %v4433
  %4778 = vmax.xlane.f32.xlu0 %v4777
  %v4779 = vpop.xlane.xlu0 %4778
  %v4780 = vmax.f32 %v4437, %v4439
  %4781 = vmax.xlane.f32.xlu0 %v4780
  %v4782 = vpop.xlane.xlu0 %4781
  %v4783 = vmax.f32 %v4441, %v4443
  %4784 = vmax.xlane.f32.xlu0 %v4783
  %v4785 = vpop.xlane.xlu0 %4784
  %v4786 = vmax.f32 %v4447, %v4449
  %4787 = vmax.xlane.f32.xlu0 %v4786
  %v4788 = vpop.xlane.xlu0 %4787
  %v4789 = vmax.f32 %v4451, %v4453
  %4790 = vmax.xlane.f32.xlu0 %v4789
  %v4791 = vpop.xlane.xlu0 %4790
  %v4792 = vmax.f32 %v4457, %v4459
  %4793 = vmax.xlane.f32.xlu0 %v4792
  %v4794 = vpop.xlane.xlu0 %4793
  %v4795 = vmax.f32 %v4461, %v4463
  %4796 = vmax.xlane.f32.xlu0 %v4795
  %v4797 = vpop.xlane.xlu0 %4796
  %v4798 = vmax.f32 %v4467, %v4469
  %4799 = vmax.xlane.f32.xlu0 %v4798
  %v4800 = vpop.xlane.xlu0 %4799
  %v4801 = vmax.f32 %v4471, %v4473
  %4802 = vmax.xlane.f32.xlu0 %v4801
  %v4803 = vpop.xlane.xlu0 %4802
  %v4804 = vmax.f32 %v4477, %v4479
  %4805 = vmax.xlane.f32.xlu0 %v4804
  %v4806 = vpop.xlane.xlu0 %4805
  %v4807 = vmax.f32 %v4481, %v4483
  %4808 = vmax.xlane.f32.xlu0 %v4807
  %v4809 = vpop.xlane.xlu0 %4808
  %v4810 = vmax.f32 %v4487, %v4489
  %4811 = vmax.xlane.f32.xlu0 %v4810
  %v4812 = vpop.xlane.xlu0 %4811
  %v4813 = vmax.f32 %v4491, %v4493
  %4814 = vmax.xlane.f32.xlu0 %v4813
  %v4815 = vpop.xlane.xlu0 %4814
  %v4816 = vmax.f32 %v4497, %v4499
  %4817 = vmax.xlane.f32.xlu0 %v4816
  %v4818 = vpop.xlane.xlu0 %4817
  %v4819 = vmax.f32 %v4501, %v4503
  %4820 = vmax.xlane.f32.xlu0 %v4819
  %v4821 = vpop.xlane.xlu0 %4820
  %v4822 = vmax.f32 %v4507, %v4509
  %4823 = vmax.xlane.f32.xlu0 %v4822
  %v4824 = vpop.xlane.xlu0 %4823
  %v4825 = vmax.f32 %v4511, %v4513
  %4826 = vmax.xlane.f32.xlu0 %v4825
  %v4827 = vpop.xlane.xlu0 %4826
  %v4828 = vmax.f32 %v4517, %v4519
  %4829 = vmax.xlane.f32.xlu0 %v4828
  %v4830 = vpop.xlane.xlu0 %4829
  %v4831 = vmax.f32 %v4521, %v4523
  %4832 = vmax.xlane.f32.xlu0 %v4831
  %v4833 = vpop.xlane.xlu0 %4832
  %v4834 = vmax.f32 %v4527, %v4529
  %4835 = vmax.xlane.f32.xlu0 %v4834
  %v4836 = vpop.xlane.xlu0 %4835
  %v4837 = vmax.f32 %v4531, %v4533
  %4838 = vmax.xlane.f32.xlu0 %v4837
  %v4839 = vpop.xlane.xlu0 %4838
  %v4840 = vmax.f32 %v4537, %v4539
  %4841 = vmax.xlane.f32.xlu0 %v4840
  %v4842 = vpop.xlane.xlu0 %4841
  %v4843 = vmax.f32 %v4541, %v4543
  %4844 = vmax.xlane.f32.xlu0 %v4843
  %v4845 = vpop.xlane.xlu0 %4844
  %v4846 = vmax.f32 %v4547, %v4549
  %4847 = vmax.xlane.f32.xlu0 %v4846
  %v4848 = vpop.xlane.xlu0 %4847
  %v4849 = vmax.f32 %v4551, %v4553
  %4850 = vmax.xlane.f32.xlu0 %v4849
  %v4851 = vpop.xlane.xlu0 %4850
  %v4852 = vmax.f32 %v4557, %v4559
  %4853 = vmax.xlane.f32.xlu0 %v4852
  %v4854 = vpop.xlane.xlu0 %4853
  %v4855 = vmax.f32 %v4561, %v4563
  %4856 = vmax.xlane.f32.xlu0 %v4855
  %v4857 = vpop.xlane.xlu0 %4856
  %v4858 = vmax.f32 %v4567, %v4569
  %4859 = vmax.xlane.f32.xlu0 %v4858
  %v4860 = vpop.xlane.xlu0 %4859
  %v4861 = vmax.f32 %v4571, %v4573
  %4862 = vmax.xlane.f32.xlu0 %v4861
  %v4863 = vpop.xlane.xlu0 %4862
  %v4864 = vmax.f32 %v4610, %v4612
  %4865 = vmax.xlane.f32.xlu0 %v4864
  %v4866 = vpop.xlane.xlu0 %4865
  %v4867 = vmax.f32 %v4614, %v4616
  %4868 = vmax.xlane.f32.xlu0 %v4867
  %v4869 = vpop.xlane.xlu0 %4868
  %v4870 = vmax.f32 %v4620, %v4622
  %4871 = vmax.xlane.f32.xlu0 %v4870
  %v4872 = vpop.xlane.xlu0 %4871
  %v4873 = vmax.f32 %v4624, %v4626
  %4874 = vmax.xlane.f32.xlu0 %v4873
  %v4875 = vpop.xlane.xlu0 %4874
  %v4876 = vmax.f32 %v4630, %v4632
  %4877 = vmax.xlane.f32.xlu0 %v4876
  %v4878 = vpop.xlane.xlu0 %4877
  %v4879 = vmax.f32 %v4634, %v4636
  %4880 = vmax.xlane.f32.xlu0 %v4879
  %v4881 = vpop.xlane.xlu0 %4880
  %v4882 = vmax.f32 %v4640, %v4642
  %4883 = vmax.xlane.f32.xlu0 %v4882
  %v4884 = vpop.xlane.xlu0 %4883
  %v4885 = vmax.f32 %v4644, %v4646
  %4886 = vmax.xlane.f32.xlu0 %v4885
  %v4887 = vpop.xlane.xlu0 %4886
  %v4888 = vmax.f32 %v4650, %v4652
  %4889 = vmax.xlane.f32.xlu0 %v4888
  %v4890 = vpop.xlane.xlu0 %4889
  %v4891 = vmax.f32 %v4654, %v4656
  %4892 = vmax.xlane.f32.xlu0 %v4891
  %v4893 = vpop.xlane.xlu0 %4892
  %v4894 = vmax.f32 %v4660, %v4662
  %4895 = vmax.xlane.f32.xlu0 %v4894
  %v4896 = vpop.xlane.xlu0 %4895
  %v4897 = vmax.f32 %v4664, %v4666
  %4898 = vmax.xlane.f32.xlu0 %v4897
  %v4899 = vpop.xlane.xlu0 %4898
  %v4900 = vmax.f32 %v4670, %v4672
  %4901 = vmax.xlane.f32.xlu0 %v4900
  %v4902 = vpop.xlane.xlu0 %4901
  %v4903 = vmax.f32 %v4674, %v4676
  %4904 = vmax.xlane.f32.xlu0 %v4903
  %v4905 = vpop.xlane.xlu0 %4904
  %v4906 = vmax.f32 %v4680, %v4682
  %4907 = vmax.xlane.f32.xlu0 %v4906
  %v4908 = vpop.xlane.xlu0 %4907
  %v4909 = vmax.f32 %v4684, %v4686
  %4910 = vmax.xlane.f32.xlu0 %v4909
  %v4911 = vpop.xlane.xlu0 %4910
  %v4912 = vmax.f32 %v4690, %v4692
  %4913 = vmax.xlane.f32.xlu0 %v4912
  %v4914 = vpop.xlane.xlu0 %4913
  %v4915 = vmax.f32 %v4694, %v4696
  %4916 = vmax.xlane.f32.xlu0 %v4915
  %v4917 = vpop.xlane.xlu0 %4916
  %v4918 = vmax.f32 %v4700, %v4702
  %4919 = vmax.xlane.f32.xlu0 %v4918
  %v4920 = vpop.xlane.xlu0 %4919
  %v4921 = vmax.f32 %v4704, %v4706
  %4922 = vmax.xlane.f32.xlu0 %v4921
  %v4923 = vpop.xlane.xlu0 %4922
  %v4924 = vmax.f32 %v4710, %v4712
  %4925 = vmax.xlane.f32.xlu0 %v4924
  %v4926 = vpop.xlane.xlu0 %4925
  %v4927 = vmax.f32 %v4714, %v4716
  %4928 = vmax.xlane.f32.xlu0 %v4927
  %v4929 = vpop.xlane.xlu0 %4928
  %v4930 = vmax.f32 %v4720, %v4722
  %4931 = vmax.xlane.f32.xlu0 %v4930
  %v4932 = vpop.xlane.xlu0 %4931
  %v4933 = vmax.f32 %v4724, %v4726
  %4934 = vmax.xlane.f32.xlu0 %v4933
  %v4935 = vpop.xlane.xlu0 %4934
  %v4936 = vmax.f32 %v4730, %v4732
  %4937 = vmax.xlane.f32.xlu0 %v4936
  %v4938 = vpop.xlane.xlu0 %4937
  %v4939 = vmax.f32 %v4734, %v4736
  %4940 = vmax.xlane.f32.xlu0 %v4939
  %v4941 = vpop.xlane.xlu0 %4940
  %v4942 = vmax.f32 %v4740, %v4742
  %4943 = vmax.xlane.f32.xlu0 %v4942
  %v4944 = vpop.xlane.xlu0 %4943
  %v4945 = vmax.f32 %v4744, %v4746
  %4946 = vmax.xlane.f32.xlu0 %v4945
  %v4947 = vpop.xlane.xlu0 %4946
  %v4948 = vmax.f32 %v4750, %v4752
  %4949 = vmax.xlane.f32.xlu0 %v4948
  %v4950 = vpop.xlane.xlu0 %4949
  %v4951 = vmax.f32 %v4754, %v4756
  %4952 = vmax.xlane.f32.xlu0 %v4951
  %v4953 = vpop.xlane.xlu0 %4952
  %v4954 = vmax.f32 %v4760, %v4762
  %4955 = vmax.xlane.f32.xlu0 %v4954
  %v4956 = vpop.xlane.xlu0 %4955
  %v4957 = vmax.f32 %v4764, %v4766
  %4958 = vmax.xlane.f32.xlu0 %v4957
  %v4959 = vpop.xlane.xlu0 %4958
  %vm4960 = vcmask 7168
  %v4961 = vsel %vm4960, %v4770, %v4866
  %v4962 = vsel %vm4960, %v4773, %v4869
  %v4963 = vsel %vm4960, %v4776, %v4872
  %v4964 = vsel %vm4960, %v4779, %v4875
  %v4965 = vsel %vm4960, %v4782, %v4878
  %v4966 = vsel %vm4960, %v4785, %v4881
  %v4967 = vsel %vm4960, %v4788, %v4884
  %v4968 = vsel %vm4960, %v4791, %v4887
  %v4969 = vsel %vm4960, %v4794, %v4890
  %v4970 = vsel %vm4960, %v4797, %v4893
  %v4971 = vsel %vm4960, %v4800, %v4896
  %v4972 = vsel %vm4960, %v4803, %v4899
  %v4973 = vsel %vm4960, %v4806, %v4902
  %v4974 = vsel %vm4960, %v4809, %v4905
  %v4975 = vsel %vm4960, %v4812, %v4908
  %v4976 = vsel %vm4960, %v4815, %v4911
  %v4977 = vsel %vm4960, %v4818, %v4914
  %v4978 = vsel %vm4960, %v4821, %v4917
  %v4979 = vsel %vm4960, %v4824, %v4920
  %v4980 = vsel %vm4960, %v4827, %v4923
  %v4981 = vsel %vm4960, %v4830, %v4926
  %v4982 = vsel %vm4960, %v4833, %v4929
  %v4983 = vsel %vm4960, %v4836, %v4932
  %v4984 = vsel %vm4960, %v4839, %v4935
  %v4985 = vsel %vm4960, %v4842, %v4938
  %v4986 = vsel %vm4960, %v4845, %v4941
  %v4987 = vsel %vm4960, %v4848, %v4944
  %v4988 = vsel %vm4960, %v4851, %v4947
  %v4989 = vsel %vm4960, %v4854, %v4950
  %v4990 = vsel %vm4960, %v4857, %v4953
  %v4991 = vsel %vm4960, %v4860, %v4956
  %v4992 = vsel %vm4960, %v4863, %v4959
  %vm4993 = vcmask 15360
  %4994 = vst.msk [vmem:[%s13] sm:$0xff] %vm4993, %v4961
  %4995 = vst.msk [vmem:[%s13 + $0x8] sm:$0xff] %vm4993, %v4962
  %4996 = vst.msk [vmem:[%s13 + $0x10] sm:$0xff] %vm4993, %v4963
  %4997 = vst.msk [vmem:[%s13 + $0x18] sm:$0xff] %vm4993, %v4964
  %4998 = vst.msk [vmem:[%s13 + $0x20] sm:$0xff] %vm4993, %v4965
  %4999 = vst.msk [vmem:[%s13 + $0x28] sm:$0xff] %vm4993, %v4966
  %5000 = vst.msk [vmem:[%s13 + $0x30] sm:$0xff] %vm4993, %v4967
  %5001 = vst.msk [vmem:[%s13 + $0x38] sm:$0xff] %vm4993, %v4968
  %5002 = vst.msk [vmem:[%s13 + $0x40] sm:$0xff] %vm4993, %v4969
  %5003 = vst.msk [vmem:[%s13 + $0x48] sm:$0xff] %vm4993, %v4970
  %5004 = vst.msk [vmem:[%s13 + $0x50] sm:$0xff] %vm4993, %v4971
  %5005 = vst.msk [vmem:[%s13 + $0x58] sm:$0xff] %vm4993, %v4972
  %5006 = vst.msk [vmem:[%s13 + $0x60] sm:$0xff] %vm4993, %v4973
  %5007 = vst.msk [vmem:[%s13 + $0x68] sm:$0xff] %vm4993, %v4974
  %5008 = vst.msk [vmem:[%s13 + $0x70] sm:$0xff] %vm4993, %v4975
  %5009 = vst.msk [vmem:[%s13 + $0x78] sm:$0xff] %vm4993, %v4976
  %5010 = vst.msk [vmem:[%s13 + $0x80] sm:$0xff] %vm4993, %v4977
  %5011 = vst.msk [vmem:[%s13 + $0x88] sm:$0xff] %vm4993, %v4978
  %5012 = vst.msk [vmem:[%s13 + $0x90] sm:$0xff] %vm4993, %v4979
  %5013 = vst.msk [vmem:[%s13 + $0x98] sm:$0xff] %vm4993, %v4980
  %5014 = vst.msk [vmem:[%s13 + $0xa0] sm:$0xff] %vm4993, %v4981
  %5015 = vst.msk [vmem:[%s13 + $0xa8] sm:$0xff] %vm4993, %v4982
  %5016 = vst.msk [vmem:[%s13 + $0xb0] sm:$0xff] %vm4993, %v4983
  %5017 = vst.msk [vmem:[%s13 + $0xb8] sm:$0xff] %vm4993, %v4984
  %5018 = vst.msk [vmem:[%s13 + $0xc0] sm:$0xff] %vm4993, %v4985
  %5019 = vst.msk [vmem:[%s13 + $0xc8] sm:$0xff] %vm4993, %v4986
  %5020 = vst.msk [vmem:[%s13 + $0xd0] sm:$0xff] %vm4993, %v4987
  %5021 = vst.msk [vmem:[%s13 + $0xd8] sm:$0xff] %vm4993, %v4988
  %5022 = vst.msk [vmem:[%s13 + $0xe0] sm:$0xff] %vm4993, %v4989
  %5023 = vst.msk [vmem:[%s13 + $0xe8] sm:$0xff] %vm4993, %v4990
  %5024 = vst.msk [vmem:[%s13 + $0xf0] sm:$0xff] %vm4993, %v4991
  %5025 = vst.msk [vmem:[%s13 + $0xf8] sm:$0xff] %vm4993, %v4992
  // Predicated region
  $region54: #{pointnet_large_forward.1} parent=0 // pred_check
    _
  $region55: #{pointnet_large_forward.1} parent=0 // pred_check_branch
    %5027 = sbr.rel (0) target = $region57
  $region56: #{pointnet_large_forward.1} parent=0 // pred_region
    _
  $region57: #{pointnet_large_forward.1} parent=0 // pred_fallthru
    _
  // Predicated region
  $region58: #{pointnet_large_forward.1} parent=0 // pred_check
    _
  $region59: #{pointnet_large_forward.1} parent=0 // pred_check_branch
    %5029 = sbr.rel (0) target = $region61
  $region60: #{pointnet_large_forward.1} parent=0 // pred_region
    _
  $region61: #{pointnet_large_forward.1} parent=0 // pred_fallthru
    _

</llo_original>
